<compile_context>
chip_gen: v5e
topology: v5e:2x2
jax: 0.10.0
libtpu: 0.0.40
codegen_flags: <defaults>
</compile_context>

<pallas_src>
import math

import jax
import jax.numpy as jnp
from jax import lax
from jax.experimental import pallas as pl
from jax.experimental.pallas import tpu as pltpu

# ---------------- config (small, consistent with the module) ----------------
D_MODEL = 32
SEQ = 32            # must equal D_MODEL (see note above)
BATCH = 2
NUM_HEADS = 4
D_KV = 8            # inner dim = NUM_HEADS * D_KV = 32
D_FF = 64
NUM_LAYERS = 2
VOCAB = 50
NUM_LABELS = 3
NUM_BUCKETS = 32
MAX_DISTANCE = 128
LN_EPS = 1e-6

INNER = NUM_HEADS * D_KV
BS = BATCH * SEQ

assert SEQ == D_MODEL, "reference module applies classifier2 to the seq axis; requires SEQ == D_MODEL"


# ---------------- the single fused kernel ----------------
def _rms(x, w):
    # T5LayerNorm: no mean subtraction, no bias.
    var = jnp.mean(x * x, axis=-1, keepdims=True)
    return x * lax.rsqrt(var + LN_EPS) * w


def _fused_forward_kernel(x_ref, bias_ref,
                          ln1_ref, wqkv_ref, wo_ref, ln2_ref, wi_ref, wof_ref,
                          fln_ref, c1w_ref, c1b_ref, c2w_ref, c2b_ref,
                          logits_ref):
    f32 = jnp.float32
    x = x_ref[...].astype(f32)                                   # (BS, D)

    for layer in range(NUM_LAYERS):                              # static unroll (2 layers)
        # ---------- self-attention block ----------
        normed = _rms(x, ln1_ref[layer])                         # (BS, D)
        qkv = jnp.dot(normed, wqkv_ref[layer],
                      preferred_element_type=f32)                # (BS, 3*INNER), fused QKV
        wo_l = wo_ref[layer]                                     # (INNER, D)

        delta = jnp.zeros((BS, D_MODEL), f32)
        for h in range(NUM_HEADS):                               # static unroll (4 heads)
            q = qkv[:, h * D_KV:(h + 1) * D_KV]                  # (BS, D_KV)
            k = qkv[:, INNER + h * D_KV: INNER + (h + 1) * D_KV]
            v = qkv[:, 2 * INNER + h * D_KV: 2 * INNER + (h + 1) * D_KV]
            # T5 does NOT scale scores by 1/sqrt(d_kv).  Both batches handled at once:
            # bias_ref[h] carries relative-position bias + block-diagonal batch mask + key
            # padding mask, so cross-batch score entries are -1e9 and vanish in the softmax.
            s = lax.dot_general(q, k, (((1,), (1,)), ((), ())),
                                preferred_element_type=f32)      # (BS, BS) == q @ k.T
            s = s + bias_ref[h]
            s = s - jnp.max(s, axis=-1, keepdims=True)
            p = jnp.exp(s)
            p = p * pl.reciprocal(jnp.sum(p, axis=-1, keepdims=True), approx=True)
            ctx = jnp.dot(p, v, preferred_element_type=f32)      # (BS, D_KV)
            delta = delta + jnp.dot(ctx, wo_l[h * D_KV:(h + 1) * D_KV, :],
                                    preferred_element_type=f32)  # (BS, D)
        x = x + delta                                            # residual

        # ---------- feed-forward block (DenseReluDense, no biases) ----------
        normed = _rms(x, ln2_ref[layer])
        hmid = jnp.maximum(jnp.dot(normed, wi_ref[layer],
                                   preferred_element_type=f32), 0.0)   # (BS, D_FF)
        x = x + jnp.dot(hmid, wof_ref[layer], preferred_element_type=f32)

    # ---------- final RMSNorm + classifier head (dropout = identity at inference) ----------
    x = _rms(x, fln_ref[...])                                    # (BS, D)
    # classifier1: Linear(D, 1); cls1_w is stored as a (1, D) row -> pure VPU mul + lane-reduce
    pooled = jnp.sum(x * c1w_ref[...], axis=-1, keepdims=True) + c1b_ref[...]   # (BS, 1)
    # squeeze(-1) -> (B, S) rows; classifier2: Linear(S==D, NUM_LABELS) applied per batch row
    for b in range(BATCH):
        pb = pooled[b * SEQ:(b + 1) * SEQ, :]                    # (S, 1)
        lb = jnp.sum(pb * c2w_ref[...], axis=0, keepdims=True) + c2b_ref[...]   # (1, NUM_LABELS)
        logits_ref[b:b + 1, :] = lb.astype(logits_ref.dtype)


# ---------------- host/XLA glue: embedding gather + attention bias ----------------
def _relative_position_bucket(relative_position, num_buckets=NUM_BUCKETS,
                              max_distance=MAX_DISTANCE):
    # bidirectional (encoder) variant
    num_buckets = num_buckets // 2
    relative_buckets = (relative_position > 0).astype(jnp.int32) * num_buckets
    relative_position = jnp.abs(relative_position)
    max_exact = num_buckets // 2
    is_small = relative_position < max_exact
    safe_rp = jnp.maximum(relative_position, 1).astype(jnp.float32)
    rel_if_large = max_exact + (
        jnp.log(safe_rp / max_exact) / math.log(max_distance / max_exact)
        * (num_buckets - max_exact)
    ).astype(jnp.int32)
    rel_if_large = jnp.minimum(rel_if_large, num_buckets - 1)
    return relative_buckets + jnp.where(is_small, relative_position, rel_if_large)


def build_attention_bias(rel_emb, attention_mask):
    """(H, B*S, B*S) bias = relative-position bias (tiled) + block-diagonal batch mask
    + key padding mask.  Lets the kernel run both batches through one dense softmax."""
    ctx = jnp.arange(SEQ)[:, None]
    mem = jnp.arange(SEQ)[None, :]
    buckets = _relative_position_bucket(mem - ctx)                 # (S, S)
    pos = jnp.transpose(jnp.take(rel_emb, buckets, axis=0), (2, 0, 1))   # (H, S, S)
    pos_full = jnp.tile(pos, (1, BATCH, BATCH))                    # (H, BS, BS)
    qb = jnp.repeat(jnp.arange(BATCH), SEQ)                        # (BS,) batch id per row
    same_batch = qb[:, None] == qb[None, :]
    key_ok = attention_mask.reshape(-1) > 0
    mask_bias = jnp.where(same_batch & key_ok[None, :], 0.0, -1e9)
    return (pos_full + mask_bias[None]).astype(jnp.float32)        # (H, BS, BS)


def _full_spec(a):
    nd = a.ndim
    return pl.BlockSpec(a.shape, lambda i, _nd=nd: (0,) * _nd)


# ---------------- model forward (one pallas_call) ----------------
def classifier_forward(params, input_ids, attention_mask, labels=None):
    # embedding lookup stays in XLA (single gather); everything else runs inside one kernel.
    x = jnp.take(params["embed"], input_ids.reshape(-1), axis=0)   # (B*S, D)
    bias = build_attention_bias(params["rel_bias"], attention_mask)  # (H, BS, BS)

    inputs = (x, bias,
              params["ln1"], params["wqkv"], params["wo"], params["ln2"],
              params["wi"], params["wof"],
              params["final_ln"], params["cls1_w_row"], params["cls1_b"],
              params["cls2_w"], params["cls2_b"])

    logits = pl.pallas_call(
        _fused_forward_kernel,
        grid=(1,),
        out_shape=jax.ShapeDtypeStruct((BATCH, NUM_LABELS), jnp.float32),
        in_specs=[_full_spec(a) for a in inputs],
        out_specs=pl.BlockSpec((BATCH, NUM_LABELS), lambda i: (0, 0)),
        compiler_params=pltpu.CompilerParams(dimension_semantics=("arbitrary",)),
    )(*inputs)

    loss = None
    if labels is not None:
        # num_labels > 1 and integer labels -> single_label_classification (CrossEntropyLoss)
        logp = jax.nn.log_softmax(logits, axis=-1)
        loss = -jnp.mean(jnp.take_along_axis(logp, labels[:, None], axis=-1))
    return loss, logits


# ---------------- deterministic parameter init (pre-stacked / pre-fused layouts) ----------------
def init_params(key):
    def nxt():
        nonlocal key
        key, sub = jax.random.split(key)
        return sub

    def rnd(shape):
        return jax.random.normal(nxt(), shape, jnp.float32) * 0.02

    embed = rnd((VOCAB, D_MODEL))
    rel_bias = rnd((NUM_BUCKETS, NUM_HEADS))
    wq = rnd((NUM_LAYERS, D_MODEL, INNER))
    wk = rnd((NUM_LAYERS, D_MODEL, INNER))
    wv = rnd((NUM_LAYERS, D_MODEL, INNER))
    params = {
        "embed": embed,
        "rel_bias": rel_bias,
        "ln1": jnp.ones((NUM_LAYERS, 1, D_MODEL), jnp.float32),
        "wqkv": jnp.concatenate([wq, wk, wv], axis=-1),          # fused QKV (L, D, 3*INNER)
        "wo": rnd((NUM_LAYERS, INNER, D_MODEL)),
        "ln2": jnp.ones((NUM_LAYERS, 1, D_MODEL), jnp.float32),
        "wi": rnd((NUM_LAYERS, D_MODEL, D_FF)),
        "wof": rnd((NUM_LAYERS, D_FF, D_MODEL)),
        "final_ln": jnp.ones((1, D_MODEL), jnp.float32),
        "cls1_w_row": rnd((1, D_MODEL)),                          # Linear(D,1) weight stored as a row
        "cls1_b": jnp.zeros((1, 1), jnp.float32),
        "cls2_w": rnd((D_MODEL, NUM_LABELS)),
        "cls2_b": jnp.zeros((1, NUM_LABELS), jnp.float32),
    }
    return params


if __name__ == "__main__":
    root = jax.random.PRNGKey(0)
    k_params, k_ids, k_labels = jax.random.split(root, 3)

    params = init_params(k_params)
    input_ids = jax.random.randint(k_ids, (BATCH, SEQ), 0, VOCAB, dtype=jnp.int32)
    # mask out the last 4 tokens of the second example
    pos = jnp.arange(SEQ)[None, :]
    attention_mask = jnp.where((jnp.arange(BATCH)[:, None] == 1) & (pos >= SEQ - 4), 0, 1).astype(jnp.int32)
    labels = jax.random.randint(k_labels, (BATCH,), 0, NUM_LABELS, dtype=jnp.int32)

    fwd = jax.jit(classifier_forward)
    loss, logits = fwd(params, input_ids, attention_mask, labels)
    jax.block_until_ready((loss, logits))
    assert logits.shape == (BATCH, NUM_LABELS)
    assert bool(jnp.isfinite(loss))
    assert bool(jnp.all(jnp.isfinite(logits)))
    print("KERNEL_OK")
</pallas_src>

<mosaic_0001>
module attributes {stable_mosaic.version = 11 : i64} {
  func.func @_fused_forward_kernel(%arg0: i32, %arg1: memref<64x32xf32, #tpu.memory_space<vmem>>, %arg2: memref<4x64x64xf32, #tpu.memory_space<vmem>>, %arg3: memref<2x1x32xf32, #tpu.memory_space<vmem>>, %arg4: memref<2x32x96xf32, #tpu.memory_space<vmem>>, %arg5: memref<2x32x32xf32, #tpu.memory_space<vmem>>, %arg6: memref<2x1x32xf32, #tpu.memory_space<vmem>>, %arg7: memref<2x32x64xf32, #tpu.memory_space<vmem>>, %arg8: memref<2x64x32xf32, #tpu.memory_space<vmem>>, %arg9: memref<1x32xf32, #tpu.memory_space<vmem>>, %arg10: memref<1x32xf32, #tpu.memory_space<vmem>>, %arg11: memref<1x1xf32, #tpu.memory_space<vmem>>, %arg12: memref<32x3xf32, #tpu.memory_space<vmem>>, %arg13: memref<1x3xf32, #tpu.memory_space<vmem>>, %arg14: memref<2x3xf32, #tpu.memory_space<vmem>>) attributes {dimension_semantics = [#tpu.dimension_semantics<arbitrary>], iteration_bounds = array<i64: 1>, scalar_prefetch = 0 : i64, scratch_operands = 0 : i64, tpu.core_type = #tpu.core_type<tc>, window_params = [{pipeline_mode = #tpu.pipeline_mode<synchronous>, transform_indices = @transform_0, window_bounds = array<i64: 64, 32>}, {pipeline_mode = #tpu.pipeline_mode<synchronous>, transform_indices = @transform_1, window_bounds = array<i64: 4, 64, 64>}, {pipeline_mode = #tpu.pipeline_mode<synchronous>, transform_indices = @transform_2, window_bounds = array<i64: 2, 1, 32>}, {pipeline_mode = #tpu.pipeline_mode<synchronous>, transform_indices = @transform_3, window_bounds = array<i64: 2, 32, 96>}, {pipeline_mode = #tpu.pipeline_mode<synchronous>, transform_indices = @transform_4, window_bounds = array<i64: 2, 32, 32>}, {pipeline_mode = #tpu.pipeline_mode<synchronous>, transform_indices = @transform_5, window_bounds = array<i64: 2, 1, 32>}, {pipeline_mode = #tpu.pipeline_mode<synchronous>, transform_indices = @transform_6, window_bounds = array<i64: 2, 32, 64>}, {pipeline_mode = #tpu.pipeline_mode<synchronous>, transform_indices = @transform_7, window_bounds = array<i64: 2, 64, 32>}, {pipeline_mode = #tpu.pipeline_mode<synchronous>, transform_indices = @transform_8, window_bounds = array<i64: 1, 32>}, {pipeline_mode = #tpu.pipeline_mode<synchronous>, transform_indices = @transform_9, window_bounds = array<i64: 1, 32>}, {pipeline_mode = #tpu.pipeline_mode<synchronous>, transform_indices = @transform_10, window_bounds = array<i64: 1, 1>}, {pipeline_mode = #tpu.pipeline_mode<synchronous>, transform_indices = @transform_11, window_bounds = array<i64: 32, 3>}, {pipeline_mode = #tpu.pipeline_mode<synchronous>, transform_indices = @transform_12, window_bounds = array<i64: 1, 3>}, {pipeline_mode = #tpu.pipeline_mode<synchronous>, transform_indices = @transform_13, window_bounds = array<i64: 2, 3>}]} {
    %c0 = arith.constant 0 : index
    %c0_0 = arith.constant 0 : index
    %0 = vector.load %arg1[%c0, %c0_0] : memref<64x32xf32, #tpu.memory_space<vmem>>, vector<64x32xf32>
    %c0_1 = arith.constant 0 : index
    %c0_2 = arith.constant 0 : index
    %c0_3 = arith.constant 0 : index
    %1 = vector.load %arg3[%c0_1, %c0_2, %c0_3] : memref<2x1x32xf32, #tpu.memory_space<vmem>>, vector<1x1x32xf32>
    %2 = vector.shape_cast %1 : vector<1x1x32xf32> to vector<1x32xf32>
    %3 = arith.mulf %0, %0 : vector<64x32xf32>
    %cst = arith.constant dense<0.000000e+00> : vector<64xf32>
    %4 = vector.multi_reduction <add>, %3, %cst [1] : vector<64x32xf32> to vector<64xf32>
    %5 = vector.shape_cast %4 : vector<64xf32> to vector<64x1xf32>
    %cst_4 = arith.constant 3.200000e+01 : f32
    %6 = vector.broadcast %cst_4 : f32 to vector<64x1xf32>
    %7 = arith.divf %5, %6 : vector<64x1xf32>
    %cst_5 = arith.constant 9.99999997E-7 : f32
    %8 = vector.broadcast %cst_5 : f32 to vector<64x1xf32>
    %9 = arith.addf %7, %8 : vector<64x1xf32>
    %10 = math.rsqrt %9 : vector<64x1xf32>
    %11 = vector.broadcast %10 : vector<64x1xf32> to vector<64x32xf32>
    %12 = arith.mulf %0, %11 : vector<64x32xf32>
    %13 = vector.broadcast %2 : vector<1x32xf32> to vector<64x32xf32>
    %14 = arith.mulf %12, %13 : vector<64x32xf32>
    %c0_6 = arith.constant 0 : index
    %c0_7 = arith.constant 0 : index
    %c0_8 = arith.constant 0 : index
    %15 = vector.load %arg4[%c0_6, %c0_7, %c0_8] : memref<2x32x96xf32, #tpu.memory_space<vmem>>, vector<1x32x96xf32>
    %16 = vector.shape_cast %15 : vector<1x32x96xf32> to vector<32x96xf32>
    %cst_9 = arith.constant dense<0.000000e+00> : vector<64x96xf32>
    %17 = tpu.matmul %14, %16, %cst_9 {dimension_numbers = #tpu.dot_dimension_numbers<[1], [0], [0], [1], [0, 0, 1, 1], [], []>} : vector<64x32xf32>, vector<32x96xf32>, vector<64x96xf32> -> vector<64x96xf32>
    %c0_10 = arith.constant 0 : index
    %c0_11 = arith.constant 0 : index
    %c0_12 = arith.constant 0 : index
    %18 = vector.load %arg5[%c0_10, %c0_11, %c0_12] : memref<2x32x32xf32, #tpu.memory_space<vmem>>, vector<1x32x32xf32>
    %19 = vector.shape_cast %18 : vector<1x32x32xf32> to vector<32x32xf32>
    %cst_13 = arith.constant 0.000000e+00 : f32
    %20 = vector.broadcast %cst_13 : f32 to vector<64x32xf32>
    %21 = vector.extract_strided_slice %17 {offsets = [0, 0], sizes = [64, 8], strides = [1, 1]} : vector<64x96xf32> to vector<64x8xf32>
    %22 = vector.extract_strided_slice %17 {offsets = [0, 32], sizes = [64, 8], strides = [1, 1]} : vector<64x96xf32> to vector<64x8xf32>
    %23 = vector.extract_strided_slice %17 {offsets = [0, 64], sizes = [64, 8], strides = [1, 1]} : vector<64x96xf32> to vector<64x8xf32>
    %cst_14 = arith.constant dense<0.000000e+00> : vector<64x64xf32>
    %24 = tpu.matmul %21, %22, %cst_14 {dimension_numbers = #tpu.dot_dimension_numbers<[1], [1], [0], [0], [0, 0, 1, 0], [], []>} : vector<64x8xf32>, vector<64x8xf32>, vector<64x64xf32> -> vector<64x64xf32>
    %c0_15 = arith.constant 0 : index
    %c0_16 = arith.constant 0 : index
    %c0_17 = arith.constant 0 : index
    %25 = vector.load %arg2[%c0_15, %c0_16, %c0_17] : memref<4x64x64xf32, #tpu.memory_space<vmem>>, vector<1x64x64xf32>
    %26 = vector.shape_cast %25 : vector<1x64x64xf32> to vector<64x64xf32>
    %27 = arith.addf %24, %26 : vector<64x64xf32>
    %cst_18 = arith.constant dense<0xFF800000> : vector<64xf32>
    %28 = vector.multi_reduction <maximumf>, %27, %cst_18 [1] : vector<64x64xf32> to vector<64xf32>
    %29 = vector.shape_cast %28 : vector<64xf32> to vector<64x1xf32>
    %30 = vector.broadcast %29 : vector<64x1xf32> to vector<64x64xf32>
    %31 = arith.subf %27, %30 : vector<64x64xf32>
    %32 = math.exp %31 : vector<64x64xf32>
    %cst_19 = arith.constant dense<0.000000e+00> : vector<64xf32>
    %33 = vector.multi_reduction <add>, %32, %cst_19 [1] : vector<64x64xf32> to vector<64xf32>
    %34 = vector.shape_cast %33 : vector<64xf32> to vector<64x1xf32>
    %35 = tpu.reciprocal %34 {approx = true} : vector<64x1xf32> -> vector<64x1xf32>
    %36 = vector.broadcast %35 : vector<64x1xf32> to vector<64x64xf32>
    %37 = arith.mulf %32, %36 : vector<64x64xf32>
    %cst_20 = arith.constant dense<0.000000e+00> : vector<64x8xf32>
    %38 = tpu.matmul %37, %23, %cst_20 {dimension_numbers = #tpu.dot_dimension_numbers<[1], [0], [0], [1], [0, 0, 1, 1], [], []>} : vector<64x64xf32>, vector<64x8xf32>, vector<64x8xf32> -> vector<64x8xf32>
    %39 = vector.extract_strided_slice %19 {offsets = [0, 0], sizes = [8, 32], strides = [1, 1]} : vector<32x32xf32> to vector<8x32xf32>
    %cst_21 = arith.constant dense<0.000000e+00> : vector<64x32xf32>
    %40 = tpu.matmul %38, %39, %cst_21 {dimension_numbers = #tpu.dot_dimension_numbers<[1], [0], [0], [1], [0, 0, 1, 1], [], []>} : vector<64x8xf32>, vector<8x32xf32>, vector<64x32xf32> -> vector<64x32xf32>
    %41 = arith.addf %20, %40 : vector<64x32xf32>
    %42 = vector.extract_strided_slice %17 {offsets = [0, 8], sizes = [64, 8], strides = [1, 1]} : vector<64x96xf32> to vector<64x8xf32>
    %43 = vector.extract_strided_slice %17 {offsets = [0, 40], sizes = [64, 8], strides = [1, 1]} : vector<64x96xf32> to vector<64x8xf32>
    %44 = vector.extract_strided_slice %17 {offsets = [0, 72], sizes = [64, 8], strides = [1, 1]} : vector<64x96xf32> to vector<64x8xf32>
    %cst_22 = arith.constant dense<0.000000e+00> : vector<64x64xf32>
    %45 = tpu.matmul %42, %43, %cst_22 {dimension_numbers = #tpu.dot_dimension_numbers<[1], [1], [0], [0], [0, 0, 1, 0], [], []>} : vector<64x8xf32>, vector<64x8xf32>, vector<64x64xf32> -> vector<64x64xf32>
    %c1 = arith.constant 1 : index
    %c0_23 = arith.constant 0 : index
    %c0_24 = arith.constant 0 : index
    %46 = vector.load %arg2[%c1, %c0_23, %c0_24] : memref<4x64x64xf32, #tpu.memory_space<vmem>>, vector<1x64x64xf32>
    %47 = vector.shape_cast %46 : vector<1x64x64xf32> to vector<64x64xf32>
    %48 = arith.addf %45, %47 : vector<64x64xf32>
    %cst_25 = arith.constant dense<0xFF800000> : vector<64xf32>
    %49 = vector.multi_reduction <maximumf>, %48, %cst_25 [1] : vector<64x64xf32> to vector<64xf32>
    %50 = vector.shape_cast %49 : vector<64xf32> to vector<64x1xf32>
    %51 = vector.broadcast %50 : vector<64x1xf32> to vector<64x64xf32>
    %52 = arith.subf %48, %51 : vector<64x64xf32>
    %53 = math.exp %52 : vector<64x64xf32>
    %cst_26 = arith.constant dense<0.000000e+00> : vector<64xf32>
    %54 = vector.multi_reduction <add>, %53, %cst_26 [1] : vector<64x64xf32> to vector<64xf32>
    %55 = vector.shape_cast %54 : vector<64xf32> to vector<64x1xf32>
    %56 = tpu.reciprocal %55 {approx = true} : vector<64x1xf32> -> vector<64x1xf32>
    %57 = vector.broadcast %56 : vector<64x1xf32> to vector<64x64xf32>
    %58 = arith.mulf %53, %57 : vector<64x64xf32>
    %cst_27 = arith.constant dense<0.000000e+00> : vector<64x8xf32>
    %59 = tpu.matmul %58, %44, %cst_27 {dimension_numbers = #tpu.dot_dimension_numbers<[1], [0], [0], [1], [0, 0, 1, 1], [], []>} : vector<64x64xf32>, vector<64x8xf32>, vector<64x8xf32> -> vector<64x8xf32>
    %60 = vector.extract_strided_slice %19 {offsets = [8, 0], sizes = [8, 32], strides = [1, 1]} : vector<32x32xf32> to vector<8x32xf32>
    %cst_28 = arith.constant dense<0.000000e+00> : vector<64x32xf32>
    %61 = tpu.matmul %59, %60, %cst_28 {dimension_numbers = #tpu.dot_dimension_numbers<[1], [0], [0], [1], [0, 0, 1, 1], [], []>} : vector<64x8xf32>, vector<8x32xf32>, vector<64x32xf32> -> vector<64x32xf32>
    %62 = arith.addf %41, %61 : vector<64x32xf32>
    %63 = vector.extract_strided_slice %17 {offsets = [0, 16], sizes = [64, 8], strides = [1, 1]} : vector<64x96xf32> to vector<64x8xf32>
    %64 = vector.extract_strided_slice %17 {offsets = [0, 48], sizes = [64, 8], strides = [1, 1]} : vector<64x96xf32> to vector<64x8xf32>
    %65 = vector.extract_strided_slice %17 {offsets = [0, 80], sizes = [64, 8], strides = [1, 1]} : vector<64x96xf32> to vector<64x8xf32>
    %cst_29 = arith.constant dense<0.000000e+00> : vector<64x64xf32>
    %66 = tpu.matmul %63, %64, %cst_29 {dimension_numbers = #tpu.dot_dimension_numbers<[1], [1], [0], [0], [0, 0, 1, 0], [], []>} : vector<64x8xf32>, vector<64x8xf32>, vector<64x64xf32> -> vector<64x64xf32>
    %c2 = arith.constant 2 : index
    %c0_30 = arith.constant 0 : index
    %c0_31 = arith.constant 0 : index
    %67 = vector.load %arg2[%c2, %c0_30, %c0_31] : memref<4x64x64xf32, #tpu.memory_space<vmem>>, vector<1x64x64xf32>
    %68 = vector.shape_cast %67 : vector<1x64x64xf32> to vector<64x64xf32>
    %69 = arith.addf %66, %68 : vector<64x64xf32>
    %cst_32 = arith.constant dense<0xFF800000> : vector<64xf32>
    %70 = vector.multi_reduction <maximumf>, %69, %cst_32 [1] : vector<64x64xf32> to vector<64xf32>
    %71 = vector.shape_cast %70 : vector<64xf32> to vector<64x1xf32>
    %72 = vector.broadcast %71 : vector<64x1xf32> to vector<64x64xf32>
    %73 = arith.subf %69, %72 : vector<64x64xf32>
    %74 = math.exp %73 : vector<64x64xf32>
    %cst_33 = arith.constant dense<0.000000e+00> : vector<64xf32>
    %75 = vector.multi_reduction <add>, %74, %cst_33 [1] : vector<64x64xf32> to vector<64xf32>
    %76 = vector.shape_cast %75 : vector<64xf32> to vector<64x1xf32>
    %77 = tpu.reciprocal %76 {approx = true} : vector<64x1xf32> -> vector<64x1xf32>
    %78 = vector.broadcast %77 : vector<64x1xf32> to vector<64x64xf32>
    %79 = arith.mulf %74, %78 : vector<64x64xf32>
    %cst_34 = arith.constant dense<0.000000e+00> : vector<64x8xf32>
    %80 = tpu.matmul %79, %65, %cst_34 {dimension_numbers = #tpu.dot_dimension_numbers<[1], [0], [0], [1], [0, 0, 1, 1], [], []>} : vector<64x64xf32>, vector<64x8xf32>, vector<64x8xf32> -> vector<64x8xf32>
    %81 = vector.extract_strided_slice %19 {offsets = [16, 0], sizes = [8, 32], strides = [1, 1]} : vector<32x32xf32> to vector<8x32xf32>
    %cst_35 = arith.constant dense<0.000000e+00> : vector<64x32xf32>
    %82 = tpu.matmul %80, %81, %cst_35 {dimension_numbers = #tpu.dot_dimension_numbers<[1], [0], [0], [1], [0, 0, 1, 1], [], []>} : vector<64x8xf32>, vector<8x32xf32>, vector<64x32xf32> -> vector<64x32xf32>
    %83 = arith.addf %62, %82 : vector<64x32xf32>
    %84 = vector.extract_strided_slice %17 {offsets = [0, 24], sizes = [64, 8], strides = [1, 1]} : vector<64x96xf32> to vector<64x8xf32>
    %85 = vector.extract_strided_slice %17 {offsets = [0, 56], sizes = [64, 8], strides = [1, 1]} : vector<64x96xf32> to vector<64x8xf32>
    %86 = vector.extract_strided_slice %17 {offsets = [0, 88], sizes = [64, 8], strides = [1, 1]} : vector<64x96xf32> to vector<64x8xf32>
    %cst_36 = arith.constant dense<0.000000e+00> : vector<64x64xf32>
    %87 = tpu.matmul %84, %85, %cst_36 {dimension_numbers = #tpu.dot_dimension_numbers<[1], [1], [0], [0], [0, 0, 1, 0], [], []>} : vector<64x8xf32>, vector<64x8xf32>, vector<64x64xf32> -> vector<64x64xf32>
    %c3 = arith.constant 3 : index
    %c0_37 = arith.constant 0 : index
    %c0_38 = arith.constant 0 : index
    %88 = vector.load %arg2[%c3, %c0_37, %c0_38] : memref<4x64x64xf32, #tpu.memory_space<vmem>>, vector<1x64x64xf32>
    %89 = vector.shape_cast %88 : vector<1x64x64xf32> to vector<64x64xf32>
    %90 = arith.addf %87, %89 : vector<64x64xf32>
    %cst_39 = arith.constant dense<0xFF800000> : vector<64xf32>
    %91 = vector.multi_reduction <maximumf>, %90, %cst_39 [1] : vector<64x64xf32> to vector<64xf32>
    %92 = vector.shape_cast %91 : vector<64xf32> to vector<64x1xf32>
    %93 = vector.broadcast %92 : vector<64x1xf32> to vector<64x64xf32>
    %94 = arith.subf %90, %93 : vector<64x64xf32>
    %95 = math.exp %94 : vector<64x64xf32>
    %cst_40 = arith.constant dense<0.000000e+00> : vector<64xf32>
    %96 = vector.multi_reduction <add>, %95, %cst_40 [1] : vector<64x64xf32> to vector<64xf32>
    %97 = vector.shape_cast %96 : vector<64xf32> to vector<64x1xf32>
    %98 = tpu.reciprocal %97 {approx = true} : vector<64x1xf32> -> vector<64x1xf32>
    %99 = vector.broadcast %98 : vector<64x1xf32> to vector<64x64xf32>
    %100 = arith.mulf %95, %99 : vector<64x64xf32>
    %cst_41 = arith.constant dense<0.000000e+00> : vector<64x8xf32>
    %101 = tpu.matmul %100, %86, %cst_41 {dimension_numbers = #tpu.dot_dimension_numbers<[1], [0], [0], [1], [0, 0, 1, 1], [], []>} : vector<64x64xf32>, vector<64x8xf32>, vector<64x8xf32> -> vector<64x8xf32>
    %102 = vector.extract_strided_slice %19 {offsets = [24, 0], sizes = [8, 32], strides = [1, 1]} : vector<32x32xf32> to vector<8x32xf32>
    %cst_42 = arith.constant dense<0.000000e+00> : vector<64x32xf32>
    %103 = tpu.matmul %101, %102, %cst_42 {dimension_numbers = #tpu.dot_dimension_numbers<[1], [0], [0], [1], [0, 0, 1, 1], [], []>} : vector<64x8xf32>, vector<8x32xf32>, vector<64x32xf32> -> vector<64x32xf32>
    %104 = arith.addf %83, %103 : vector<64x32xf32>
    %105 = arith.addf %0, %104 : vector<64x32xf32>
    %c0_43 = arith.constant 0 : index
    %c0_44 = arith.constant 0 : index
    %c0_45 = arith.constant 0 : index
    %106 = vector.load %arg6[%c0_43, %c0_44, %c0_45] : memref<2x1x32xf32, #tpu.memory_space<vmem>>, vector<1x1x32xf32>
    %107 = vector.shape_cast %106 : vector<1x1x32xf32> to vector<1x32xf32>
    %108 = arith.mulf %105, %105 : vector<64x32xf32>
    %cst_46 = arith.constant dense<0.000000e+00> : vector<64xf32>
    %109 = vector.multi_reduction <add>, %108, %cst_46 [1] : vector<64x32xf32> to vector<64xf32>
    %110 = vector.shape_cast %109 : vector<64xf32> to vector<64x1xf32>
    %cst_47 = arith.constant 3.200000e+01 : f32
    %111 = vector.broadcast %cst_47 : f32 to vector<64x1xf32>
    %112 = arith.divf %110, %111 : vector<64x1xf32>
    %cst_48 = arith.constant 9.99999997E-7 : f32
    %113 = vector.broadcast %cst_48 : f32 to vector<64x1xf32>
    %114 = arith.addf %112, %113 : vector<64x1xf32>
    %115 = math.rsqrt %114 : vector<64x1xf32>
    %116 = vector.broadcast %115 : vector<64x1xf32> to vector<64x32xf32>
    %117 = arith.mulf %105, %116 : vector<64x32xf32>
    %118 = vector.broadcast %107 : vector<1x32xf32> to vector<64x32xf32>
    %119 = arith.mulf %117, %118 : vector<64x32xf32>
    %c0_49 = arith.constant 0 : index
    %c0_50 = arith.constant 0 : index
    %c0_51 = arith.constant 0 : index
    %120 = vector.load %arg7[%c0_49, %c0_50, %c0_51] : memref<2x32x64xf32, #tpu.memory_space<vmem>>, vector<1x32x64xf32>
    %121 = vector.shape_cast %120 : vector<1x32x64xf32> to vector<32x64xf32>
    %cst_52 = arith.constant dense<0.000000e+00> : vector<64x64xf32>
    %122 = tpu.matmul %119, %121, %cst_52 {dimension_numbers = #tpu.dot_dimension_numbers<[1], [0], [0], [1], [0, 0, 1, 1], [], []>} : vector<64x32xf32>, vector<32x64xf32>, vector<64x64xf32> -> vector<64x64xf32>
    %cst_53 = arith.constant 0.000000e+00 : f32
    %123 = vector.broadcast %cst_53 : f32 to vector<64x64xf32>
    %124 = arith.maximumf %122, %123 : vector<64x64xf32>
    %c0_54 = arith.constant 0 : index
    %c0_55 = arith.constant 0 : index
    %c0_56 = arith.constant 0 : index
    %125 = vector.load %arg8[%c0_54, %c0_55, %c0_56] : memref<2x64x32xf32, #tpu.memory_space<vmem>>, vector<1x64x32xf32>
    %126 = vector.shape_cast %125 : vector<1x64x32xf32> to vector<64x32xf32>
    %cst_57 = arith.constant dense<0.000000e+00> : vector<64x32xf32>
    %127 = tpu.matmul %124, %126, %cst_57 {dimension_numbers = #tpu.dot_dimension_numbers<[1], [0], [0], [1], [0, 0, 1, 1], [], []>} : vector<64x64xf32>, vector<64x32xf32>, vector<64x32xf32> -> vector<64x32xf32>
    %128 = arith.addf %105, %127 : vector<64x32xf32>
    %c1_58 = arith.constant 1 : index
    %c0_59 = arith.constant 0 : index
    %c0_60 = arith.constant 0 : index
    %129 = vector.load %arg3[%c1_58, %c0_59, %c0_60] : memref<2x1x32xf32, #tpu.memory_space<vmem>>, vector<1x1x32xf32>
    %130 = vector.shape_cast %129 : vector<1x1x32xf32> to vector<1x32xf32>
    %131 = arith.mulf %128, %128 : vector<64x32xf32>
    %cst_61 = arith.constant dense<0.000000e+00> : vector<64xf32>
    %132 = vector.multi_reduction <add>, %131, %cst_61 [1] : vector<64x32xf32> to vector<64xf32>
    %133 = vector.shape_cast %132 : vector<64xf32> to vector<64x1xf32>
    %cst_62 = arith.constant 3.200000e+01 : f32
    %134 = vector.broadcast %cst_62 : f32 to vector<64x1xf32>
    %135 = arith.divf %133, %134 : vector<64x1xf32>
    %cst_63 = arith.constant 9.99999997E-7 : f32
    %136 = vector.broadcast %cst_63 : f32 to vector<64x1xf32>
    %137 = arith.addf %135, %136 : vector<64x1xf32>
    %138 = math.rsqrt %137 : vector<64x1xf32>
    %139 = vector.broadcast %138 : vector<64x1xf32> to vector<64x32xf32>
    %140 = arith.mulf %128, %139 : vector<64x32xf32>
    %141 = vector.broadcast %130 : vector<1x32xf32> to vector<64x32xf32>
    %142 = arith.mulf %140, %141 : vector<64x32xf32>
    %c1_64 = arith.constant 1 : index
    %c0_65 = arith.constant 0 : index
    %c0_66 = arith.constant 0 : index
    %143 = vector.load %arg4[%c1_64, %c0_65, %c0_66] : memref<2x32x96xf32, #tpu.memory_space<vmem>>, vector<1x32x96xf32>
    %144 = vector.shape_cast %143 : vector<1x32x96xf32> to vector<32x96xf32>
    %cst_67 = arith.constant dense<0.000000e+00> : vector<64x96xf32>
    %145 = tpu.matmul %142, %144, %cst_67 {dimension_numbers = #tpu.dot_dimension_numbers<[1], [0], [0], [1], [0, 0, 1, 1], [], []>} : vector<64x32xf32>, vector<32x96xf32>, vector<64x96xf32> -> vector<64x96xf32>
    %c1_68 = arith.constant 1 : index
    %c0_69 = arith.constant 0 : index
    %c0_70 = arith.constant 0 : index
    %146 = vector.load %arg5[%c1_68, %c0_69, %c0_70] : memref<2x32x32xf32, #tpu.memory_space<vmem>>, vector<1x32x32xf32>
    %147 = vector.shape_cast %146 : vector<1x32x32xf32> to vector<32x32xf32>
    %cst_71 = arith.constant 0.000000e+00 : f32
    %148 = vector.broadcast %cst_71 : f32 to vector<64x32xf32>
    %149 = vector.extract_strided_slice %145 {offsets = [0, 0], sizes = [64, 8], strides = [1, 1]} : vector<64x96xf32> to vector<64x8xf32>
    %150 = vector.extract_strided_slice %145 {offsets = [0, 32], sizes = [64, 8], strides = [1, 1]} : vector<64x96xf32> to vector<64x8xf32>
    %151 = vector.extract_strided_slice %145 {offsets = [0, 64], sizes = [64, 8], strides = [1, 1]} : vector<64x96xf32> to vector<64x8xf32>
    %cst_72 = arith.constant dense<0.000000e+00> : vector<64x64xf32>
    %152 = tpu.matmul %149, %150, %cst_72 {dimension_numbers = #tpu.dot_dimension_numbers<[1], [1], [0], [0], [0, 0, 1, 0], [], []>} : vector<64x8xf32>, vector<64x8xf32>, vector<64x64xf32> -> vector<64x64xf32>
    %c0_73 = arith.constant 0 : index
    %c0_74 = arith.constant 0 : index
    %c0_75 = arith.constant 0 : index
    %153 = vector.load %arg2[%c0_73, %c0_74, %c0_75] : memref<4x64x64xf32, #tpu.memory_space<vmem>>, vector<1x64x64xf32>
    %154 = vector.shape_cast %153 : vector<1x64x64xf32> to vector<64x64xf32>
    %155 = arith.addf %152, %154 : vector<64x64xf32>
    %cst_76 = arith.constant dense<0xFF800000> : vector<64xf32>
    %156 = vector.multi_reduction <maximumf>, %155, %cst_76 [1] : vector<64x64xf32> to vector<64xf32>
    %157 = vector.shape_cast %156 : vector<64xf32> to vector<64x1xf32>
    %158 = vector.broadcast %157 : vector<64x1xf32> to vector<64x64xf32>
    %159 = arith.subf %155, %158 : vector<64x64xf32>
    %160 = math.exp %159 : vector<64x64xf32>
    %cst_77 = arith.constant dense<0.000000e+00> : vector<64xf32>
    %161 = vector.multi_reduction <add>, %160, %cst_77 [1] : vector<64x64xf32> to vector<64xf32>
    %162 = vector.shape_cast %161 : vector<64xf32> to vector<64x1xf32>
    %163 = tpu.reciprocal %162 {approx = true} : vector<64x1xf32> -> vector<64x1xf32>
    %164 = vector.broadcast %163 : vector<64x1xf32> to vector<64x64xf32>
    %165 = arith.mulf %160, %164 : vector<64x64xf32>
    %cst_78 = arith.constant dense<0.000000e+00> : vector<64x8xf32>
    %166 = tpu.matmul %165, %151, %cst_78 {dimension_numbers = #tpu.dot_dimension_numbers<[1], [0], [0], [1], [0, 0, 1, 1], [], []>} : vector<64x64xf32>, vector<64x8xf32>, vector<64x8xf32> -> vector<64x8xf32>
    %167 = vector.extract_strided_slice %147 {offsets = [0, 0], sizes = [8, 32], strides = [1, 1]} : vector<32x32xf32> to vector<8x32xf32>
    %cst_79 = arith.constant dense<0.000000e+00> : vector<64x32xf32>
    %168 = tpu.matmul %166, %167, %cst_79 {dimension_numbers = #tpu.dot_dimension_numbers<[1], [0], [0], [1], [0, 0, 1, 1], [], []>} : vector<64x8xf32>, vector<8x32xf32>, vector<64x32xf32> -> vector<64x32xf32>
    %169 = arith.addf %148, %168 : vector<64x32xf32>
    %170 = vector.extract_strided_slice %145 {offsets = [0, 8], sizes = [64, 8], strides = [1, 1]} : vector<64x96xf32> to vector<64x8xf32>
    %171 = vector.extract_strided_slice %145 {offsets = [0, 40], sizes = [64, 8], strides = [1, 1]} : vector<64x96xf32> to vector<64x8xf32>
    %172 = vector.extract_strided_slice %145 {offsets = [0, 72], sizes = [64, 8], strides = [1, 1]} : vector<64x96xf32> to vector<64x8xf32>
    %cst_80 = arith.constant dense<0.000000e+00> : vector<64x64xf32>
    %173 = tpu.matmul %170, %171, %cst_80 {dimension_numbers = #tpu.dot_dimension_numbers<[1], [1], [0], [0], [0, 0, 1, 0], [], []>} : vector<64x8xf32>, vector<64x8xf32>, vector<64x64xf32> -> vector<64x64xf32>
    %c1_81 = arith.constant 1 : index
    %c0_82 = arith.constant 0 : index
    %c0_83 = arith.constant 0 : index
    %174 = vector.load %arg2[%c1_81, %c0_82, %c0_83] : memref<4x64x64xf32, #tpu.memory_space<vmem>>, vector<1x64x64xf32>
    %175 = vector.shape_cast %174 : vector<1x64x64xf32> to vector<64x64xf32>
    %176 = arith.addf %173, %175 : vector<64x64xf32>
    %cst_84 = arith.constant dense<0xFF800000> : vector<64xf32>
    %177 = vector.multi_reduction <maximumf>, %176, %cst_84 [1] : vector<64x64xf32> to vector<64xf32>
    %178 = vector.shape_cast %177 : vector<64xf32> to vector<64x1xf32>
    %179 = vector.broadcast %178 : vector<64x1xf32> to vector<64x64xf32>
    %180 = arith.subf %176, %179 : vector<64x64xf32>
    %181 = math.exp %180 : vector<64x64xf32>
    %cst_85 = arith.constant dense<0.000000e+00> : vector<64xf32>
    %182 = vector.multi_reduction <add>, %181, %cst_85 [1] : vector<64x64xf32> to vector<64xf32>
    %183 = vector.shape_cast %182 : vector<64xf32> to vector<64x1xf32>
    %184 = tpu.reciprocal %183 {approx = true} : vector<64x1xf32> -> vector<64x1xf32>
    %185 = vector.broadcast %184 : vector<64x1xf32> to vector<64x64xf32>
    %186 = arith.mulf %181, %185 : vector<64x64xf32>
    %cst_86 = arith.constant dense<0.000000e+00> : vector<64x8xf32>
    %187 = tpu.matmul %186, %172, %cst_86 {dimension_numbers = #tpu.dot_dimension_numbers<[1], [0], [0], [1], [0, 0, 1, 1], [], []>} : vector<64x64xf32>, vector<64x8xf32>, vector<64x8xf32> -> vector<64x8xf32>
    %188 = vector.extract_strided_slice %147 {offsets = [8, 0], sizes = [8, 32], strides = [1, 1]} : vector<32x32xf32> to vector<8x32xf32>
    %cst_87 = arith.constant dense<0.000000e+00> : vector<64x32xf32>
    %189 = tpu.matmul %187, %188, %cst_87 {dimension_numbers = #tpu.dot_dimension_numbers<[1], [0], [0], [1], [0, 0, 1, 1], [], []>} : vector<64x8xf32>, vector<8x32xf32>, vector<64x32xf32> -> vector<64x32xf32>
    %190 = arith.addf %169, %189 : vector<64x32xf32>
    %191 = vector.extract_strided_slice %145 {offsets = [0, 16], sizes = [64, 8], strides = [1, 1]} : vector<64x96xf32> to vector<64x8xf32>
    %192 = vector.extract_strided_slice %145 {offsets = [0, 48], sizes = [64, 8], strides = [1, 1]} : vector<64x96xf32> to vector<64x8xf32>
    %193 = vector.extract_strided_slice %145 {offsets = [0, 80], sizes = [64, 8], strides = [1, 1]} : vector<64x96xf32> to vector<64x8xf32>
    %cst_88 = arith.constant dense<0.000000e+00> : vector<64x64xf32>
    %194 = tpu.matmul %191, %192, %cst_88 {dimension_numbers = #tpu.dot_dimension_numbers<[1], [1], [0], [0], [0, 0, 1, 0], [], []>} : vector<64x8xf32>, vector<64x8xf32>, vector<64x64xf32> -> vector<64x64xf32>
    %c2_89 = arith.constant 2 : index
    %c0_90 = arith.constant 0 : index
    %c0_91 = arith.constant 0 : index
    %195 = vector.load %arg2[%c2_89, %c0_90, %c0_91] : memref<4x64x64xf32, #tpu.memory_space<vmem>>, vector<1x64x64xf32>
    %196 = vector.shape_cast %195 : vector<1x64x64xf32> to vector<64x64xf32>
    %197 = arith.addf %194, %196 : vector<64x64xf32>
    %cst_92 = arith.constant dense<0xFF800000> : vector<64xf32>
    %198 = vector.multi_reduction <maximumf>, %197, %cst_92 [1] : vector<64x64xf32> to vector<64xf32>
    %199 = vector.shape_cast %198 : vector<64xf32> to vector<64x1xf32>
    %200 = vector.broadcast %199 : vector<64x1xf32> to vector<64x64xf32>
    %201 = arith.subf %197, %200 : vector<64x64xf32>
    %202 = math.exp %201 : vector<64x64xf32>
    %cst_93 = arith.constant dense<0.000000e+00> : vector<64xf32>
    %203 = vector.multi_reduction <add>, %202, %cst_93 [1] : vector<64x64xf32> to vector<64xf32>
    %204 = vector.shape_cast %203 : vector<64xf32> to vector<64x1xf32>
    %205 = tpu.reciprocal %204 {approx = true} : vector<64x1xf32> -> vector<64x1xf32>
    %206 = vector.broadcast %205 : vector<64x1xf32> to vector<64x64xf32>
    %207 = arith.mulf %202, %206 : vector<64x64xf32>
    %cst_94 = arith.constant dense<0.000000e+00> : vector<64x8xf32>
    %208 = tpu.matmul %207, %193, %cst_94 {dimension_numbers = #tpu.dot_dimension_numbers<[1], [0], [0], [1], [0, 0, 1, 1], [], []>} : vector<64x64xf32>, vector<64x8xf32>, vector<64x8xf32> -> vector<64x8xf32>
    %209 = vector.extract_strided_slice %147 {offsets = [16, 0], sizes = [8, 32], strides = [1, 1]} : vector<32x32xf32> to vector<8x32xf32>
    %cst_95 = arith.constant dense<0.000000e+00> : vector<64x32xf32>
    %210 = tpu.matmul %208, %209, %cst_95 {dimension_numbers = #tpu.dot_dimension_numbers<[1], [0], [0], [1], [0, 0, 1, 1], [], []>} : vector<64x8xf32>, vector<8x32xf32>, vector<64x32xf32> -> vector<64x32xf32>
    %211 = arith.addf %190, %210 : vector<64x32xf32>
    %212 = vector.extract_strided_slice %145 {offsets = [0, 24], sizes = [64, 8], strides = [1, 1]} : vector<64x96xf32> to vector<64x8xf32>
    %213 = vector.extract_strided_slice %145 {offsets = [0, 56], sizes = [64, 8], strides = [1, 1]} : vector<64x96xf32> to vector<64x8xf32>
    %214 = vector.extract_strided_slice %145 {offsets = [0, 88], sizes = [64, 8], strides = [1, 1]} : vector<64x96xf32> to vector<64x8xf32>
    %cst_96 = arith.constant dense<0.000000e+00> : vector<64x64xf32>
    %215 = tpu.matmul %212, %213, %cst_96 {dimension_numbers = #tpu.dot_dimension_numbers<[1], [1], [0], [0], [0, 0, 1, 0], [], []>} : vector<64x8xf32>, vector<64x8xf32>, vector<64x64xf32> -> vector<64x64xf32>
    %c3_97 = arith.constant 3 : index
    %c0_98 = arith.constant 0 : index
    %c0_99 = arith.constant 0 : index
    %216 = vector.load %arg2[%c3_97, %c0_98, %c0_99] : memref<4x64x64xf32, #tpu.memory_space<vmem>>, vector<1x64x64xf32>
    %217 = vector.shape_cast %216 : vector<1x64x64xf32> to vector<64x64xf32>
    %218 = arith.addf %215, %217 : vector<64x64xf32>
    %cst_100 = arith.constant dense<0xFF800000> : vector<64xf32>
    %219 = vector.multi_reduction <maximumf>, %218, %cst_100 [1] : vector<64x64xf32> to vector<64xf32>
    %220 = vector.shape_cast %219 : vector<64xf32> to vector<64x1xf32>
    %221 = vector.broadcast %220 : vector<64x1xf32> to vector<64x64xf32>
    %222 = arith.subf %218, %221 : vector<64x64xf32>
    %223 = math.exp %222 : vector<64x64xf32>
    %cst_101 = arith.constant dense<0.000000e+00> : vector<64xf32>
    %224 = vector.multi_reduction <add>, %223, %cst_101 [1] : vector<64x64xf32> to vector<64xf32>
    %225 = vector.shape_cast %224 : vector<64xf32> to vector<64x1xf32>
    %226 = tpu.reciprocal %225 {approx = true} : vector<64x1xf32> -> vector<64x1xf32>
    %227 = vector.broadcast %226 : vector<64x1xf32> to vector<64x64xf32>
    %228 = arith.mulf %223, %227 : vector<64x64xf32>
    %cst_102 = arith.constant dense<0.000000e+00> : vector<64x8xf32>
    %229 = tpu.matmul %228, %214, %cst_102 {dimension_numbers = #tpu.dot_dimension_numbers<[1], [0], [0], [1], [0, 0, 1, 1], [], []>} : vector<64x64xf32>, vector<64x8xf32>, vector<64x8xf32> -> vector<64x8xf32>
    %230 = vector.extract_strided_slice %147 {offsets = [24, 0], sizes = [8, 32], strides = [1, 1]} : vector<32x32xf32> to vector<8x32xf32>
    %cst_103 = arith.constant dense<0.000000e+00> : vector<64x32xf32>
    %231 = tpu.matmul %229, %230, %cst_103 {dimension_numbers = #tpu.dot_dimension_numbers<[1], [0], [0], [1], [0, 0, 1, 1], [], []>} : vector<64x8xf32>, vector<8x32xf32>, vector<64x32xf32> -> vector<64x32xf32>
    %232 = arith.addf %211, %231 : vector<64x32xf32>
    %233 = arith.addf %128, %232 : vector<64x32xf32>
    %c1_104 = arith.constant 1 : index
    %c0_105 = arith.constant 0 : index
    %c0_106 = arith.constant 0 : index
    %234 = vector.load %arg6[%c1_104, %c0_105, %c0_106] : memref<2x1x32xf32, #tpu.memory_space<vmem>>, vector<1x1x32xf32>
    %235 = vector.shape_cast %234 : vector<1x1x32xf32> to vector<1x32xf32>
    %236 = arith.mulf %233, %233 : vector<64x32xf32>
    %cst_107 = arith.constant dense<0.000000e+00> : vector<64xf32>
    %237 = vector.multi_reduction <add>, %236, %cst_107 [1] : vector<64x32xf32> to vector<64xf32>
    %238 = vector.shape_cast %237 : vector<64xf32> to vector<64x1xf32>
    %cst_108 = arith.constant 3.200000e+01 : f32
    %239 = vector.broadcast %cst_108 : f32 to vector<64x1xf32>
    %240 = arith.divf %238, %239 : vector<64x1xf32>
    %cst_109 = arith.constant 9.99999997E-7 : f32
    %241 = vector.broadcast %cst_109 : f32 to vector<64x1xf32>
    %242 = arith.addf %240, %241 : vector<64x1xf32>
    %243 = math.rsqrt %242 : vector<64x1xf32>
    %244 = vector.broadcast %243 : vector<64x1xf32> to vector<64x32xf32>
    %245 = arith.mulf %233, %244 : vector<64x32xf32>
    %246 = vector.broadcast %235 : vector<1x32xf32> to vector<64x32xf32>
    %247 = arith.mulf %245, %246 : vector<64x32xf32>
    %c1_110 = arith.constant 1 : index
    %c0_111 = arith.constant 0 : index
    %c0_112 = arith.constant 0 : index
    %248 = vector.load %arg7[%c1_110, %c0_111, %c0_112] : memref<2x32x64xf32, #tpu.memory_space<vmem>>, vector<1x32x64xf32>
    %249 = vector.shape_cast %248 : vector<1x32x64xf32> to vector<32x64xf32>
    %cst_113 = arith.constant dense<0.000000e+00> : vector<64x64xf32>
    %250 = tpu.matmul %247, %249, %cst_113 {dimension_numbers = #tpu.dot_dimension_numbers<[1], [0], [0], [1], [0, 0, 1, 1], [], []>} : vector<64x32xf32>, vector<32x64xf32>, vector<64x64xf32> -> vector<64x64xf32>
    %cst_114 = arith.constant 0.000000e+00 : f32
    %251 = vector.broadcast %cst_114 : f32 to vector<64x64xf32>
    %252 = arith.maximumf %250, %251 : vector<64x64xf32>
    %c1_115 = arith.constant 1 : index
    %c0_116 = arith.constant 0 : index
    %c0_117 = arith.constant 0 : index
    %253 = vector.load %arg8[%c1_115, %c0_116, %c0_117] : memref<2x64x32xf32, #tpu.memory_space<vmem>>, vector<1x64x32xf32>
    %254 = vector.shape_cast %253 : vector<1x64x32xf32> to vector<64x32xf32>
    %cst_118 = arith.constant dense<0.000000e+00> : vector<64x32xf32>
    %255 = tpu.matmul %252, %254, %cst_118 {dimension_numbers = #tpu.dot_dimension_numbers<[1], [0], [0], [1], [0, 0, 1, 1], [], []>} : vector<64x64xf32>, vector<64x32xf32>, vector<64x32xf32> -> vector<64x32xf32>
    %256 = arith.addf %233, %255 : vector<64x32xf32>
    %c0_119 = arith.constant 0 : index
    %c0_120 = arith.constant 0 : index
    %257 = vector.load %arg9[%c0_119, %c0_120] : memref<1x32xf32, #tpu.memory_space<vmem>>, vector<1x32xf32>
    %258 = arith.mulf %256, %256 : vector<64x32xf32>
    %cst_121 = arith.constant dense<0.000000e+00> : vector<64xf32>
    %259 = vector.multi_reduction <add>, %258, %cst_121 [1] : vector<64x32xf32> to vector<64xf32>
    %260 = vector.shape_cast %259 : vector<64xf32> to vector<64x1xf32>
    %cst_122 = arith.constant 3.200000e+01 : f32
    %261 = vector.broadcast %cst_122 : f32 to vector<64x1xf32>
    %262 = arith.divf %260, %261 : vector<64x1xf32>
    %cst_123 = arith.constant 9.99999997E-7 : f32
    %263 = vector.broadcast %cst_123 : f32 to vector<64x1xf32>
    %264 = arith.addf %262, %263 : vector<64x1xf32>
    %265 = math.rsqrt %264 : vector<64x1xf32>
    %266 = vector.broadcast %265 : vector<64x1xf32> to vector<64x32xf32>
    %267 = arith.mulf %256, %266 : vector<64x32xf32>
    %268 = vector.broadcast %257 : vector<1x32xf32> to vector<64x32xf32>
    %269 = arith.mulf %267, %268 : vector<64x32xf32>
    %c0_124 = arith.constant 0 : index
    %c0_125 = arith.constant 0 : index
    %270 = vector.load %arg10[%c0_124, %c0_125] : memref<1x32xf32, #tpu.memory_space<vmem>>, vector<1x32xf32>
    %271 = vector.broadcast %270 : vector<1x32xf32> to vector<64x32xf32>
    %272 = arith.mulf %269, %271 : vector<64x32xf32>
    %cst_126 = arith.constant dense<0.000000e+00> : vector<64xf32>
    %273 = vector.multi_reduction <add>, %272, %cst_126 [1] : vector<64x32xf32> to vector<64xf32>
    %274 = vector.shape_cast %273 : vector<64xf32> to vector<64x1xf32>
    %c0_127 = arith.constant 0 : index
    %c0_128 = arith.constant 0 : index
    %275 = vector.load %arg11[%c0_127, %c0_128] : memref<1x1xf32, #tpu.memory_space<vmem>>, vector<1x1xf32>
    %276 = vector.broadcast %275 : vector<1x1xf32> to vector<64x1xf32>
    %277 = arith.addf %274, %276 : vector<64x1xf32>
    %278 = vector.extract_strided_slice %277 {offsets = [0, 0], sizes = [32, 1], strides = [1, 1]} : vector<64x1xf32> to vector<32x1xf32>
    %c0_129 = arith.constant 0 : index
    %c0_130 = arith.constant 0 : index
    %279 = vector.load %arg12[%c0_129, %c0_130] : memref<32x3xf32, #tpu.memory_space<vmem>>, vector<32x3xf32>
    %280 = vector.broadcast %278 : vector<32x1xf32> to vector<32x3xf32>
    %281 = arith.mulf %280, %279 : vector<32x3xf32>
    %cst_131 = arith.constant dense<0.000000e+00> : vector<3xf32>
    %282 = vector.multi_reduction <add>, %281, %cst_131 [0] : vector<32x3xf32> to vector<3xf32>
    %283 = vector.shape_cast %282 : vector<3xf32> to vector<1x3xf32>
    %c0_132 = arith.constant 0 : index
    %c0_133 = arith.constant 0 : index
    %284 = vector.load %arg13[%c0_132, %c0_133] : memref<1x3xf32, #tpu.memory_space<vmem>>, vector<1x3xf32>
    %285 = arith.addf %283, %284 : vector<1x3xf32>
    %c0_134 = arith.constant 0 : index
    %c0_135 = arith.constant 0 : index
    %286 = vector.load %arg14[%c0_134, %c0_135] : memref<2x3xf32, #tpu.memory_space<vmem>>, vector<1x3xf32>
    tpu.vector_store %arg14[%c0_134, %c0_135], %285 {strides = array<i32>} : memref<2x3xf32, #tpu.memory_space<vmem>>, vector<1x3xf32>,
    %287 = vector.extract_strided_slice %277 {offsets = [32, 0], sizes = [32, 1], strides = [1, 1]} : vector<64x1xf32> to vector<32x1xf32>
    %c0_136 = arith.constant 0 : index
    %c0_137 = arith.constant 0 : index
    %288 = vector.load %arg12[%c0_136, %c0_137] : memref<32x3xf32, #tpu.memory_space<vmem>>, vector<32x3xf32>
    %289 = vector.broadcast %287 : vector<32x1xf32> to vector<32x3xf32>
    %290 = arith.mulf %289, %288 : vector<32x3xf32>
    %cst_138 = arith.constant dense<0.000000e+00> : vector<3xf32>
    %291 = vector.multi_reduction <add>, %290, %cst_138 [0] : vector<32x3xf32> to vector<3xf32>
    %292 = vector.shape_cast %291 : vector<3xf32> to vector<1x3xf32>
    %c0_139 = arith.constant 0 : index
    %c0_140 = arith.constant 0 : index
    %293 = vector.load %arg13[%c0_139, %c0_140] : memref<1x3xf32, #tpu.memory_space<vmem>>, vector<1x3xf32>
    %294 = arith.addf %292, %293 : vector<1x3xf32>
    %c1_141 = arith.constant 1 : index
    %c0_142 = arith.constant 0 : index
    %295 = vector.load %arg14[%c1_141, %c0_142] : memref<2x3xf32, #tpu.memory_space<vmem>>, vector<1x3xf32>
    tpu.vector_store %arg14[%c1_141, %c0_142], %294 {strides = array<i32>} : memref<2x3xf32, #tpu.memory_space<vmem>>, vector<1x3xf32>,
    return
  }
  func.func @transform_0(%arg0: i32) -> (i32, i32) {
    %c0_i32 = arith.constant 0 : i32
    %c0_i32_0 = arith.constant 0 : i32
    %c0_i32_1 = arith.constant 0 : i32
    return %c0_i32, %c0_i32_0 : i32, i32
  }
  func.func @transform_1(%arg0: i32) -> (i32, i32, i32) {
    %c0_i32 = arith.constant 0 : i32
    %c0_i32_0 = arith.constant 0 : i32
    %c0_i32_1 = arith.constant 0 : i32
    %c0_i32_2 = arith.constant 0 : i32
    return %c0_i32, %c0_i32_0, %c0_i32_1 : i32, i32, i32
  }
  func.func @transform_2(%arg0: i32) -> (i32, i32, i32) {
    %c0_i32 = arith.constant 0 : i32
    %c0_i32_0 = arith.constant 0 : i32
    %c0_i32_1 = arith.constant 0 : i32
    %c0_i32_2 = arith.constant 0 : i32
    return %c0_i32, %c0_i32_0, %c0_i32_1 : i32, i32, i32
  }
  func.func @transform_3(%arg0: i32) -> (i32, i32, i32) {
    %c0_i32 = arith.constant 0 : i32
    %c0_i32_0 = arith.constant 0 : i32
    %c0_i32_1 = arith.constant 0 : i32
    %c0_i32_2 = arith.constant 0 : i32
    return %c0_i32, %c0_i32_0, %c0_i32_1 : i32, i32, i32
  }
  func.func @transform_4(%arg0: i32) -> (i32, i32, i32) {
    %c0_i32 = arith.constant 0 : i32
    %c0_i32_0 = arith.constant 0 : i32
    %c0_i32_1 = arith.constant 0 : i32
    %c0_i32_2 = arith.constant 0 : i32
    return %c0_i32, %c0_i32_0, %c0_i32_1 : i32, i32, i32
  }
  func.func @transform_5(%arg0: i32) -> (i32, i32, i32) {
    %c0_i32 = arith.constant 0 : i32
    %c0_i32_0 = arith.constant 0 : i32
    %c0_i32_1 = arith.constant 0 : i32
    %c0_i32_2 = arith.constant 0 : i32
    return %c0_i32, %c0_i32_0, %c0_i32_1 : i32, i32, i32
  }
  func.func @transform_6(%arg0: i32) -> (i32, i32, i32) {
    %c0_i32 = arith.constant 0 : i32
    %c0_i32_0 = arith.constant 0 : i32
    %c0_i32_1 = arith.constant 0 : i32
    %c0_i32_2 = arith.constant 0 : i32
    return %c0_i32, %c0_i32_0, %c0_i32_1 : i32, i32, i32
  }
  func.func @transform_7(%arg0: i32) -> (i32, i32, i32) {
    %c0_i32 = arith.constant 0 : i32
    %c0_i32_0 = arith.constant 0 : i32
    %c0_i32_1 = arith.constant 0 : i32
    %c0_i32_2 = arith.constant 0 : i32
    return %c0_i32, %c0_i32_0, %c0_i32_1 : i32, i32, i32
  }
  func.func @transform_8(%arg0: i32) -> (i32, i32) {
    %c0_i32 = arith.constant 0 : i32
    %c0_i32_0 = arith.constant 0 : i32
    %c0_i32_1 = arith.constant 0 : i32
    return %c0_i32, %c0_i32_0 : i32, i32
  }
  func.func @transform_9(%arg0: i32) -> (i32, i32) {
    %c0_i32 = arith.constant 0 : i32
    %c0_i32_0 = arith.constant 0 : i32
    %c0_i32_1 = arith.constant 0 : i32
    return %c0_i32, %c0_i32_0 : i32, i32
  }
  func.func @transform_10(%arg0: i32) -> (i32, i32) {
    %c0_i32 = arith.constant 0 : i32
    %c0_i32_0 = arith.constant 0 : i32
    %c0_i32_1 = arith.constant 0 : i32
    return %c0_i32, %c0_i32_0 : i32, i32
  }
  func.func @transform_11(%arg0: i32) -> (i32, i32) {
    %c0_i32 = arith.constant 0 : i32
    %c0_i32_0 = arith.constant 0 : i32
    %c0_i32_1 = arith.constant 0 : i32
    return %c0_i32, %c0_i32_0 : i32, i32
  }
  func.func @transform_12(%arg0: i32) -> (i32, i32) {
    %c0_i32 = arith.constant 0 : i32
    %c0_i32_0 = arith.constant 0 : i32
    %c0_i32_1 = arith.constant 0 : i32
    return %c0_i32, %c0_i32_0 : i32, i32
  }
  func.func @transform_13(%arg0: i32) -> (i32, i32) {
    %c0_i32 = arith.constant 0 : i32
    %c0_i32_0 = arith.constant 0 : i32
    %c0_i32_1 = arith.constant 0 : i32
    return %c0_i32, %c0_i32_0 : i32, i32
  }
}

</mosaic_0001>

<llo_original>
// kernel: tile.9
$region0: #{tile.9}
  %s0 = inlined_call_operand.vmem [shape: f32[4,2,32,2,32], index: 0, kind: input, shape index: {}]
  %s1 = inlined_call_operand.vmem [shape: f32[4,64,64], index: 1, kind: output, shape index: {}]
  $region1: #{tile.9} parent=0
    #allocation0 [shape = 'u8[1048576]{0}', space=vmem, size = 0x100000, scoped, tag = 'scoped mem for input reshape']
    %s3 = ssub.s32 4, 1
    %s4 = scalar_lea.vmem %s0, 510
    %v5 = vld [vmem:[%s4] sm:%s3]
    %s6 = scalar_lea.vmem [#allocation0], 2040
    %7 = vst [vmem:[%s6] sm:%s3] %v5
    %s8 = scalar_lea.vmem %s0, 508
    %v9 = vld [vmem:[%s8] sm:%s3]
    %s10 = scalar_lea.vmem [#allocation0], 2032
    %11 = vst [vmem:[%s10] sm:%s3] %v9
    %s12 = scalar_lea.vmem %s0, 506
    %v13 = vld [vmem:[%s12] sm:%s3]
    %s14 = scalar_lea.vmem [#allocation0], 2024
    %15 = vst [vmem:[%s14] sm:%s3] %v13
    %s16 = scalar_lea.vmem %s0, 504
    %v17 = vld [vmem:[%s16] sm:%s3]
    %s18 = scalar_lea.vmem [#allocation0], 2016
    %19 = vst [vmem:[%s18] sm:%s3] %v17
    %s20 = scalar_lea.vmem %s0, 502
    %v21 = vld [vmem:[%s20] sm:%s3]
    %s22 = scalar_lea.vmem [#allocation0], 2008
    %23 = vst [vmem:[%s22] sm:%s3] %v21
    %s24 = scalar_lea.vmem %s0, 500
    %v25 = vld [vmem:[%s24] sm:%s3]
    %s26 = scalar_lea.vmem [#allocation0], 2000
    %27 = vst [vmem:[%s26] sm:%s3] %v25
    %s28 = scalar_lea.vmem %s0, 498
    %v29 = vld [vmem:[%s28] sm:%s3]
    %s30 = scalar_lea.vmem [#allocation0], 1992
    %31 = vst [vmem:[%s30] sm:%s3] %v29
    %s32 = scalar_lea.vmem %s0, 496
    %v33 = vld [vmem:[%s32] sm:%s3]
    %s34 = scalar_lea.vmem [#allocation0], 1984
    %35 = vst [vmem:[%s34] sm:%s3] %v33
    %s36 = scalar_lea.vmem %s0, 494
    %v37 = vld [vmem:[%s36] sm:%s3]
    %s38 = scalar_lea.vmem [#allocation0], 1976
    %39 = vst [vmem:[%s38] sm:%s3] %v37
    %s40 = scalar_lea.vmem %s0, 492
    %v41 = vld [vmem:[%s40] sm:%s3]
    %s42 = scalar_lea.vmem [#allocation0], 1968
    %43 = vst [vmem:[%s42] sm:%s3] %v41
    %s44 = scalar_lea.vmem %s0, 490
    %v45 = vld [vmem:[%s44] sm:%s3]
    %s46 = scalar_lea.vmem [#allocation0], 1960
    %47 = vst [vmem:[%s46] sm:%s3] %v45
    %s48 = scalar_lea.vmem %s0, 488
    %v49 = vld [vmem:[%s48] sm:%s3]
    %s50 = scalar_lea.vmem [#allocation0], 1952
    %51 = vst [vmem:[%s50] sm:%s3] %v49
    %s52 = scalar_lea.vmem %s0, 486
    %v53 = vld [vmem:[%s52] sm:%s3]
    %s54 = scalar_lea.vmem [#allocation0], 1944
    %55 = vst [vmem:[%s54] sm:%s3] %v53
    %s56 = scalar_lea.vmem %s0, 484
    %v57 = vld [vmem:[%s56] sm:%s3]
    %s58 = scalar_lea.vmem [#allocation0], 1936
    %59 = vst [vmem:[%s58] sm:%s3] %v57
    %s60 = scalar_lea.vmem %s0, 482
    %v61 = vld [vmem:[%s60] sm:%s3]
    %s62 = scalar_lea.vmem [#allocation0], 1928
    %63 = vst [vmem:[%s62] sm:%s3] %v61
    %s64 = scalar_lea.vmem %s0, 480
    %v65 = vld [vmem:[%s64] sm:%s3]
    %s66 = scalar_lea.vmem [#allocation0], 1920
    %67 = vst [vmem:[%s66] sm:%s3] %v65
    %s68 = scalar_lea.vmem %s0, 478
    %v69 = vld [vmem:[%s68] sm:%s3]
    %s70 = scalar_lea.vmem [#allocation0], 1912
    %71 = vst [vmem:[%s70] sm:%s3] %v69
    %s72 = scalar_lea.vmem %s0, 476
    %v73 = vld [vmem:[%s72] sm:%s3]
    %s74 = scalar_lea.vmem [#allocation0], 1904
    %75 = vst [vmem:[%s74] sm:%s3] %v73
    %s76 = scalar_lea.vmem %s0, 474
    %v77 = vld [vmem:[%s76] sm:%s3]
    %s78 = scalar_lea.vmem [#allocation0], 1896
    %79 = vst [vmem:[%s78] sm:%s3] %v77
    %s80 = scalar_lea.vmem %s0, 472
    %v81 = vld [vmem:[%s80] sm:%s3]
    %s82 = scalar_lea.vmem [#allocation0], 1888
    %83 = vst [vmem:[%s82] sm:%s3] %v81
    %s84 = scalar_lea.vmem %s0, 470
    %v85 = vld [vmem:[%s84] sm:%s3]
    %s86 = scalar_lea.vmem [#allocation0], 1880
    %87 = vst [vmem:[%s86] sm:%s3] %v85
    %s88 = scalar_lea.vmem %s0, 468
    %v89 = vld [vmem:[%s88] sm:%s3]
    %s90 = scalar_lea.vmem [#allocation0], 1872
    %91 = vst [vmem:[%s90] sm:%s3] %v89
    %s92 = scalar_lea.vmem %s0, 466
    %v93 = vld [vmem:[%s92] sm:%s3]
    %s94 = scalar_lea.vmem [#allocation0], 1864
    %95 = vst [vmem:[%s94] sm:%s3] %v93
    %s96 = scalar_lea.vmem %s0, 464
    %v97 = vld [vmem:[%s96] sm:%s3]
    %s98 = scalar_lea.vmem [#allocation0], 1856
    %99 = vst [vmem:[%s98] sm:%s3] %v97
    %s100 = scalar_lea.vmem %s0, 462
    %v101 = vld [vmem:[%s100] sm:%s3]
    %s102 = scalar_lea.vmem [#allocation0], 1848
    %103 = vst [vmem:[%s102] sm:%s3] %v101
    %s104 = scalar_lea.vmem %s0, 460
    %v105 = vld [vmem:[%s104] sm:%s3]
    %s106 = scalar_lea.vmem [#allocation0], 1840
    %107 = vst [vmem:[%s106] sm:%s3] %v105
    %s108 = scalar_lea.vmem %s0, 458
    %v109 = vld [vmem:[%s108] sm:%s3]
    %s110 = scalar_lea.vmem [#allocation0], 1832
    %111 = vst [vmem:[%s110] sm:%s3] %v109
    %s112 = scalar_lea.vmem %s0, 456
    %v113 = vld [vmem:[%s112] sm:%s3]
    %s114 = scalar_lea.vmem [#allocation0], 1824
    %115 = vst [vmem:[%s114] sm:%s3] %v113
    %s116 = scalar_lea.vmem %s0, 454
    %v117 = vld [vmem:[%s116] sm:%s3]
    %s118 = scalar_lea.vmem [#allocation0], 1816
    %119 = vst [vmem:[%s118] sm:%s3] %v117
    %s120 = scalar_lea.vmem %s0, 452
    %v121 = vld [vmem:[%s120] sm:%s3]
    %s122 = scalar_lea.vmem [#allocation0], 1808
    %123 = vst [vmem:[%s122] sm:%s3] %v121
    %s124 = scalar_lea.vmem %s0, 450
    %v125 = vld [vmem:[%s124] sm:%s3]
    %s126 = scalar_lea.vmem [#allocation0], 1800
    %127 = vst [vmem:[%s126] sm:%s3] %v125
    %s128 = scalar_lea.vmem %s0, 448
    %v129 = vld [vmem:[%s128] sm:%s3]
    %s130 = scalar_lea.vmem [#allocation0], 1792
    %131 = vst [vmem:[%s130] sm:%s3] %v129
    %s132 = scalar_lea.vmem %s0, 446
    %v133 = vld [vmem:[%s132] sm:%s3]
    %s134 = scalar_lea.vmem [#allocation0], 1784
    %135 = vst [vmem:[%s134] sm:%s3] %v133
    %s136 = scalar_lea.vmem %s0, 444
    %v137 = vld [vmem:[%s136] sm:%s3]
    %s138 = scalar_lea.vmem [#allocation0], 1776
    %139 = vst [vmem:[%s138] sm:%s3] %v137
    %s140 = scalar_lea.vmem %s0, 442
    %v141 = vld [vmem:[%s140] sm:%s3]
    %s142 = scalar_lea.vmem [#allocation0], 1768
    %143 = vst [vmem:[%s142] sm:%s3] %v141
    %s144 = scalar_lea.vmem %s0, 440
    %v145 = vld [vmem:[%s144] sm:%s3]
    %s146 = scalar_lea.vmem [#allocation0], 1760
    %147 = vst [vmem:[%s146] sm:%s3] %v145
    %s148 = scalar_lea.vmem %s0, 438
    %v149 = vld [vmem:[%s148] sm:%s3]
    %s150 = scalar_lea.vmem [#allocation0], 1752
    %151 = vst [vmem:[%s150] sm:%s3] %v149
    %s152 = scalar_lea.vmem %s0, 436
    %v153 = vld [vmem:[%s152] sm:%s3]
    %s154 = scalar_lea.vmem [#allocation0], 1744
    %155 = vst [vmem:[%s154] sm:%s3] %v153
    %s156 = scalar_lea.vmem %s0, 434
    %v157 = vld [vmem:[%s156] sm:%s3]
    %s158 = scalar_lea.vmem [#allocation0], 1736
    %159 = vst [vmem:[%s158] sm:%s3] %v157
    %s160 = scalar_lea.vmem %s0, 432
    %v161 = vld [vmem:[%s160] sm:%s3]
    %s162 = scalar_lea.vmem [#allocation0], 1728
    %163 = vst [vmem:[%s162] sm:%s3] %v161
    %s164 = scalar_lea.vmem %s0, 430
    %v165 = vld [vmem:[%s164] sm:%s3]
    %s166 = scalar_lea.vmem [#allocation0], 1720
    %167 = vst [vmem:[%s166] sm:%s3] %v165
    %s168 = scalar_lea.vmem %s0, 428
    %v169 = vld [vmem:[%s168] sm:%s3]
    %s170 = scalar_lea.vmem [#allocation0], 1712
    %171 = vst [vmem:[%s170] sm:%s3] %v169
    %s172 = scalar_lea.vmem %s0, 426
    %v173 = vld [vmem:[%s172] sm:%s3]
    %s174 = scalar_lea.vmem [#allocation0], 1704
    %175 = vst [vmem:[%s174] sm:%s3] %v173
    %s176 = scalar_lea.vmem %s0, 424
    %v177 = vld [vmem:[%s176] sm:%s3]
    %s178 = scalar_lea.vmem [#allocation0], 1696
    %179 = vst [vmem:[%s178] sm:%s3] %v177
    %s180 = scalar_lea.vmem %s0, 422
    %v181 = vld [vmem:[%s180] sm:%s3]
    %s182 = scalar_lea.vmem [#allocation0], 1688
    %183 = vst [vmem:[%s182] sm:%s3] %v181
    %s184 = scalar_lea.vmem %s0, 420
    %v185 = vld [vmem:[%s184] sm:%s3]
    %s186 = scalar_lea.vmem [#allocation0], 1680
    %187 = vst [vmem:[%s186] sm:%s3] %v185
    %s188 = scalar_lea.vmem %s0, 418
    %v189 = vld [vmem:[%s188] sm:%s3]
    %s190 = scalar_lea.vmem [#allocation0], 1672
    %191 = vst [vmem:[%s190] sm:%s3] %v189
    %s192 = scalar_lea.vmem %s0, 416
    %v193 = vld [vmem:[%s192] sm:%s3]
    %s194 = scalar_lea.vmem [#allocation0], 1664
    %195 = vst [vmem:[%s194] sm:%s3] %v193
    %s196 = scalar_lea.vmem %s0, 414
    %v197 = vld [vmem:[%s196] sm:%s3]
    %s198 = scalar_lea.vmem [#allocation0], 1656
    %199 = vst [vmem:[%s198] sm:%s3] %v197
    %s200 = scalar_lea.vmem %s0, 412
    %v201 = vld [vmem:[%s200] sm:%s3]
    %s202 = scalar_lea.vmem [#allocation0], 1648
    %203 = vst [vmem:[%s202] sm:%s3] %v201
    %s204 = scalar_lea.vmem %s0, 410
    %v205 = vld [vmem:[%s204] sm:%s3]
    %s206 = scalar_lea.vmem [#allocation0], 1640
    %207 = vst [vmem:[%s206] sm:%s3] %v205
    %s208 = scalar_lea.vmem %s0, 408
    %v209 = vld [vmem:[%s208] sm:%s3]
    %s210 = scalar_lea.vmem [#allocation0], 1632
    %211 = vst [vmem:[%s210] sm:%s3] %v209
    %s212 = scalar_lea.vmem %s0, 406
    %v213 = vld [vmem:[%s212] sm:%s3]
    %s214 = scalar_lea.vmem [#allocation0], 1624
    %215 = vst [vmem:[%s214] sm:%s3] %v213
    %s216 = scalar_lea.vmem %s0, 404
    %v217 = vld [vmem:[%s216] sm:%s3]
    %s218 = scalar_lea.vmem [#allocation0], 1616
    %219 = vst [vmem:[%s218] sm:%s3] %v217
    %s220 = scalar_lea.vmem %s0, 402
    %v221 = vld [vmem:[%s220] sm:%s3]
    %s222 = scalar_lea.vmem [#allocation0], 1608
    %223 = vst [vmem:[%s222] sm:%s3] %v221
    %s224 = scalar_lea.vmem %s0, 400
    %v225 = vld [vmem:[%s224] sm:%s3]
    %s226 = scalar_lea.vmem [#allocation0], 1600
    %227 = vst [vmem:[%s226] sm:%s3] %v225
    %s228 = scalar_lea.vmem %s0, 398
    %v229 = vld [vmem:[%s228] sm:%s3]
    %s230 = scalar_lea.vmem [#allocation0], 1592
    %231 = vst [vmem:[%s230] sm:%s3] %v229
    %s232 = scalar_lea.vmem %s0, 396
    %v233 = vld [vmem:[%s232] sm:%s3]
    %s234 = scalar_lea.vmem [#allocation0], 1584
    %235 = vst [vmem:[%s234] sm:%s3] %v233
    %s236 = scalar_lea.vmem %s0, 394
    %v237 = vld [vmem:[%s236] sm:%s3]
    %s238 = scalar_lea.vmem [#allocation0], 1576
    %239 = vst [vmem:[%s238] sm:%s3] %v237
    %s240 = scalar_lea.vmem %s0, 392
    %v241 = vld [vmem:[%s240] sm:%s3]
    %s242 = scalar_lea.vmem [#allocation0], 1568
    %243 = vst [vmem:[%s242] sm:%s3] %v241
    %s244 = scalar_lea.vmem %s0, 390
    %v245 = vld [vmem:[%s244] sm:%s3]
    %s246 = scalar_lea.vmem [#allocation0], 1560
    %247 = vst [vmem:[%s246] sm:%s3] %v245
    %s248 = scalar_lea.vmem %s0, 388
    %v249 = vld [vmem:[%s248] sm:%s3]
    %s250 = scalar_lea.vmem [#allocation0], 1552
    %251 = vst [vmem:[%s250] sm:%s3] %v249
    %s252 = scalar_lea.vmem %s0, 386
    %v253 = vld [vmem:[%s252] sm:%s3]
    %s254 = scalar_lea.vmem [#allocation0], 1544
    %255 = vst [vmem:[%s254] sm:%s3] %v253
    %s256 = scalar_lea.vmem %s0, 384
    %v257 = vld [vmem:[%s256] sm:%s3]
    %s258 = scalar_lea.vmem [#allocation0], 1536
    %259 = vst [vmem:[%s258] sm:%s3] %v257
    %s260 = scalar_lea.vmem %s0, 382
    %v261 = vld [vmem:[%s260] sm:%s3]
    %s262 = scalar_lea.vmem [#allocation0], 1528
    %263 = vst [vmem:[%s262] sm:%s3] %v261
    %s264 = scalar_lea.vmem %s0, 380
    %v265 = vld [vmem:[%s264] sm:%s3]
    %s266 = scalar_lea.vmem [#allocation0], 1520
    %267 = vst [vmem:[%s266] sm:%s3] %v265
    %s268 = scalar_lea.vmem %s0, 378
    %v269 = vld [vmem:[%s268] sm:%s3]
    %s270 = scalar_lea.vmem [#allocation0], 1512
    %271 = vst [vmem:[%s270] sm:%s3] %v269
    %s272 = scalar_lea.vmem %s0, 376
    %v273 = vld [vmem:[%s272] sm:%s3]
    %s274 = scalar_lea.vmem [#allocation0], 1504
    %275 = vst [vmem:[%s274] sm:%s3] %v273
    %s276 = scalar_lea.vmem %s0, 374
    %v277 = vld [vmem:[%s276] sm:%s3]
    %s278 = scalar_lea.vmem [#allocation0], 1496
    %279 = vst [vmem:[%s278] sm:%s3] %v277
    %s280 = scalar_lea.vmem %s0, 372
    %v281 = vld [vmem:[%s280] sm:%s3]
    %s282 = scalar_lea.vmem [#allocation0], 1488
    %283 = vst [vmem:[%s282] sm:%s3] %v281
    %s284 = scalar_lea.vmem %s0, 370
    %v285 = vld [vmem:[%s284] sm:%s3]
    %s286 = scalar_lea.vmem [#allocation0], 1480
    %287 = vst [vmem:[%s286] sm:%s3] %v285
    %s288 = scalar_lea.vmem %s0, 368
    %v289 = vld [vmem:[%s288] sm:%s3]
    %s290 = scalar_lea.vmem [#allocation0], 1472
    %291 = vst [vmem:[%s290] sm:%s3] %v289
    %s292 = scalar_lea.vmem %s0, 366
    %v293 = vld [vmem:[%s292] sm:%s3]
    %s294 = scalar_lea.vmem [#allocation0], 1464
    %295 = vst [vmem:[%s294] sm:%s3] %v293
    %s296 = scalar_lea.vmem %s0, 364
    %v297 = vld [vmem:[%s296] sm:%s3]
    %s298 = scalar_lea.vmem [#allocation0], 1456
    %299 = vst [vmem:[%s298] sm:%s3] %v297
    %s300 = scalar_lea.vmem %s0, 362
    %v301 = vld [vmem:[%s300] sm:%s3]
    %s302 = scalar_lea.vmem [#allocation0], 1448
    %303 = vst [vmem:[%s302] sm:%s3] %v301
    %s304 = scalar_lea.vmem %s0, 360
    %v305 = vld [vmem:[%s304] sm:%s3]
    %s306 = scalar_lea.vmem [#allocation0], 1440
    %307 = vst [vmem:[%s306] sm:%s3] %v305
    %s308 = scalar_lea.vmem %s0, 358
    %v309 = vld [vmem:[%s308] sm:%s3]
    %s310 = scalar_lea.vmem [#allocation0], 1432
    %311 = vst [vmem:[%s310] sm:%s3] %v309
    %s312 = scalar_lea.vmem %s0, 356
    %v313 = vld [vmem:[%s312] sm:%s3]
    %s314 = scalar_lea.vmem [#allocation0], 1424
    %315 = vst [vmem:[%s314] sm:%s3] %v313
    %s316 = scalar_lea.vmem %s0, 354
    %v317 = vld [vmem:[%s316] sm:%s3]
    %s318 = scalar_lea.vmem [#allocation0], 1416
    %319 = vst [vmem:[%s318] sm:%s3] %v317
    %s320 = scalar_lea.vmem %s0, 352
    %v321 = vld [vmem:[%s320] sm:%s3]
    %s322 = scalar_lea.vmem [#allocation0], 1408
    %323 = vst [vmem:[%s322] sm:%s3] %v321
    %s324 = scalar_lea.vmem %s0, 350
    %v325 = vld [vmem:[%s324] sm:%s3]
    %s326 = scalar_lea.vmem [#allocation0], 1400
    %327 = vst [vmem:[%s326] sm:%s3] %v325
    %s328 = scalar_lea.vmem %s0, 348
    %v329 = vld [vmem:[%s328] sm:%s3]
    %s330 = scalar_lea.vmem [#allocation0], 1392
    %331 = vst [vmem:[%s330] sm:%s3] %v329
    %s332 = scalar_lea.vmem %s0, 346
    %v333 = vld [vmem:[%s332] sm:%s3]
    %s334 = scalar_lea.vmem [#allocation0], 1384
    %335 = vst [vmem:[%s334] sm:%s3] %v333
    %s336 = scalar_lea.vmem %s0, 344
    %v337 = vld [vmem:[%s336] sm:%s3]
    %s338 = scalar_lea.vmem [#allocation0], 1376
    %339 = vst [vmem:[%s338] sm:%s3] %v337
    %s340 = scalar_lea.vmem %s0, 342
    %v341 = vld [vmem:[%s340] sm:%s3]
    %s342 = scalar_lea.vmem [#allocation0], 1368
    %343 = vst [vmem:[%s342] sm:%s3] %v341
    %s344 = scalar_lea.vmem %s0, 340
    %v345 = vld [vmem:[%s344] sm:%s3]
    %s346 = scalar_lea.vmem [#allocation0], 1360
    %347 = vst [vmem:[%s346] sm:%s3] %v345
    %s348 = scalar_lea.vmem %s0, 338
    %v349 = vld [vmem:[%s348] sm:%s3]
    %s350 = scalar_lea.vmem [#allocation0], 1352
    %351 = vst [vmem:[%s350] sm:%s3] %v349
    %s352 = scalar_lea.vmem %s0, 336
    %v353 = vld [vmem:[%s352] sm:%s3]
    %s354 = scalar_lea.vmem [#allocation0], 1344
    %355 = vst [vmem:[%s354] sm:%s3] %v353
    %s356 = scalar_lea.vmem %s0, 334
    %v357 = vld [vmem:[%s356] sm:%s3]
    %s358 = scalar_lea.vmem [#allocation0], 1336
    %359 = vst [vmem:[%s358] sm:%s3] %v357
    %s360 = scalar_lea.vmem %s0, 332
    %v361 = vld [vmem:[%s360] sm:%s3]
    %s362 = scalar_lea.vmem [#allocation0], 1328
    %363 = vst [vmem:[%s362] sm:%s3] %v361
    %s364 = scalar_lea.vmem %s0, 330
    %v365 = vld [vmem:[%s364] sm:%s3]
    %s366 = scalar_lea.vmem [#allocation0], 1320
    %367 = vst [vmem:[%s366] sm:%s3] %v365
    %s368 = scalar_lea.vmem %s0, 328
    %v369 = vld [vmem:[%s368] sm:%s3]
    %s370 = scalar_lea.vmem [#allocation0], 1312
    %371 = vst [vmem:[%s370] sm:%s3] %v369
    %s372 = scalar_lea.vmem %s0, 326
    %v373 = vld [vmem:[%s372] sm:%s3]
    %s374 = scalar_lea.vmem [#allocation0], 1304
    %375 = vst [vmem:[%s374] sm:%s3] %v373
    %s376 = scalar_lea.vmem %s0, 324
    %v377 = vld [vmem:[%s376] sm:%s3]
    %s378 = scalar_lea.vmem [#allocation0], 1296
    %379 = vst [vmem:[%s378] sm:%s3] %v377
    %s380 = scalar_lea.vmem %s0, 322
    %v381 = vld [vmem:[%s380] sm:%s3]
    %s382 = scalar_lea.vmem [#allocation0], 1288
    %383 = vst [vmem:[%s382] sm:%s3] %v381
    %s384 = scalar_lea.vmem %s0, 320
    %v385 = vld [vmem:[%s384] sm:%s3]
    %s386 = scalar_lea.vmem [#allocation0], 1280
    %387 = vst [vmem:[%s386] sm:%s3] %v385
    %s388 = scalar_lea.vmem %s0, 318
    %v389 = vld [vmem:[%s388] sm:%s3]
    %s390 = scalar_lea.vmem [#allocation0], 1272
    %391 = vst [vmem:[%s390] sm:%s3] %v389
    %s392 = scalar_lea.vmem %s0, 316
    %v393 = vld [vmem:[%s392] sm:%s3]
    %s394 = scalar_lea.vmem [#allocation0], 1264
    %395 = vst [vmem:[%s394] sm:%s3] %v393
    %s396 = scalar_lea.vmem %s0, 314
    %v397 = vld [vmem:[%s396] sm:%s3]
    %s398 = scalar_lea.vmem [#allocation0], 1256
    %399 = vst [vmem:[%s398] sm:%s3] %v397
    %s400 = scalar_lea.vmem %s0, 312
    %v401 = vld [vmem:[%s400] sm:%s3]
    %s402 = scalar_lea.vmem [#allocation0], 1248
    %403 = vst [vmem:[%s402] sm:%s3] %v401
    %s404 = scalar_lea.vmem %s0, 310
    %v405 = vld [vmem:[%s404] sm:%s3]
    %s406 = scalar_lea.vmem [#allocation0], 1240
    %407 = vst [vmem:[%s406] sm:%s3] %v405
    %s408 = scalar_lea.vmem %s0, 308
    %v409 = vld [vmem:[%s408] sm:%s3]
    %s410 = scalar_lea.vmem [#allocation0], 1232
    %411 = vst [vmem:[%s410] sm:%s3] %v409
    %s412 = scalar_lea.vmem %s0, 306
    %v413 = vld [vmem:[%s412] sm:%s3]
    %s414 = scalar_lea.vmem [#allocation0], 1224
    %415 = vst [vmem:[%s414] sm:%s3] %v413
    %s416 = scalar_lea.vmem %s0, 304
    %v417 = vld [vmem:[%s416] sm:%s3]
    %s418 = scalar_lea.vmem [#allocation0], 1216
    %419 = vst [vmem:[%s418] sm:%s3] %v417
    %s420 = scalar_lea.vmem %s0, 302
    %v421 = vld [vmem:[%s420] sm:%s3]
    %s422 = scalar_lea.vmem [#allocation0], 1208
    %423 = vst [vmem:[%s422] sm:%s3] %v421
    %s424 = scalar_lea.vmem %s0, 300
    %v425 = vld [vmem:[%s424] sm:%s3]
    %s426 = scalar_lea.vmem [#allocation0], 1200
    %427 = vst [vmem:[%s426] sm:%s3] %v425
    %s428 = scalar_lea.vmem %s0, 298
    %v429 = vld [vmem:[%s428] sm:%s3]
    %s430 = scalar_lea.vmem [#allocation0], 1192
    %431 = vst [vmem:[%s430] sm:%s3] %v429
    %s432 = scalar_lea.vmem %s0, 296
    %v433 = vld [vmem:[%s432] sm:%s3]
    %s434 = scalar_lea.vmem [#allocation0], 1184
    %435 = vst [vmem:[%s434] sm:%s3] %v433
    %s436 = scalar_lea.vmem %s0, 294
    %v437 = vld [vmem:[%s436] sm:%s3]
    %s438 = scalar_lea.vmem [#allocation0], 1176
    %439 = vst [vmem:[%s438] sm:%s3] %v437
    %s440 = scalar_lea.vmem %s0, 292
    %v441 = vld [vmem:[%s440] sm:%s3]
    %s442 = scalar_lea.vmem [#allocation0], 1168
    %443 = vst [vmem:[%s442] sm:%s3] %v441
    %s444 = scalar_lea.vmem %s0, 290
    %v445 = vld [vmem:[%s444] sm:%s3]
    %s446 = scalar_lea.vmem [#allocation0], 1160
    %447 = vst [vmem:[%s446] sm:%s3] %v445
    %s448 = scalar_lea.vmem %s0, 288
    %v449 = vld [vmem:[%s448] sm:%s3]
    %s450 = scalar_lea.vmem [#allocation0], 1152
    %451 = vst [vmem:[%s450] sm:%s3] %v449
    %s452 = scalar_lea.vmem %s0, 286
    %v453 = vld [vmem:[%s452] sm:%s3]
    %s454 = scalar_lea.vmem [#allocation0], 1144
    %455 = vst [vmem:[%s454] sm:%s3] %v453
    %s456 = scalar_lea.vmem %s0, 284
    %v457 = vld [vmem:[%s456] sm:%s3]
    %s458 = scalar_lea.vmem [#allocation0], 1136
    %459 = vst [vmem:[%s458] sm:%s3] %v457
    %s460 = scalar_lea.vmem %s0, 282
    %v461 = vld [vmem:[%s460] sm:%s3]
    %s462 = scalar_lea.vmem [#allocation0], 1128
    %463 = vst [vmem:[%s462] sm:%s3] %v461
    %s464 = scalar_lea.vmem %s0, 280
    %v465 = vld [vmem:[%s464] sm:%s3]
    %s466 = scalar_lea.vmem [#allocation0], 1120
    %467 = vst [vmem:[%s466] sm:%s3] %v465
    %s468 = scalar_lea.vmem %s0, 278
    %v469 = vld [vmem:[%s468] sm:%s3]
    %s470 = scalar_lea.vmem [#allocation0], 1112
    %471 = vst [vmem:[%s470] sm:%s3] %v469
    %s472 = scalar_lea.vmem %s0, 276
    %v473 = vld [vmem:[%s472] sm:%s3]
    %s474 = scalar_lea.vmem [#allocation0], 1104
    %475 = vst [vmem:[%s474] sm:%s3] %v473
    %s476 = scalar_lea.vmem %s0, 274
    %v477 = vld [vmem:[%s476] sm:%s3]
    %s478 = scalar_lea.vmem [#allocation0], 1096
    %479 = vst [vmem:[%s478] sm:%s3] %v477
    %s480 = scalar_lea.vmem %s0, 272
    %v481 = vld [vmem:[%s480] sm:%s3]
    %s482 = scalar_lea.vmem [#allocation0], 1088
    %483 = vst [vmem:[%s482] sm:%s3] %v481
    %s484 = scalar_lea.vmem %s0, 270
    %v485 = vld [vmem:[%s484] sm:%s3]
    %s486 = scalar_lea.vmem [#allocation0], 1080
    %487 = vst [vmem:[%s486] sm:%s3] %v485
    %s488 = scalar_lea.vmem %s0, 268
    %v489 = vld [vmem:[%s488] sm:%s3]
    %s490 = scalar_lea.vmem [#allocation0], 1072
    %491 = vst [vmem:[%s490] sm:%s3] %v489
    %s492 = scalar_lea.vmem %s0, 266
    %v493 = vld [vmem:[%s492] sm:%s3]
    %s494 = scalar_lea.vmem [#allocation0], 1064
    %495 = vst [vmem:[%s494] sm:%s3] %v493
    %s496 = scalar_lea.vmem %s0, 264
    %v497 = vld [vmem:[%s496] sm:%s3]
    %s498 = scalar_lea.vmem [#allocation0], 1056
    %499 = vst [vmem:[%s498] sm:%s3] %v497
    %s500 = scalar_lea.vmem %s0, 262
    %v501 = vld [vmem:[%s500] sm:%s3]
    %s502 = scalar_lea.vmem [#allocation0], 1048
    %503 = vst [vmem:[%s502] sm:%s3] %v501
    %s504 = scalar_lea.vmem %s0, 260
    %v505 = vld [vmem:[%s504] sm:%s3]
    %s506 = scalar_lea.vmem [#allocation0], 1040
    %507 = vst [vmem:[%s506] sm:%s3] %v505
    %s508 = scalar_lea.vmem %s0, 258
    %v509 = vld [vmem:[%s508] sm:%s3]
    %s510 = scalar_lea.vmem [#allocation0], 1032
    %511 = vst [vmem:[%s510] sm:%s3] %v509
    %s512 = scalar_lea.vmem %s0, 256
    %v513 = vld [vmem:[%s512] sm:%s3]
    %s514 = scalar_lea.vmem [#allocation0], 1024
    %515 = vst [vmem:[%s514] sm:%s3] %v513
    %s516 = scalar_lea.vmem %s0, 254
    %v517 = vld [vmem:[%s516] sm:%s3]
    %s518 = scalar_lea.vmem [#allocation0], 1016
    %519 = vst [vmem:[%s518] sm:%s3] %v517
    %s520 = scalar_lea.vmem %s0, 252
    %v521 = vld [vmem:[%s520] sm:%s3]
    %s522 = scalar_lea.vmem [#allocation0], 1008
    %523 = vst [vmem:[%s522] sm:%s3] %v521
    %s524 = scalar_lea.vmem %s0, 250
    %v525 = vld [vmem:[%s524] sm:%s3]
    %s526 = scalar_lea.vmem [#allocation0], 1000
    %527 = vst [vmem:[%s526] sm:%s3] %v525
    %s528 = scalar_lea.vmem %s0, 248
    %v529 = vld [vmem:[%s528] sm:%s3]
    %s530 = scalar_lea.vmem [#allocation0], 992
    %531 = vst [vmem:[%s530] sm:%s3] %v529
    %s532 = scalar_lea.vmem %s0, 246
    %v533 = vld [vmem:[%s532] sm:%s3]
    %s534 = scalar_lea.vmem [#allocation0], 984
    %535 = vst [vmem:[%s534] sm:%s3] %v533
    %s536 = scalar_lea.vmem %s0, 244
    %v537 = vld [vmem:[%s536] sm:%s3]
    %s538 = scalar_lea.vmem [#allocation0], 976
    %539 = vst [vmem:[%s538] sm:%s3] %v537
    %s540 = scalar_lea.vmem %s0, 242
    %v541 = vld [vmem:[%s540] sm:%s3]
    %s542 = scalar_lea.vmem [#allocation0], 968
    %543 = vst [vmem:[%s542] sm:%s3] %v541
    %s544 = scalar_lea.vmem %s0, 240
    %v545 = vld [vmem:[%s544] sm:%s3]
    %s546 = scalar_lea.vmem [#allocation0], 960
    %547 = vst [vmem:[%s546] sm:%s3] %v545
    %s548 = scalar_lea.vmem %s0, 238
    %v549 = vld [vmem:[%s548] sm:%s3]
    %s550 = scalar_lea.vmem [#allocation0], 952
    %551 = vst [vmem:[%s550] sm:%s3] %v549
    %s552 = scalar_lea.vmem %s0, 236
    %v553 = vld [vmem:[%s552] sm:%s3]
    %s554 = scalar_lea.vmem [#allocation0], 944
    %555 = vst [vmem:[%s554] sm:%s3] %v553
    %s556 = scalar_lea.vmem %s0, 234
    %v557 = vld [vmem:[%s556] sm:%s3]
    %s558 = scalar_lea.vmem [#allocation0], 936
    %559 = vst [vmem:[%s558] sm:%s3] %v557
    %s560 = scalar_lea.vmem %s0, 232
    %v561 = vld [vmem:[%s560] sm:%s3]
    %s562 = scalar_lea.vmem [#allocation0], 928
    %563 = vst [vmem:[%s562] sm:%s3] %v561
    %s564 = scalar_lea.vmem %s0, 230
    %v565 = vld [vmem:[%s564] sm:%s3]
    %s566 = scalar_lea.vmem [#allocation0], 920
    %567 = vst [vmem:[%s566] sm:%s3] %v565
    %s568 = scalar_lea.vmem %s0, 228
    %v569 = vld [vmem:[%s568] sm:%s3]
    %s570 = scalar_lea.vmem [#allocation0], 912
    %571 = vst [vmem:[%s570] sm:%s3] %v569
    %s572 = scalar_lea.vmem %s0, 226
    %v573 = vld [vmem:[%s572] sm:%s3]
    %s574 = scalar_lea.vmem [#allocation0], 904
    %575 = vst [vmem:[%s574] sm:%s3] %v573
    %s576 = scalar_lea.vmem %s0, 224
    %v577 = vld [vmem:[%s576] sm:%s3]
    %s578 = scalar_lea.vmem [#allocation0], 896
    %579 = vst [vmem:[%s578] sm:%s3] %v577
    %s580 = scalar_lea.vmem %s0, 222
    %v581 = vld [vmem:[%s580] sm:%s3]
    %s582 = scalar_lea.vmem [#allocation0], 888
    %583 = vst [vmem:[%s582] sm:%s3] %v581
    %s584 = scalar_lea.vmem %s0, 220
    %v585 = vld [vmem:[%s584] sm:%s3]
    %s586 = scalar_lea.vmem [#allocation0], 880
    %587 = vst [vmem:[%s586] sm:%s3] %v585
    %s588 = scalar_lea.vmem %s0, 218
    %v589 = vld [vmem:[%s588] sm:%s3]
    %s590 = scalar_lea.vmem [#allocation0], 872
    %591 = vst [vmem:[%s590] sm:%s3] %v589
    %s592 = scalar_lea.vmem %s0, 216
    %v593 = vld [vmem:[%s592] sm:%s3]
    %s594 = scalar_lea.vmem [#allocation0], 864
    %595 = vst [vmem:[%s594] sm:%s3] %v593
    %s596 = scalar_lea.vmem %s0, 214
    %v597 = vld [vmem:[%s596] sm:%s3]
    %s598 = scalar_lea.vmem [#allocation0], 856
    %599 = vst [vmem:[%s598] sm:%s3] %v597
    %s600 = scalar_lea.vmem %s0, 212
    %v601 = vld [vmem:[%s600] sm:%s3]
    %s602 = scalar_lea.vmem [#allocation0], 848
    %603 = vst [vmem:[%s602] sm:%s3] %v601
    %s604 = scalar_lea.vmem %s0, 210
    %v605 = vld [vmem:[%s604] sm:%s3]
    %s606 = scalar_lea.vmem [#allocation0], 840
    %607 = vst [vmem:[%s606] sm:%s3] %v605
    %s608 = scalar_lea.vmem %s0, 208
    %v609 = vld [vmem:[%s608] sm:%s3]
    %s610 = scalar_lea.vmem [#allocation0], 832
    %611 = vst [vmem:[%s610] sm:%s3] %v609
    %s612 = scalar_lea.vmem %s0, 206
    %v613 = vld [vmem:[%s612] sm:%s3]
    %s614 = scalar_lea.vmem [#allocation0], 824
    %615 = vst [vmem:[%s614] sm:%s3] %v613
    %s616 = scalar_lea.vmem %s0, 204
    %v617 = vld [vmem:[%s616] sm:%s3]
    %s618 = scalar_lea.vmem [#allocation0], 816
    %619 = vst [vmem:[%s618] sm:%s3] %v617
    %s620 = scalar_lea.vmem %s0, 202
    %v621 = vld [vmem:[%s620] sm:%s3]
    %s622 = scalar_lea.vmem [#allocation0], 808
    %623 = vst [vmem:[%s622] sm:%s3] %v621
    %s624 = scalar_lea.vmem %s0, 200
    %v625 = vld [vmem:[%s624] sm:%s3]
    %s626 = scalar_lea.vmem [#allocation0], 800
    %627 = vst [vmem:[%s626] sm:%s3] %v625
    %s628 = scalar_lea.vmem %s0, 198
    %v629 = vld [vmem:[%s628] sm:%s3]
    %s630 = scalar_lea.vmem [#allocation0], 792
    %631 = vst [vmem:[%s630] sm:%s3] %v629
    %s632 = scalar_lea.vmem %s0, 196
    %v633 = vld [vmem:[%s632] sm:%s3]
    %s634 = scalar_lea.vmem [#allocation0], 784
    %635 = vst [vmem:[%s634] sm:%s3] %v633
    %s636 = scalar_lea.vmem %s0, 194
    %v637 = vld [vmem:[%s636] sm:%s3]
    %s638 = scalar_lea.vmem [#allocation0], 776
    %639 = vst [vmem:[%s638] sm:%s3] %v637
    %s640 = scalar_lea.vmem %s0, 192
    %v641 = vld [vmem:[%s640] sm:%s3]
    %s642 = scalar_lea.vmem [#allocation0], 768
    %643 = vst [vmem:[%s642] sm:%s3] %v641
    %s644 = scalar_lea.vmem %s0, 190
    %v645 = vld [vmem:[%s644] sm:%s3]
    %s646 = scalar_lea.vmem [#allocation0], 760
    %647 = vst [vmem:[%s646] sm:%s3] %v645
    %s648 = scalar_lea.vmem %s0, 188
    %v649 = vld [vmem:[%s648] sm:%s3]
    %s650 = scalar_lea.vmem [#allocation0], 752
    %651 = vst [vmem:[%s650] sm:%s3] %v649
    %s652 = scalar_lea.vmem %s0, 186
    %v653 = vld [vmem:[%s652] sm:%s3]
    %s654 = scalar_lea.vmem [#allocation0], 744
    %655 = vst [vmem:[%s654] sm:%s3] %v653
    %s656 = scalar_lea.vmem %s0, 184
    %v657 = vld [vmem:[%s656] sm:%s3]
    %s658 = scalar_lea.vmem [#allocation0], 736
    %659 = vst [vmem:[%s658] sm:%s3] %v657
    %s660 = scalar_lea.vmem %s0, 182
    %v661 = vld [vmem:[%s660] sm:%s3]
    %s662 = scalar_lea.vmem [#allocation0], 728
    %663 = vst [vmem:[%s662] sm:%s3] %v661
    %s664 = scalar_lea.vmem %s0, 180
    %v665 = vld [vmem:[%s664] sm:%s3]
    %s666 = scalar_lea.vmem [#allocation0], 720
    %667 = vst [vmem:[%s666] sm:%s3] %v665
    %s668 = scalar_lea.vmem %s0, 178
    %v669 = vld [vmem:[%s668] sm:%s3]
    %s670 = scalar_lea.vmem [#allocation0], 712
    %671 = vst [vmem:[%s670] sm:%s3] %v669
    %s672 = scalar_lea.vmem %s0, 176
    %v673 = vld [vmem:[%s672] sm:%s3]
    %s674 = scalar_lea.vmem [#allocation0], 704
    %675 = vst [vmem:[%s674] sm:%s3] %v673
    %s676 = scalar_lea.vmem %s0, 174
    %v677 = vld [vmem:[%s676] sm:%s3]
    %s678 = scalar_lea.vmem [#allocation0], 696
    %679 = vst [vmem:[%s678] sm:%s3] %v677
    %s680 = scalar_lea.vmem %s0, 172
    %v681 = vld [vmem:[%s680] sm:%s3]
    %s682 = scalar_lea.vmem [#allocation0], 688
    %683 = vst [vmem:[%s682] sm:%s3] %v681
    %s684 = scalar_lea.vmem %s0, 170
    %v685 = vld [vmem:[%s684] sm:%s3]
    %s686 = scalar_lea.vmem [#allocation0], 680
    %687 = vst [vmem:[%s686] sm:%s3] %v685
    %s688 = scalar_lea.vmem %s0, 168
    %v689 = vld [vmem:[%s688] sm:%s3]
    %s690 = scalar_lea.vmem [#allocation0], 672
    %691 = vst [vmem:[%s690] sm:%s3] %v689
    %s692 = scalar_lea.vmem %s0, 166
    %v693 = vld [vmem:[%s692] sm:%s3]
    %s694 = scalar_lea.vmem [#allocation0], 664
    %695 = vst [vmem:[%s694] sm:%s3] %v693
    %s696 = scalar_lea.vmem %s0, 164
    %v697 = vld [vmem:[%s696] sm:%s3]
    %s698 = scalar_lea.vmem [#allocation0], 656
    %699 = vst [vmem:[%s698] sm:%s3] %v697
    %s700 = scalar_lea.vmem %s0, 162
    %v701 = vld [vmem:[%s700] sm:%s3]
    %s702 = scalar_lea.vmem [#allocation0], 648
    %703 = vst [vmem:[%s702] sm:%s3] %v701
    %s704 = scalar_lea.vmem %s0, 160
    %v705 = vld [vmem:[%s704] sm:%s3]
    %s706 = scalar_lea.vmem [#allocation0], 640
    %707 = vst [vmem:[%s706] sm:%s3] %v705
    %s708 = scalar_lea.vmem %s0, 158
    %v709 = vld [vmem:[%s708] sm:%s3]
    %s710 = scalar_lea.vmem [#allocation0], 632
    %711 = vst [vmem:[%s710] sm:%s3] %v709
    %s712 = scalar_lea.vmem %s0, 156
    %v713 = vld [vmem:[%s712] sm:%s3]
    %s714 = scalar_lea.vmem [#allocation0], 624
    %715 = vst [vmem:[%s714] sm:%s3] %v713
    %s716 = scalar_lea.vmem %s0, 154
    %v717 = vld [vmem:[%s716] sm:%s3]
    %s718 = scalar_lea.vmem [#allocation0], 616
    %719 = vst [vmem:[%s718] sm:%s3] %v717
    %s720 = scalar_lea.vmem %s0, 152
    %v721 = vld [vmem:[%s720] sm:%s3]
    %s722 = scalar_lea.vmem [#allocation0], 608
    %723 = vst [vmem:[%s722] sm:%s3] %v721
    %s724 = scalar_lea.vmem %s0, 150
    %v725 = vld [vmem:[%s724] sm:%s3]
    %s726 = scalar_lea.vmem [#allocation0], 600
    %727 = vst [vmem:[%s726] sm:%s3] %v725
    %s728 = scalar_lea.vmem %s0, 148
    %v729 = vld [vmem:[%s728] sm:%s3]
    %s730 = scalar_lea.vmem [#allocation0], 592
    %731 = vst [vmem:[%s730] sm:%s3] %v729
    %s732 = scalar_lea.vmem %s0, 146
    %v733 = vld [vmem:[%s732] sm:%s3]
    %s734 = scalar_lea.vmem [#allocation0], 584
    %735 = vst [vmem:[%s734] sm:%s3] %v733
    %s736 = scalar_lea.vmem %s0, 144
    %v737 = vld [vmem:[%s736] sm:%s3]
    %s738 = scalar_lea.vmem [#allocation0], 576
    %739 = vst [vmem:[%s738] sm:%s3] %v737
    %s740 = scalar_lea.vmem %s0, 142
    %v741 = vld [vmem:[%s740] sm:%s3]
    %s742 = scalar_lea.vmem [#allocation0], 568
    %743 = vst [vmem:[%s742] sm:%s3] %v741
    %s744 = scalar_lea.vmem %s0, 140
    %v745 = vld [vmem:[%s744] sm:%s3]
    %s746 = scalar_lea.vmem [#allocation0], 560
    %747 = vst [vmem:[%s746] sm:%s3] %v745
    %s748 = scalar_lea.vmem %s0, 138
    %v749 = vld [vmem:[%s748] sm:%s3]
    %s750 = scalar_lea.vmem [#allocation0], 552
    %751 = vst [vmem:[%s750] sm:%s3] %v749
    %s752 = scalar_lea.vmem %s0, 136
    %v753 = vld [vmem:[%s752] sm:%s3]
    %s754 = scalar_lea.vmem [#allocation0], 544
    %755 = vst [vmem:[%s754] sm:%s3] %v753
    %s756 = scalar_lea.vmem %s0, 134
    %v757 = vld [vmem:[%s756] sm:%s3]
    %s758 = scalar_lea.vmem [#allocation0], 536
    %759 = vst [vmem:[%s758] sm:%s3] %v757
    %s760 = scalar_lea.vmem %s0, 132
    %v761 = vld [vmem:[%s760] sm:%s3]
    %s762 = scalar_lea.vmem [#allocation0], 528
    %763 = vst [vmem:[%s762] sm:%s3] %v761
    %s764 = scalar_lea.vmem %s0, 130
    %v765 = vld [vmem:[%s764] sm:%s3]
    %s766 = scalar_lea.vmem [#allocation0], 520
    %767 = vst [vmem:[%s766] sm:%s3] %v765
    %s768 = scalar_lea.vmem %s0, 128
    %v769 = vld [vmem:[%s768] sm:%s3]
    %s770 = scalar_lea.vmem [#allocation0], 512
    %771 = vst [vmem:[%s770] sm:%s3] %v769
    %s772 = scalar_lea.vmem %s0, 126
    %v773 = vld [vmem:[%s772] sm:%s3]
    %s774 = scalar_lea.vmem [#allocation0], 504
    %775 = vst [vmem:[%s774] sm:%s3] %v773
    %s776 = scalar_lea.vmem %s0, 124
    %v777 = vld [vmem:[%s776] sm:%s3]
    %s778 = scalar_lea.vmem [#allocation0], 496
    %779 = vst [vmem:[%s778] sm:%s3] %v777
    %s780 = scalar_lea.vmem %s0, 122
    %v781 = vld [vmem:[%s780] sm:%s3]
    %s782 = scalar_lea.vmem [#allocation0], 488
    %783 = vst [vmem:[%s782] sm:%s3] %v781
    %s784 = scalar_lea.vmem %s0, 120
    %v785 = vld [vmem:[%s784] sm:%s3]
    %s786 = scalar_lea.vmem [#allocation0], 480
    %787 = vst [vmem:[%s786] sm:%s3] %v785
    %s788 = scalar_lea.vmem %s0, 118
    %v789 = vld [vmem:[%s788] sm:%s3]
    %s790 = scalar_lea.vmem [#allocation0], 472
    %791 = vst [vmem:[%s790] sm:%s3] %v789
    %s792 = scalar_lea.vmem %s0, 116
    %v793 = vld [vmem:[%s792] sm:%s3]
    %s794 = scalar_lea.vmem [#allocation0], 464
    %795 = vst [vmem:[%s794] sm:%s3] %v793
    %s796 = scalar_lea.vmem %s0, 114
    %v797 = vld [vmem:[%s796] sm:%s3]
    %s798 = scalar_lea.vmem [#allocation0], 456
    %799 = vst [vmem:[%s798] sm:%s3] %v797
    %s800 = scalar_lea.vmem %s0, 112
    %v801 = vld [vmem:[%s800] sm:%s3]
    %s802 = scalar_lea.vmem [#allocation0], 448
    %803 = vst [vmem:[%s802] sm:%s3] %v801
    %s804 = scalar_lea.vmem %s0, 110
    %v805 = vld [vmem:[%s804] sm:%s3]
    %s806 = scalar_lea.vmem [#allocation0], 440
    %807 = vst [vmem:[%s806] sm:%s3] %v805
    %s808 = scalar_lea.vmem %s0, 108
    %v809 = vld [vmem:[%s808] sm:%s3]
    %s810 = scalar_lea.vmem [#allocation0], 432
    %811 = vst [vmem:[%s810] sm:%s3] %v809
    %s812 = scalar_lea.vmem %s0, 106
    %v813 = vld [vmem:[%s812] sm:%s3]
    %s814 = scalar_lea.vmem [#allocation0], 424
    %815 = vst [vmem:[%s814] sm:%s3] %v813
    %s816 = scalar_lea.vmem %s0, 104
    %v817 = vld [vmem:[%s816] sm:%s3]
    %s818 = scalar_lea.vmem [#allocation0], 416
    %819 = vst [vmem:[%s818] sm:%s3] %v817
    %s820 = scalar_lea.vmem %s0, 102
    %v821 = vld [vmem:[%s820] sm:%s3]
    %s822 = scalar_lea.vmem [#allocation0], 408
    %823 = vst [vmem:[%s822] sm:%s3] %v821
    %s824 = scalar_lea.vmem %s0, 100
    %v825 = vld [vmem:[%s824] sm:%s3]
    %s826 = scalar_lea.vmem [#allocation0], 400
    %827 = vst [vmem:[%s826] sm:%s3] %v825
    %s828 = scalar_lea.vmem %s0, 98
    %v829 = vld [vmem:[%s828] sm:%s3]
    %s830 = scalar_lea.vmem [#allocation0], 392
    %831 = vst [vmem:[%s830] sm:%s3] %v829
    %s832 = scalar_lea.vmem %s0, 96
    %v833 = vld [vmem:[%s832] sm:%s3]
    %s834 = scalar_lea.vmem [#allocation0], 384
    %835 = vst [vmem:[%s834] sm:%s3] %v833
    %s836 = scalar_lea.vmem %s0, 94
    %v837 = vld [vmem:[%s836] sm:%s3]
    %s838 = scalar_lea.vmem [#allocation0], 376
    %839 = vst [vmem:[%s838] sm:%s3] %v837
    %s840 = scalar_lea.vmem %s0, 92
    %v841 = vld [vmem:[%s840] sm:%s3]
    %s842 = scalar_lea.vmem [#allocation0], 368
    %843 = vst [vmem:[%s842] sm:%s3] %v841
    %s844 = scalar_lea.vmem %s0, 90
    %v845 = vld [vmem:[%s844] sm:%s3]
    %s846 = scalar_lea.vmem [#allocation0], 360
    %847 = vst [vmem:[%s846] sm:%s3] %v845
    %s848 = scalar_lea.vmem %s0, 88
    %v849 = vld [vmem:[%s848] sm:%s3]
    %s850 = scalar_lea.vmem [#allocation0], 352
    %851 = vst [vmem:[%s850] sm:%s3] %v849
    %s852 = scalar_lea.vmem %s0, 86
    %v853 = vld [vmem:[%s852] sm:%s3]
    %s854 = scalar_lea.vmem [#allocation0], 344
    %855 = vst [vmem:[%s854] sm:%s3] %v853
    %s856 = scalar_lea.vmem %s0, 84
    %v857 = vld [vmem:[%s856] sm:%s3]
    %s858 = scalar_lea.vmem [#allocation0], 336
    %859 = vst [vmem:[%s858] sm:%s3] %v857
    %s860 = scalar_lea.vmem %s0, 82
    %v861 = vld [vmem:[%s860] sm:%s3]
    %s862 = scalar_lea.vmem [#allocation0], 328
    %863 = vst [vmem:[%s862] sm:%s3] %v861
    %s864 = scalar_lea.vmem %s0, 80
    %v865 = vld [vmem:[%s864] sm:%s3]
    %s866 = scalar_lea.vmem [#allocation0], 320
    %867 = vst [vmem:[%s866] sm:%s3] %v865
    %s868 = scalar_lea.vmem %s0, 78
    %v869 = vld [vmem:[%s868] sm:%s3]
    %s870 = scalar_lea.vmem [#allocation0], 312
    %871 = vst [vmem:[%s870] sm:%s3] %v869
    %s872 = scalar_lea.vmem %s0, 76
    %v873 = vld [vmem:[%s872] sm:%s3]
    %s874 = scalar_lea.vmem [#allocation0], 304
    %875 = vst [vmem:[%s874] sm:%s3] %v873
    %s876 = scalar_lea.vmem %s0, 74
    %v877 = vld [vmem:[%s876] sm:%s3]
    %s878 = scalar_lea.vmem [#allocation0], 296
    %879 = vst [vmem:[%s878] sm:%s3] %v877
    %s880 = scalar_lea.vmem %s0, 72
    %v881 = vld [vmem:[%s880] sm:%s3]
    %s882 = scalar_lea.vmem [#allocation0], 288
    %883 = vst [vmem:[%s882] sm:%s3] %v881
    %s884 = scalar_lea.vmem %s0, 70
    %v885 = vld [vmem:[%s884] sm:%s3]
    %s886 = scalar_lea.vmem [#allocation0], 280
    %887 = vst [vmem:[%s886] sm:%s3] %v885
    %s888 = scalar_lea.vmem %s0, 68
    %v889 = vld [vmem:[%s888] sm:%s3]
    %s890 = scalar_lea.vmem [#allocation0], 272
    %891 = vst [vmem:[%s890] sm:%s3] %v889
    %s892 = scalar_lea.vmem %s0, 66
    %v893 = vld [vmem:[%s892] sm:%s3]
    %s894 = scalar_lea.vmem [#allocation0], 264
    %895 = vst [vmem:[%s894] sm:%s3] %v893
    %s896 = scalar_lea.vmem %s0, 64
    %v897 = vld [vmem:[%s896] sm:%s3]
    %s898 = scalar_lea.vmem [#allocation0], 256
    %899 = vst [vmem:[%s898] sm:%s3] %v897
    %s900 = scalar_lea.vmem %s0, 62
    %v901 = vld [vmem:[%s900] sm:%s3]
    %s902 = scalar_lea.vmem [#allocation0], 248
    %903 = vst [vmem:[%s902] sm:%s3] %v901
    %s904 = scalar_lea.vmem %s0, 60
    %v905 = vld [vmem:[%s904] sm:%s3]
    %s906 = scalar_lea.vmem [#allocation0], 240
    %907 = vst [vmem:[%s906] sm:%s3] %v905
    %s908 = scalar_lea.vmem %s0, 58
    %v909 = vld [vmem:[%s908] sm:%s3]
    %s910 = scalar_lea.vmem [#allocation0], 232
    %911 = vst [vmem:[%s910] sm:%s3] %v909
    %s912 = scalar_lea.vmem %s0, 56
    %v913 = vld [vmem:[%s912] sm:%s3]
    %s914 = scalar_lea.vmem [#allocation0], 224
    %915 = vst [vmem:[%s914] sm:%s3] %v913
    %s916 = scalar_lea.vmem %s0, 54
    %v917 = vld [vmem:[%s916] sm:%s3]
    %s918 = scalar_lea.vmem [#allocation0], 216
    %919 = vst [vmem:[%s918] sm:%s3] %v917
    %s920 = scalar_lea.vmem %s0, 52
    %v921 = vld [vmem:[%s920] sm:%s3]
    %s922 = scalar_lea.vmem [#allocation0], 208
    %923 = vst [vmem:[%s922] sm:%s3] %v921
    %s924 = scalar_lea.vmem %s0, 50
    %v925 = vld [vmem:[%s924] sm:%s3]
    %s926 = scalar_lea.vmem [#allocation0], 200
    %927 = vst [vmem:[%s926] sm:%s3] %v925
    %s928 = scalar_lea.vmem %s0, 48
    %v929 = vld [vmem:[%s928] sm:%s3]
    %s930 = scalar_lea.vmem [#allocation0], 192
    %931 = vst [vmem:[%s930] sm:%s3] %v929
    %s932 = scalar_lea.vmem %s0, 46
    %v933 = vld [vmem:[%s932] sm:%s3]
    %s934 = scalar_lea.vmem [#allocation0], 184
    %935 = vst [vmem:[%s934] sm:%s3] %v933
    %s936 = scalar_lea.vmem %s0, 44
    %v937 = vld [vmem:[%s936] sm:%s3]
    %s938 = scalar_lea.vmem [#allocation0], 176
    %939 = vst [vmem:[%s938] sm:%s3] %v937
    %s940 = scalar_lea.vmem %s0, 42
    %v941 = vld [vmem:[%s940] sm:%s3]
    %s942 = scalar_lea.vmem [#allocation0], 168
    %943 = vst [vmem:[%s942] sm:%s3] %v941
    %s944 = scalar_lea.vmem %s0, 40
    %v945 = vld [vmem:[%s944] sm:%s3]
    %s946 = scalar_lea.vmem [#allocation0], 160
    %947 = vst [vmem:[%s946] sm:%s3] %v945
    %s948 = scalar_lea.vmem %s0, 38
    %v949 = vld [vmem:[%s948] sm:%s3]
    %s950 = scalar_lea.vmem [#allocation0], 152
    %951 = vst [vmem:[%s950] sm:%s3] %v949
    %s952 = scalar_lea.vmem %s0, 36
    %v953 = vld [vmem:[%s952] sm:%s3]
    %s954 = scalar_lea.vmem [#allocation0], 144
    %955 = vst [vmem:[%s954] sm:%s3] %v953
    %s956 = scalar_lea.vmem %s0, 34
    %v957 = vld [vmem:[%s956] sm:%s3]
    %s958 = scalar_lea.vmem [#allocation0], 136
    %959 = vst [vmem:[%s958] sm:%s3] %v957
    %s960 = scalar_lea.vmem %s0, 32
    %v961 = vld [vmem:[%s960] sm:%s3]
    %s962 = scalar_lea.vmem [#allocation0], 128
    %963 = vst [vmem:[%s962] sm:%s3] %v961
    %s964 = scalar_lea.vmem %s0, 30
    %v965 = vld [vmem:[%s964] sm:%s3]
    %s966 = scalar_lea.vmem [#allocation0], 120
    %967 = vst [vmem:[%s966] sm:%s3] %v965
    %s968 = scalar_lea.vmem %s0, 28
    %v969 = vld [vmem:[%s968] sm:%s3]
    %s970 = scalar_lea.vmem [#allocation0], 112
    %971 = vst [vmem:[%s970] sm:%s3] %v969
    %s972 = scalar_lea.vmem %s0, 26
    %v973 = vld [vmem:[%s972] sm:%s3]
    %s974 = scalar_lea.vmem [#allocation0], 104
    %975 = vst [vmem:[%s974] sm:%s3] %v973
    %s976 = scalar_lea.vmem %s0, 24
    %v977 = vld [vmem:[%s976] sm:%s3]
    %s978 = scalar_lea.vmem [#allocation0], 96
    %979 = vst [vmem:[%s978] sm:%s3] %v977
    %s980 = scalar_lea.vmem %s0, 22
    %v981 = vld [vmem:[%s980] sm:%s3]
    %s982 = scalar_lea.vmem [#allocation0], 88
    %983 = vst [vmem:[%s982] sm:%s3] %v981
    %s984 = scalar_lea.vmem %s0, 20
    %v985 = vld [vmem:[%s984] sm:%s3]
    %s986 = scalar_lea.vmem [#allocation0], 80
    %987 = vst [vmem:[%s986] sm:%s3] %v985
    %s988 = scalar_lea.vmem %s0, 18
    %v989 = vld [vmem:[%s988] sm:%s3]
    %s990 = scalar_lea.vmem [#allocation0], 72
    %991 = vst [vmem:[%s990] sm:%s3] %v989
    %s992 = scalar_lea.vmem %s0, 16
    %v993 = vld [vmem:[%s992] sm:%s3]
    %s994 = scalar_lea.vmem [#allocation0], 64
    %995 = vst [vmem:[%s994] sm:%s3] %v993
    %s996 = scalar_lea.vmem %s0, 14
    %v997 = vld [vmem:[%s996] sm:%s3]
    %s998 = scalar_lea.vmem [#allocation0], 56
    %999 = vst [vmem:[%s998] sm:%s3] %v997
    %s1000 = scalar_lea.vmem %s0, 12
    %v1001 = vld [vmem:[%s1000] sm:%s3]
    %s1002 = scalar_lea.vmem [#allocation0], 48
    %1003 = vst [vmem:[%s1002] sm:%s3] %v1001
    %s1004 = scalar_lea.vmem %s0, 10
    %v1005 = vld [vmem:[%s1004] sm:%s3]
    %s1006 = scalar_lea.vmem [#allocation0], 40
    %1007 = vst [vmem:[%s1006] sm:%s3] %v1005
    %s1008 = scalar_lea.vmem %s0, 8
    %v1009 = vld [vmem:[%s1008] sm:%s3]
    %s1010 = scalar_lea.vmem [#allocation0], 32
    %1011 = vst [vmem:[%s1010] sm:%s3] %v1009
    %s1012 = scalar_lea.vmem %s0, 6
    %v1013 = vld [vmem:[%s1012] sm:%s3]
    %s1014 = scalar_lea.vmem [#allocation0], 24
    %1015 = vst [vmem:[%s1014] sm:%s3] %v1013
    %s1016 = scalar_lea.vmem %s0, 4
    %v1017 = vld [vmem:[%s1016] sm:%s3]
    %s1018 = scalar_lea.vmem [#allocation0], 16
    %1019 = vst [vmem:[%s1018] sm:%s3] %v1017
    %s1020 = scalar_lea.vmem %s0, 2
    %v1021 = vld [vmem:[%s1020] sm:%s3]
    %s1022 = scalar_lea.vmem [#allocation0], 8
    %1023 = vst [vmem:[%s1022] sm:%s3] %v1021
    %v1024 = vld [vmem:[%s0] sm:%s3]
    %1025 = vst [vmem:[#allocation0] sm:%s3] %v1024
    %v1026 = vld [vmem:[#allocation0] ss:$8 sm:$0xf]
    %v1027 = vld [vmem:[#allocation0] ss:$8 sm:$0xf0]
    %vm1028 = vcmask 1047556
    %v1029 = vsel %vm1028, %v1027, %v1026
    %vm1030 = vcmask 261120
    %1031 = vst.msk [vmem:[%s1] sm:$0xff] %vm1030, %v1029
    %s1032 = scalar_lea.vmem [#allocation0], 64
    %v1033 = vld [vmem:[%s1032] ss:$8 sm:$0xf]
    %s1034 = scalar_lea.vmem [#allocation0], 64
    %v1035 = vld [vmem:[%s1034] ss:$8 sm:$0xf0]
    %vm1036 = vcmask 1047556
    %v1037 = vsel %vm1036, %v1035, %v1033
    %vm1038 = vcmask 261120
    %s1039 = scalar_lea.vmem %s1, 8
    %1040 = vst.msk [vmem:[%s1039] sm:$0xff] %vm1038, %v1037
    %s1041 = scalar_lea.vmem [#allocation0], 128
    %v1042 = vld [vmem:[%s1041] ss:$8 sm:$0xf]
    %s1043 = scalar_lea.vmem [#allocation0], 128
    %v1044 = vld [vmem:[%s1043] ss:$8 sm:$0xf0]
    %vm1045 = vcmask 1047556
    %v1046 = vsel %vm1045, %v1044, %v1042
    %vm1047 = vcmask 261120
    %s1048 = scalar_lea.vmem %s1, 16
    %1049 = vst.msk [vmem:[%s1048] sm:$0xff] %vm1047, %v1046
    %s1050 = scalar_lea.vmem [#allocation0], 192
    %v1051 = vld [vmem:[%s1050] ss:$8 sm:$0xf]
    %s1052 = scalar_lea.vmem [#allocation0], 192
    %v1053 = vld [vmem:[%s1052] ss:$8 sm:$0xf0]
    %vm1054 = vcmask 1047556
    %v1055 = vsel %vm1054, %v1053, %v1051
    %vm1056 = vcmask 261120
    %s1057 = scalar_lea.vmem %s1, 24
    %1058 = vst.msk [vmem:[%s1057] sm:$0xff] %vm1056, %v1055
    %s1059 = scalar_lea.vmem [#allocation0], 256
    %v1060 = vld [vmem:[%s1059] ss:$8 sm:$0xf]
    %s1061 = scalar_lea.vmem [#allocation0], 256
    %v1062 = vld [vmem:[%s1061] ss:$8 sm:$0xf0]
    %vm1063 = vcmask 1047556
    %v1064 = vsel %vm1063, %v1062, %v1060
    %vm1065 = vcmask 261120
    %s1066 = scalar_lea.vmem %s1, 32
    %1067 = vst.msk [vmem:[%s1066] sm:$0xff] %vm1065, %v1064
    %s1068 = scalar_lea.vmem [#allocation0], 320
    %v1069 = vld [vmem:[%s1068] ss:$8 sm:$0xf]
    %s1070 = scalar_lea.vmem [#allocation0], 320
    %v1071 = vld [vmem:[%s1070] ss:$8 sm:$0xf0]
    %vm1072 = vcmask 1047556
    %v1073 = vsel %vm1072, %v1071, %v1069
    %vm1074 = vcmask 261120
    %s1075 = scalar_lea.vmem %s1, 40
    %1076 = vst.msk [vmem:[%s1075] sm:$0xff] %vm1074, %v1073
    %s1077 = scalar_lea.vmem [#allocation0], 384
    %v1078 = vld [vmem:[%s1077] ss:$8 sm:$0xf]
    %s1079 = scalar_lea.vmem [#allocation0], 384
    %v1080 = vld [vmem:[%s1079] ss:$8 sm:$0xf0]
    %vm1081 = vcmask 1047556
    %v1082 = vsel %vm1081, %v1080, %v1078
    %vm1083 = vcmask 261120
    %s1084 = scalar_lea.vmem %s1, 48
    %1085 = vst.msk [vmem:[%s1084] sm:$0xff] %vm1083, %v1082
    %s1086 = scalar_lea.vmem [#allocation0], 448
    %v1087 = vld [vmem:[%s1086] ss:$8 sm:$0xf]
    %s1088 = scalar_lea.vmem [#allocation0], 448
    %v1089 = vld [vmem:[%s1088] ss:$8 sm:$0xf0]
    %vm1090 = vcmask 1047556
    %v1091 = vsel %vm1090, %v1089, %v1087
    %vm1092 = vcmask 261120
    %s1093 = scalar_lea.vmem %s1, 56
    %1094 = vst.msk [vmem:[%s1093] sm:$0xff] %vm1092, %v1091
    %s1095 = scalar_lea.vmem [#allocation0], 512
    %v1096 = vld [vmem:[%s1095] ss:$8 sm:$0xf]
    %s1097 = scalar_lea.vmem [#allocation0], 512
    %v1098 = vld [vmem:[%s1097] ss:$8 sm:$0xf0]
    %vm1099 = vcmask 1047556
    %v1100 = vsel %vm1099, %v1098, %v1096
    %vm1101 = vcmask 261120
    %s1102 = scalar_lea.vmem %s1, 64
    %1103 = vst.msk [vmem:[%s1102] sm:$0xff] %vm1101, %v1100
    %s1104 = scalar_lea.vmem [#allocation0], 576
    %v1105 = vld [vmem:[%s1104] ss:$8 sm:$0xf]
    %s1106 = scalar_lea.vmem [#allocation0], 576
    %v1107 = vld [vmem:[%s1106] ss:$8 sm:$0xf0]
    %vm1108 = vcmask 1047556
    %v1109 = vsel %vm1108, %v1107, %v1105
    %vm1110 = vcmask 261120
    %s1111 = scalar_lea.vmem %s1, 72
    %1112 = vst.msk [vmem:[%s1111] sm:$0xff] %vm1110, %v1109
    %s1113 = scalar_lea.vmem [#allocation0], 640
    %v1114 = vld [vmem:[%s1113] ss:$8 sm:$0xf]
    %s1115 = scalar_lea.vmem [#allocation0], 640
    %v1116 = vld [vmem:[%s1115] ss:$8 sm:$0xf0]
    %vm1117 = vcmask 1047556
    %v1118 = vsel %vm1117, %v1116, %v1114
    %vm1119 = vcmask 261120
    %s1120 = scalar_lea.vmem %s1, 80
    %1121 = vst.msk [vmem:[%s1120] sm:$0xff] %vm1119, %v1118
    %s1122 = scalar_lea.vmem [#allocation0], 704
    %v1123 = vld [vmem:[%s1122] ss:$8 sm:$0xf]
    %s1124 = scalar_lea.vmem [#allocation0], 704
    %v1125 = vld [vmem:[%s1124] ss:$8 sm:$0xf0]
    %vm1126 = vcmask 1047556
    %v1127 = vsel %vm1126, %v1125, %v1123
    %vm1128 = vcmask 261120
    %s1129 = scalar_lea.vmem %s1, 88
    %1130 = vst.msk [vmem:[%s1129] sm:$0xff] %vm1128, %v1127
    %s1131 = scalar_lea.vmem [#allocation0], 768
    %v1132 = vld [vmem:[%s1131] ss:$8 sm:$0xf]
    %s1133 = scalar_lea.vmem [#allocation0], 768
    %v1134 = vld [vmem:[%s1133] ss:$8 sm:$0xf0]
    %vm1135 = vcmask 1047556
    %v1136 = vsel %vm1135, %v1134, %v1132
    %vm1137 = vcmask 261120
    %s1138 = scalar_lea.vmem %s1, 96
    %1139 = vst.msk [vmem:[%s1138] sm:$0xff] %vm1137, %v1136
    %s1140 = scalar_lea.vmem [#allocation0], 832
    %v1141 = vld [vmem:[%s1140] ss:$8 sm:$0xf]
    %s1142 = scalar_lea.vmem [#allocation0], 832
    %v1143 = vld [vmem:[%s1142] ss:$8 sm:$0xf0]
    %vm1144 = vcmask 1047556
    %v1145 = vsel %vm1144, %v1143, %v1141
    %vm1146 = vcmask 261120
    %s1147 = scalar_lea.vmem %s1, 104
    %1148 = vst.msk [vmem:[%s1147] sm:$0xff] %vm1146, %v1145
    %s1149 = scalar_lea.vmem [#allocation0], 896
    %v1150 = vld [vmem:[%s1149] ss:$8 sm:$0xf]
    %s1151 = scalar_lea.vmem [#allocation0], 896
    %v1152 = vld [vmem:[%s1151] ss:$8 sm:$0xf0]
    %vm1153 = vcmask 1047556
    %v1154 = vsel %vm1153, %v1152, %v1150
    %vm1155 = vcmask 261120
    %s1156 = scalar_lea.vmem %s1, 112
    %1157 = vst.msk [vmem:[%s1156] sm:$0xff] %vm1155, %v1154
    %s1158 = scalar_lea.vmem [#allocation0], 960
    %v1159 = vld [vmem:[%s1158] ss:$8 sm:$0xf]
    %s1160 = scalar_lea.vmem [#allocation0], 960
    %v1161 = vld [vmem:[%s1160] ss:$8 sm:$0xf0]
    %vm1162 = vcmask 1047556
    %v1163 = vsel %vm1162, %v1161, %v1159
    %vm1164 = vcmask 261120
    %s1165 = scalar_lea.vmem %s1, 120
    %1166 = vst.msk [vmem:[%s1165] sm:$0xff] %vm1164, %v1163
    %s1167 = scalar_lea.vmem [#allocation0], 1024
    %v1168 = vld [vmem:[%s1167] ss:$8 sm:$0xf]
    %s1169 = scalar_lea.vmem [#allocation0], 1024
    %v1170 = vld [vmem:[%s1169] ss:$8 sm:$0xf0]
    %vm1171 = vcmask 1047556
    %v1172 = vsel %vm1171, %v1170, %v1168
    %vm1173 = vcmask 261120
    %s1174 = scalar_lea.vmem %s1, 128
    %1175 = vst.msk [vmem:[%s1174] sm:$0xff] %vm1173, %v1172
    %s1176 = scalar_lea.vmem [#allocation0], 1088
    %v1177 = vld [vmem:[%s1176] ss:$8 sm:$0xf]
    %s1178 = scalar_lea.vmem [#allocation0], 1088
    %v1179 = vld [vmem:[%s1178] ss:$8 sm:$0xf0]
    %vm1180 = vcmask 1047556
    %v1181 = vsel %vm1180, %v1179, %v1177
    %vm1182 = vcmask 261120
    %s1183 = scalar_lea.vmem %s1, 136
    %1184 = vst.msk [vmem:[%s1183] sm:$0xff] %vm1182, %v1181
    %s1185 = scalar_lea.vmem [#allocation0], 1152
    %v1186 = vld [vmem:[%s1185] ss:$8 sm:$0xf]
    %s1187 = scalar_lea.vmem [#allocation0], 1152
    %v1188 = vld [vmem:[%s1187] ss:$8 sm:$0xf0]
    %vm1189 = vcmask 1047556
    %v1190 = vsel %vm1189, %v1188, %v1186
    %vm1191 = vcmask 261120
    %s1192 = scalar_lea.vmem %s1, 144
    %1193 = vst.msk [vmem:[%s1192] sm:$0xff] %vm1191, %v1190
    %s1194 = scalar_lea.vmem [#allocation0], 1216
    %v1195 = vld [vmem:[%s1194] ss:$8 sm:$0xf]
    %s1196 = scalar_lea.vmem [#allocation0], 1216
    %v1197 = vld [vmem:[%s1196] ss:$8 sm:$0xf0]
    %vm1198 = vcmask 1047556
    %v1199 = vsel %vm1198, %v1197, %v1195
    %vm1200 = vcmask 261120
    %s1201 = scalar_lea.vmem %s1, 152
    %1202 = vst.msk [vmem:[%s1201] sm:$0xff] %vm1200, %v1199
    %s1203 = scalar_lea.vmem [#allocation0], 1280
    %v1204 = vld [vmem:[%s1203] ss:$8 sm:$0xf]
    %s1205 = scalar_lea.vmem [#allocation0], 1280
    %v1206 = vld [vmem:[%s1205] ss:$8 sm:$0xf0]
    %vm1207 = vcmask 1047556
    %v1208 = vsel %vm1207, %v1206, %v1204
    %vm1209 = vcmask 261120
    %s1210 = scalar_lea.vmem %s1, 160
    %1211 = vst.msk [vmem:[%s1210] sm:$0xff] %vm1209, %v1208
    %s1212 = scalar_lea.vmem [#allocation0], 1344
    %v1213 = vld [vmem:[%s1212] ss:$8 sm:$0xf]
    %s1214 = scalar_lea.vmem [#allocation0], 1344
    %v1215 = vld [vmem:[%s1214] ss:$8 sm:$0xf0]
    %vm1216 = vcmask 1047556
    %v1217 = vsel %vm1216, %v1215, %v1213
    %vm1218 = vcmask 261120
    %s1219 = scalar_lea.vmem %s1, 168
    %1220 = vst.msk [vmem:[%s1219] sm:$0xff] %vm1218, %v1217
    %s1221 = scalar_lea.vmem [#allocation0], 1408
    %v1222 = vld [vmem:[%s1221] ss:$8 sm:$0xf]
    %s1223 = scalar_lea.vmem [#allocation0], 1408
    %v1224 = vld [vmem:[%s1223] ss:$8 sm:$0xf0]
    %vm1225 = vcmask 1047556
    %v1226 = vsel %vm1225, %v1224, %v1222
    %vm1227 = vcmask 261120
    %s1228 = scalar_lea.vmem %s1, 176
    %1229 = vst.msk [vmem:[%s1228] sm:$0xff] %vm1227, %v1226
    %s1230 = scalar_lea.vmem [#allocation0], 1472
    %v1231 = vld [vmem:[%s1230] ss:$8 sm:$0xf]
    %s1232 = scalar_lea.vmem [#allocation0], 1472
    %v1233 = vld [vmem:[%s1232] ss:$8 sm:$0xf0]
    %vm1234 = vcmask 1047556
    %v1235 = vsel %vm1234, %v1233, %v1231
    %vm1236 = vcmask 261120
    %s1237 = scalar_lea.vmem %s1, 184
    %1238 = vst.msk [vmem:[%s1237] sm:$0xff] %vm1236, %v1235
    %s1239 = scalar_lea.vmem [#allocation0], 1536
    %v1240 = vld [vmem:[%s1239] ss:$8 sm:$0xf]
    %s1241 = scalar_lea.vmem [#allocation0], 1536
    %v1242 = vld [vmem:[%s1241] ss:$8 sm:$0xf0]
    %vm1243 = vcmask 1047556
    %v1244 = vsel %vm1243, %v1242, %v1240
    %vm1245 = vcmask 261120
    %s1246 = scalar_lea.vmem %s1, 192
    %1247 = vst.msk [vmem:[%s1246] sm:$0xff] %vm1245, %v1244
    %s1248 = scalar_lea.vmem [#allocation0], 1600
    %v1249 = vld [vmem:[%s1248] ss:$8 sm:$0xf]
    %s1250 = scalar_lea.vmem [#allocation0], 1600
    %v1251 = vld [vmem:[%s1250] ss:$8 sm:$0xf0]
    %vm1252 = vcmask 1047556
    %v1253 = vsel %vm1252, %v1251, %v1249
    %vm1254 = vcmask 261120
    %s1255 = scalar_lea.vmem %s1, 200
    %1256 = vst.msk [vmem:[%s1255] sm:$0xff] %vm1254, %v1253
    %s1257 = scalar_lea.vmem [#allocation0], 1664
    %v1258 = vld [vmem:[%s1257] ss:$8 sm:$0xf]
    %s1259 = scalar_lea.vmem [#allocation0], 1664
    %v1260 = vld [vmem:[%s1259] ss:$8 sm:$0xf0]
    %vm1261 = vcmask 1047556
    %v1262 = vsel %vm1261, %v1260, %v1258
    %vm1263 = vcmask 261120
    %s1264 = scalar_lea.vmem %s1, 208
    %1265 = vst.msk [vmem:[%s1264] sm:$0xff] %vm1263, %v1262
    %s1266 = scalar_lea.vmem [#allocation0], 1728
    %v1267 = vld [vmem:[%s1266] ss:$8 sm:$0xf]
    %s1268 = scalar_lea.vmem [#allocation0], 1728
    %v1269 = vld [vmem:[%s1268] ss:$8 sm:$0xf0]
    %vm1270 = vcmask 1047556
    %v1271 = vsel %vm1270, %v1269, %v1267
    %vm1272 = vcmask 261120
    %s1273 = scalar_lea.vmem %s1, 216
    %1274 = vst.msk [vmem:[%s1273] sm:$0xff] %vm1272, %v1271
    %s1275 = scalar_lea.vmem [#allocation0], 1792
    %v1276 = vld [vmem:[%s1275] ss:$8 sm:$0xf]
    %s1277 = scalar_lea.vmem [#allocation0], 1792
    %v1278 = vld [vmem:[%s1277] ss:$8 sm:$0xf0]
    %vm1279 = vcmask 1047556
    %v1280 = vsel %vm1279, %v1278, %v1276
    %vm1281 = vcmask 261120
    %s1282 = scalar_lea.vmem %s1, 224
    %1283 = vst.msk [vmem:[%s1282] sm:$0xff] %vm1281, %v1280
    %s1284 = scalar_lea.vmem [#allocation0], 1856
    %v1285 = vld [vmem:[%s1284] ss:$8 sm:$0xf]
    %s1286 = scalar_lea.vmem [#allocation0], 1856
    %v1287 = vld [vmem:[%s1286] ss:$8 sm:$0xf0]
    %vm1288 = vcmask 1047556
    %v1289 = vsel %vm1288, %v1287, %v1285
    %vm1290 = vcmask 261120
    %s1291 = scalar_lea.vmem %s1, 232
    %1292 = vst.msk [vmem:[%s1291] sm:$0xff] %vm1290, %v1289
    %s1293 = scalar_lea.vmem [#allocation0], 1920
    %v1294 = vld [vmem:[%s1293] ss:$8 sm:$0xf]
    %s1295 = scalar_lea.vmem [#allocation0], 1920
    %v1296 = vld [vmem:[%s1295] ss:$8 sm:$0xf0]
    %vm1297 = vcmask 1047556
    %v1298 = vsel %vm1297, %v1296, %v1294
    %vm1299 = vcmask 261120
    %s1300 = scalar_lea.vmem %s1, 240
    %1301 = vst.msk [vmem:[%s1300] sm:$0xff] %vm1299, %v1298
    %s1302 = scalar_lea.vmem [#allocation0], 1984
    %v1303 = vld [vmem:[%s1302] ss:$8 sm:$0xf]
    %s1304 = scalar_lea.vmem [#allocation0], 1984
    %v1305 = vld [vmem:[%s1304] ss:$8 sm:$0xf0]
    %vm1306 = vcmask 1047556
    %v1307 = vsel %vm1306, %v1305, %v1303
    %vm1308 = vcmask 261120
    %s1309 = scalar_lea.vmem %s1, 248
    %1310 = vst.msk [vmem:[%s1309] sm:$0xff] %vm1308, %v1307
    %s1311 = scalar_lea.vmem [#allocation0], 1
    %v1312 = vld [vmem:[%s1311] ss:$8 sm:$0xf]
    %s1313 = scalar_lea.vmem [#allocation0], 1
    %v1314 = vld [vmem:[%s1313] ss:$8 sm:$0xf0]
    %vm1315 = vcmask 1047556
    %v1316 = vsel %vm1315, %v1314, %v1312
    %1317 = vrot.lane.b32.xlu0 %v1316, 32
    %v1318 = vpop.permute.xlu0 %1317
    %vm1319 = vcmask 523520
    %1320 = vst.msk [vmem:[%s1] sm:$0xff] %vm1319, %v1318
    %s1321 = scalar_lea.vmem [#allocation0], 257
    %v1322 = vld [vmem:[%s1321] ss:$8 sm:$0xf]
    %s1323 = scalar_lea.vmem [#allocation0], 257
    %v1324 = vld [vmem:[%s1323] ss:$8 sm:$0xf0]
    %vm1325 = vcmask 1047556
    %v1326 = vsel %vm1325, %v1324, %v1322
    %1327 = vrot.lane.b32.xlu0 %v1326, 32
    %v1328 = vpop.permute.xlu0 %1327
    %vm1329 = vcmask 523520
    %s1330 = scalar_lea.vmem %s1, 32
    %1331 = vst.msk [vmem:[%s1330] sm:$0xff] %vm1329, %v1328
    %s1332 = scalar_lea.vmem [#allocation0], 513
    %v1333 = vld [vmem:[%s1332] ss:$8 sm:$0xf]
    %s1334 = scalar_lea.vmem [#allocation0], 513
    %v1335 = vld [vmem:[%s1334] ss:$8 sm:$0xf0]
    %vm1336 = vcmask 1047556
    %v1337 = vsel %vm1336, %v1335, %v1333
    %1338 = vrot.lane.b32.xlu0 %v1337, 32
    %v1339 = vpop.permute.xlu0 %1338
    %vm1340 = vcmask 523520
    %s1341 = scalar_lea.vmem %s1, 64
    %1342 = vst.msk [vmem:[%s1341] sm:$0xff] %vm1340, %v1339
    %s1343 = scalar_lea.vmem [#allocation0], 769
    %v1344 = vld [vmem:[%s1343] ss:$8 sm:$0xf]
    %s1345 = scalar_lea.vmem [#allocation0], 769
    %v1346 = vld [vmem:[%s1345] ss:$8 sm:$0xf0]
    %vm1347 = vcmask 1047556
    %v1348 = vsel %vm1347, %v1346, %v1344
    %1349 = vrot.lane.b32.xlu0 %v1348, 32
    %v1350 = vpop.permute.xlu0 %1349
    %vm1351 = vcmask 523520
    %s1352 = scalar_lea.vmem %s1, 96
    %1353 = vst.msk [vmem:[%s1352] sm:$0xff] %vm1351, %v1350
    %s1354 = scalar_lea.vmem [#allocation0], 1025
    %v1355 = vld [vmem:[%s1354] ss:$8 sm:$0xf]
    %s1356 = scalar_lea.vmem [#allocation0], 1025
    %v1357 = vld [vmem:[%s1356] ss:$8 sm:$0xf0]
    %vm1358 = vcmask 1047556
    %v1359 = vsel %vm1358, %v1357, %v1355
    %1360 = vrot.lane.b32.xlu0 %v1359, 32
    %v1361 = vpop.permute.xlu0 %1360
    %vm1362 = vcmask 523520
    %s1363 = scalar_lea.vmem %s1, 128
    %1364 = vst.msk [vmem:[%s1363] sm:$0xff] %vm1362, %v1361
    %s1365 = scalar_lea.vmem [#allocation0], 1281
    %v1366 = vld [vmem:[%s1365] ss:$8 sm:$0xf]
    %s1367 = scalar_lea.vmem [#allocation0], 1281
    %v1368 = vld [vmem:[%s1367] ss:$8 sm:$0xf0]
    %vm1369 = vcmask 1047556
    %v1370 = vsel %vm1369, %v1368, %v1366
    %1371 = vrot.lane.b32.xlu0 %v1370, 32
    %v1372 = vpop.permute.xlu0 %1371
    %vm1373 = vcmask 523520
    %s1374 = scalar_lea.vmem %s1, 160
    %1375 = vst.msk [vmem:[%s1374] sm:$0xff] %vm1373, %v1372
    %s1376 = scalar_lea.vmem [#allocation0], 1537
    %v1377 = vld [vmem:[%s1376] ss:$8 sm:$0xf]
    %s1378 = scalar_lea.vmem [#allocation0], 1537
    %v1379 = vld [vmem:[%s1378] ss:$8 sm:$0xf0]
    %vm1380 = vcmask 1047556
    %v1381 = vsel %vm1380, %v1379, %v1377
    %1382 = vrot.lane.b32.xlu0 %v1381, 32
    %v1383 = vpop.permute.xlu0 %1382
    %vm1384 = vcmask 523520
    %s1385 = scalar_lea.vmem %s1, 192
    %1386 = vst.msk [vmem:[%s1385] sm:$0xff] %vm1384, %v1383
    %s1387 = scalar_lea.vmem [#allocation0], 1793
    %v1388 = vld [vmem:[%s1387] ss:$8 sm:$0xf]
    %s1389 = scalar_lea.vmem [#allocation0], 1793
    %v1390 = vld [vmem:[%s1389] ss:$8 sm:$0xf0]
    %vm1391 = vcmask 1047556
    %v1392 = vsel %vm1391, %v1390, %v1388
    %1393 = vrot.lane.b32.xlu0 %v1392, 32
    %v1394 = vpop.permute.xlu0 %1393
    %vm1395 = vcmask 523520
    %s1396 = scalar_lea.vmem %s1, 224
    %1397 = vst.msk [vmem:[%s1396] sm:$0xff] %vm1395, %v1394
    %s1398 = scalar_lea.vmem [#allocation0], 65
    %v1399 = vld [vmem:[%s1398] ss:$8 sm:$0xf]
    %s1400 = scalar_lea.vmem [#allocation0], 65
    %v1401 = vld [vmem:[%s1400] ss:$8 sm:$0xf0]
    %vm1402 = vcmask 1047556
    %v1403 = vsel %vm1402, %v1401, %v1399
    %1404 = vrot.lane.b32.xlu0 %v1403, 32
    %v1405 = vpop.permute.xlu0 %1404
    %vm1406 = vcmask 523520
    %s1407 = scalar_lea.vmem %s1, 8
    %1408 = vst.msk [vmem:[%s1407] sm:$0xff] %vm1406, %v1405
    %s1409 = scalar_lea.vmem [#allocation0], 321
    %v1410 = vld [vmem:[%s1409] ss:$8 sm:$0xf]
    %s1411 = scalar_lea.vmem [#allocation0], 321
    %v1412 = vld [vmem:[%s1411] ss:$8 sm:$0xf0]
    %vm1413 = vcmask 1047556
    %v1414 = vsel %vm1413, %v1412, %v1410
    %1415 = vrot.lane.b32.xlu0 %v1414, 32
    %v1416 = vpop.permute.xlu0 %1415
    %vm1417 = vcmask 523520
    %s1418 = scalar_lea.vmem %s1, 40
    %1419 = vst.msk [vmem:[%s1418] sm:$0xff] %vm1417, %v1416
    %s1420 = scalar_lea.vmem [#allocation0], 577
    %v1421 = vld [vmem:[%s1420] ss:$8 sm:$0xf]
    %s1422 = scalar_lea.vmem [#allocation0], 577
    %v1423 = vld [vmem:[%s1422] ss:$8 sm:$0xf0]
    %vm1424 = vcmask 1047556
    %v1425 = vsel %vm1424, %v1423, %v1421
    %1426 = vrot.lane.b32.xlu0 %v1425, 32
    %v1427 = vpop.permute.xlu0 %1426
    %vm1428 = vcmask 523520
    %s1429 = scalar_lea.vmem %s1, 72
    %1430 = vst.msk [vmem:[%s1429] sm:$0xff] %vm1428, %v1427
    %s1431 = scalar_lea.vmem [#allocation0], 833
    %v1432 = vld [vmem:[%s1431] ss:$8 sm:$0xf]
    %s1433 = scalar_lea.vmem [#allocation0], 833
    %v1434 = vld [vmem:[%s1433] ss:$8 sm:$0xf0]
    %vm1435 = vcmask 1047556
    %v1436 = vsel %vm1435, %v1434, %v1432
    %1437 = vrot.lane.b32.xlu0 %v1436, 32
    %v1438 = vpop.permute.xlu0 %1437
    %vm1439 = vcmask 523520
    %s1440 = scalar_lea.vmem %s1, 104
    %1441 = vst.msk [vmem:[%s1440] sm:$0xff] %vm1439, %v1438
    %s1442 = scalar_lea.vmem [#allocation0], 1089
    %v1443 = vld [vmem:[%s1442] ss:$8 sm:$0xf]
    %s1444 = scalar_lea.vmem [#allocation0], 1089
    %v1445 = vld [vmem:[%s1444] ss:$8 sm:$0xf0]
    %vm1446 = vcmask 1047556
    %v1447 = vsel %vm1446, %v1445, %v1443
    %1448 = vrot.lane.b32.xlu0 %v1447, 32
    %v1449 = vpop.permute.xlu0 %1448
    %vm1450 = vcmask 523520
    %s1451 = scalar_lea.vmem %s1, 136
    %1452 = vst.msk [vmem:[%s1451] sm:$0xff] %vm1450, %v1449
    %s1453 = scalar_lea.vmem [#allocation0], 1345
    %v1454 = vld [vmem:[%s1453] ss:$8 sm:$0xf]
    %s1455 = scalar_lea.vmem [#allocation0], 1345
    %v1456 = vld [vmem:[%s1455] ss:$8 sm:$0xf0]
    %vm1457 = vcmask 1047556
    %v1458 = vsel %vm1457, %v1456, %v1454
    %1459 = vrot.lane.b32.xlu0 %v1458, 32
    %v1460 = vpop.permute.xlu0 %1459
    %vm1461 = vcmask 523520
    %s1462 = scalar_lea.vmem %s1, 168
    %1463 = vst.msk [vmem:[%s1462] sm:$0xff] %vm1461, %v1460
    %s1464 = scalar_lea.vmem [#allocation0], 1601
    %v1465 = vld [vmem:[%s1464] ss:$8 sm:$0xf]
    %s1466 = scalar_lea.vmem [#allocation0], 1601
    %v1467 = vld [vmem:[%s1466] ss:$8 sm:$0xf0]
    %vm1468 = vcmask 1047556
    %v1469 = vsel %vm1468, %v1467, %v1465
    %1470 = vrot.lane.b32.xlu0 %v1469, 32
    %v1471 = vpop.permute.xlu0 %1470
    %vm1472 = vcmask 523520
    %s1473 = scalar_lea.vmem %s1, 200
    %1474 = vst.msk [vmem:[%s1473] sm:$0xff] %vm1472, %v1471
    %s1475 = scalar_lea.vmem [#allocation0], 1857
    %v1476 = vld [vmem:[%s1475] ss:$8 sm:$0xf]
    %s1477 = scalar_lea.vmem [#allocation0], 1857
    %v1478 = vld [vmem:[%s1477] ss:$8 sm:$0xf0]
    %vm1479 = vcmask 1047556
    %v1480 = vsel %vm1479, %v1478, %v1476
    %1481 = vrot.lane.b32.xlu0 %v1480, 32
    %v1482 = vpop.permute.xlu0 %1481
    %vm1483 = vcmask 523520
    %s1484 = scalar_lea.vmem %s1, 232
    %1485 = vst.msk [vmem:[%s1484] sm:$0xff] %vm1483, %v1482
    %s1486 = scalar_lea.vmem [#allocation0], 129
    %v1487 = vld [vmem:[%s1486] ss:$8 sm:$0xf]
    %s1488 = scalar_lea.vmem [#allocation0], 129
    %v1489 = vld [vmem:[%s1488] ss:$8 sm:$0xf0]
    %vm1490 = vcmask 1047556
    %v1491 = vsel %vm1490, %v1489, %v1487
    %1492 = vrot.lane.b32.xlu0 %v1491, 32
    %v1493 = vpop.permute.xlu0 %1492
    %vm1494 = vcmask 523520
    %s1495 = scalar_lea.vmem %s1, 16
    %1496 = vst.msk [vmem:[%s1495] sm:$0xff] %vm1494, %v1493
    %s1497 = scalar_lea.vmem [#allocation0], 385
    %v1498 = vld [vmem:[%s1497] ss:$8 sm:$0xf]
    %s1499 = scalar_lea.vmem [#allocation0], 385
    %v1500 = vld [vmem:[%s1499] ss:$8 sm:$0xf0]
    %vm1501 = vcmask 1047556
    %v1502 = vsel %vm1501, %v1500, %v1498
    %1503 = vrot.lane.b32.xlu0 %v1502, 32
    %v1504 = vpop.permute.xlu0 %1503
    %vm1505 = vcmask 523520
    %s1506 = scalar_lea.vmem %s1, 48
    %1507 = vst.msk [vmem:[%s1506] sm:$0xff] %vm1505, %v1504
    %s1508 = scalar_lea.vmem [#allocation0], 641
    %v1509 = vld [vmem:[%s1508] ss:$8 sm:$0xf]
    %s1510 = scalar_lea.vmem [#allocation0], 641
    %v1511 = vld [vmem:[%s1510] ss:$8 sm:$0xf0]
    %vm1512 = vcmask 1047556
    %v1513 = vsel %vm1512, %v1511, %v1509
    %1514 = vrot.lane.b32.xlu0 %v1513, 32
    %v1515 = vpop.permute.xlu0 %1514
    %vm1516 = vcmask 523520
    %s1517 = scalar_lea.vmem %s1, 80
    %1518 = vst.msk [vmem:[%s1517] sm:$0xff] %vm1516, %v1515
    %s1519 = scalar_lea.vmem [#allocation0], 897
    %v1520 = vld [vmem:[%s1519] ss:$8 sm:$0xf]
    %s1521 = scalar_lea.vmem [#allocation0], 897
    %v1522 = vld [vmem:[%s1521] ss:$8 sm:$0xf0]
    %vm1523 = vcmask 1047556
    %v1524 = vsel %vm1523, %v1522, %v1520
    %1525 = vrot.lane.b32.xlu0 %v1524, 32
    %v1526 = vpop.permute.xlu0 %1525
    %vm1527 = vcmask 523520
    %s1528 = scalar_lea.vmem %s1, 112
    %1529 = vst.msk [vmem:[%s1528] sm:$0xff] %vm1527, %v1526
    %s1530 = scalar_lea.vmem [#allocation0], 1153
    %v1531 = vld [vmem:[%s1530] ss:$8 sm:$0xf]
    %s1532 = scalar_lea.vmem [#allocation0], 1153
    %v1533 = vld [vmem:[%s1532] ss:$8 sm:$0xf0]
    %vm1534 = vcmask 1047556
    %v1535 = vsel %vm1534, %v1533, %v1531
    %1536 = vrot.lane.b32.xlu0 %v1535, 32
    %v1537 = vpop.permute.xlu0 %1536
    %vm1538 = vcmask 523520
    %s1539 = scalar_lea.vmem %s1, 144
    %1540 = vst.msk [vmem:[%s1539] sm:$0xff] %vm1538, %v1537
    %s1541 = scalar_lea.vmem [#allocation0], 1409
    %v1542 = vld [vmem:[%s1541] ss:$8 sm:$0xf]
    %s1543 = scalar_lea.vmem [#allocation0], 1409
    %v1544 = vld [vmem:[%s1543] ss:$8 sm:$0xf0]
    %vm1545 = vcmask 1047556
    %v1546 = vsel %vm1545, %v1544, %v1542
    %1547 = vrot.lane.b32.xlu0 %v1546, 32
    %v1548 = vpop.permute.xlu0 %1547
    %vm1549 = vcmask 523520
    %s1550 = scalar_lea.vmem %s1, 176
    %1551 = vst.msk [vmem:[%s1550] sm:$0xff] %vm1549, %v1548
    %s1552 = scalar_lea.vmem [#allocation0], 1665
    %v1553 = vld [vmem:[%s1552] ss:$8 sm:$0xf]
    %s1554 = scalar_lea.vmem [#allocation0], 1665
    %v1555 = vld [vmem:[%s1554] ss:$8 sm:$0xf0]
    %vm1556 = vcmask 1047556
    %v1557 = vsel %vm1556, %v1555, %v1553
    %1558 = vrot.lane.b32.xlu0 %v1557, 32
    %v1559 = vpop.permute.xlu0 %1558
    %vm1560 = vcmask 523520
    %s1561 = scalar_lea.vmem %s1, 208
    %1562 = vst.msk [vmem:[%s1561] sm:$0xff] %vm1560, %v1559
    %s1563 = scalar_lea.vmem [#allocation0], 1921
    %v1564 = vld [vmem:[%s1563] ss:$8 sm:$0xf]
    %s1565 = scalar_lea.vmem [#allocation0], 1921
    %v1566 = vld [vmem:[%s1565] ss:$8 sm:$0xf0]
    %vm1567 = vcmask 1047556
    %v1568 = vsel %vm1567, %v1566, %v1564
    %1569 = vrot.lane.b32.xlu0 %v1568, 32
    %v1570 = vpop.permute.xlu0 %1569
    %vm1571 = vcmask 523520
    %s1572 = scalar_lea.vmem %s1, 240
    %1573 = vst.msk [vmem:[%s1572] sm:$0xff] %vm1571, %v1570
    %s1574 = scalar_lea.vmem [#allocation0], 193
    %v1575 = vld [vmem:[%s1574] ss:$8 sm:$0xf]
    %s1576 = scalar_lea.vmem [#allocation0], 193
    %v1577 = vld [vmem:[%s1576] ss:$8 sm:$0xf0]
    %vm1578 = vcmask 1047556
    %v1579 = vsel %vm1578, %v1577, %v1575
    %1580 = vrot.lane.b32.xlu0 %v1579, 32
    %v1581 = vpop.permute.xlu0 %1580
    %vm1582 = vcmask 523520
    %s1583 = scalar_lea.vmem %s1, 24
    %1584 = vst.msk [vmem:[%s1583] sm:$0xff] %vm1582, %v1581
    %s1585 = scalar_lea.vmem [#allocation0], 449
    %v1586 = vld [vmem:[%s1585] ss:$8 sm:$0xf]
    %s1587 = scalar_lea.vmem [#allocation0], 449
    %v1588 = vld [vmem:[%s1587] ss:$8 sm:$0xf0]
    %vm1589 = vcmask 1047556
    %v1590 = vsel %vm1589, %v1588, %v1586
    %1591 = vrot.lane.b32.xlu0 %v1590, 32
    %v1592 = vpop.permute.xlu0 %1591
    %vm1593 = vcmask 523520
    %s1594 = scalar_lea.vmem %s1, 56
    %1595 = vst.msk [vmem:[%s1594] sm:$0xff] %vm1593, %v1592
    %s1596 = scalar_lea.vmem [#allocation0], 705
    %v1597 = vld [vmem:[%s1596] ss:$8 sm:$0xf]
    %s1598 = scalar_lea.vmem [#allocation0], 705
    %v1599 = vld [vmem:[%s1598] ss:$8 sm:$0xf0]
    %vm1600 = vcmask 1047556
    %v1601 = vsel %vm1600, %v1599, %v1597
    %1602 = vrot.lane.b32.xlu0 %v1601, 32
    %v1603 = vpop.permute.xlu0 %1602
    %vm1604 = vcmask 523520
    %s1605 = scalar_lea.vmem %s1, 88
    %1606 = vst.msk [vmem:[%s1605] sm:$0xff] %vm1604, %v1603
    %s1607 = scalar_lea.vmem [#allocation0], 961
    %v1608 = vld [vmem:[%s1607] ss:$8 sm:$0xf]
    %s1609 = scalar_lea.vmem [#allocation0], 961
    %v1610 = vld [vmem:[%s1609] ss:$8 sm:$0xf0]
    %vm1611 = vcmask 1047556
    %v1612 = vsel %vm1611, %v1610, %v1608
    %1613 = vrot.lane.b32.xlu0 %v1612, 32
    %v1614 = vpop.permute.xlu0 %1613
    %vm1615 = vcmask 523520
    %s1616 = scalar_lea.vmem %s1, 120
    %1617 = vst.msk [vmem:[%s1616] sm:$0xff] %vm1615, %v1614
    %s1618 = scalar_lea.vmem [#allocation0], 1217
    %v1619 = vld [vmem:[%s1618] ss:$8 sm:$0xf]
    %s1620 = scalar_lea.vmem [#allocation0], 1217
    %v1621 = vld [vmem:[%s1620] ss:$8 sm:$0xf0]
    %vm1622 = vcmask 1047556
    %v1623 = vsel %vm1622, %v1621, %v1619
    %1624 = vrot.lane.b32.xlu0 %v1623, 32
    %v1625 = vpop.permute.xlu0 %1624
    %vm1626 = vcmask 523520
    %s1627 = scalar_lea.vmem %s1, 152
    %1628 = vst.msk [vmem:[%s1627] sm:$0xff] %vm1626, %v1625
    %s1629 = scalar_lea.vmem [#allocation0], 1473
    %v1630 = vld [vmem:[%s1629] ss:$8 sm:$0xf]
    %s1631 = scalar_lea.vmem [#allocation0], 1473
    %v1632 = vld [vmem:[%s1631] ss:$8 sm:$0xf0]
    %vm1633 = vcmask 1047556
    %v1634 = vsel %vm1633, %v1632, %v1630
    %1635 = vrot.lane.b32.xlu0 %v1634, 32
    %v1636 = vpop.permute.xlu0 %1635
    %vm1637 = vcmask 523520
    %s1638 = scalar_lea.vmem %s1, 184
    %1639 = vst.msk [vmem:[%s1638] sm:$0xff] %vm1637, %v1636
    %s1640 = scalar_lea.vmem [#allocation0], 1729
    %v1641 = vld [vmem:[%s1640] ss:$8 sm:$0xf]
    %s1642 = scalar_lea.vmem [#allocation0], 1729
    %v1643 = vld [vmem:[%s1642] ss:$8 sm:$0xf0]
    %vm1644 = vcmask 1047556
    %v1645 = vsel %vm1644, %v1643, %v1641
    %1646 = vrot.lane.b32.xlu0 %v1645, 32
    %v1647 = vpop.permute.xlu0 %1646
    %vm1648 = vcmask 523520
    %s1649 = scalar_lea.vmem %s1, 216
    %1650 = vst.msk [vmem:[%s1649] sm:$0xff] %vm1648, %v1647
    %s1651 = scalar_lea.vmem [#allocation0], 1985
    %v1652 = vld [vmem:[%s1651] ss:$8 sm:$0xf]
    %s1653 = scalar_lea.vmem [#allocation0], 1985
    %v1654 = vld [vmem:[%s1653] ss:$8 sm:$0xf0]
    %vm1655 = vcmask 1047556
    %v1656 = vsel %vm1655, %v1654, %v1652
    %1657 = vrot.lane.b32.xlu0 %v1656, 32
    %v1658 = vpop.permute.xlu0 %1657
    %vm1659 = vcmask 523520
    %s1660 = scalar_lea.vmem %s1, 248
    %1661 = vst.msk [vmem:[%s1660] sm:$0xff] %vm1659, %v1658

// kernel: classifier_forward.1
$region0: #{classifier_forward.1}
  #allocation0 [shape = 'u32[]', space=smem, size = 0x4, offset = 0x4, fixed_abs, tag = 'smem constant byte address 0x4 - core index']
  #allocation1 [shape = 'u32[72,128]{1,0:T(1,128)}', space=vmem, size = 0x9000, scoped, tag = 'internal scratch']
  #allocation2 [shape = 'f32[1,1]{1,0:T(1,128)S(1)}', space=vmem, size = 0x200, scoped, tag = 'scoped memory for classifier_forward.1']
  %s0 = inlined_call_operand.vmem [shape: f32[64,32], index: 0, kind: input, shape index: {}]
  %s1 = inlined_call_operand.vmem [shape: f32[4,64,64], index: 1, kind: input, shape index: {}]
  %s2 = inlined_call_operand.vmem [shape: f32[2,1,32], index: 2, kind: input, shape index: {}]
  %s3 = inlined_call_operand.vmem [shape: f32[2,32,96], index: 3, kind: input, shape index: {}]
  %s4 = inlined_call_operand.vmem [shape: f32[2,32,32], index: 4, kind: input, shape index: {}]
  %s5 = inlined_call_operand.vmem [shape: f32[2,1,32], index: 5, kind: input, shape index: {}]
  %s6 = inlined_call_operand.vmem [shape: f32[2,32,64], index: 6, kind: input, shape index: {}]
  %s7 = inlined_call_operand.vmem [shape: f32[2,64,32], index: 7, kind: input, shape index: {}]
  %s8 = inlined_call_operand.vmem [shape: f32[1,32], index: 8, kind: input, shape index: {}]
  %s9 = inlined_call_operand.vmem [shape: f32[1,32], index: 9, kind: input, shape index: {}]
  %s10 = inlined_call_operand.<no memory space> [shape: f32[1,1], index: 10, kind: input, shape index: {}]
  %s11 = inlined_call_operand.vmem [shape: f32[32,3], index: 11, kind: input, shape index: {}]
  %s12 = inlined_call_operand.vmem [shape: f32[1,3], index: 12, kind: input, shape index: {}]
  %s13 = inlined_call_operand.vmem [shape: f32[2,3], index: 13, kind: output, shape index: {}]
  %s14 = sld [smem:[#allocation0]]
  $region62: #{classifier_forward.1} parent=0
    _
  %s16 = ssub.s32 1, %s14
  %s17 = scalar_select 0, %s16, %s14
  %v18 = vstv %s10
  %19 = vst [vmem:[#allocation2] sm:$0x1] %v18
  // Predicated region
  $region2: #{classifier_forward.1} parent=0 // pred_check
    _
  $region3: #{classifier_forward.1} parent=0 // pred_check_branch
    %21 = sbr.rel (0) target = $region5
  $region4: #{classifier_forward.1} parent=0 // pred_region
    _
  $region5: #{classifier_forward.1} parent=0 // pred_fallthru
    _
  // Predicated region
  $region6: #{classifier_forward.1} parent=0 // pred_check
    _
  $region7: #{classifier_forward.1} parent=0 // pred_check_branch
    %23 = sbr.rel (0) target = $region9
  $region8: #{classifier_forward.1} parent=0 // pred_region
    _
  $region9: #{classifier_forward.1} parent=0 // pred_fallthru
    _
  // Predicated region
  $region10: #{classifier_forward.1} parent=0 // pred_check
    _
  $region11: #{classifier_forward.1} parent=0 // pred_check_branch
    %25 = sbr.rel (0) target = $region13
  $region12: #{classifier_forward.1} parent=0 // pred_region
    _
  $region13: #{classifier_forward.1} parent=0 // pred_fallthru
    _
  // Predicated region
  $region14: #{classifier_forward.1} parent=0 // pred_check
    _
  $region15: #{classifier_forward.1} parent=0 // pred_check_branch
    %27 = sbr.rel (0) target = $region17
  $region16: #{classifier_forward.1} parent=0 // pred_region
    _
  $region17: #{classifier_forward.1} parent=0 // pred_fallthru
    _
  // Predicated region
  $region18: #{classifier_forward.1} parent=0 // pred_check
    _
  $region19: #{classifier_forward.1} parent=0 // pred_check_branch
    %29 = sbr.rel (0) target = $region21
  $region20: #{classifier_forward.1} parent=0 // pred_region
    _
  $region21: #{classifier_forward.1} parent=0 // pred_fallthru
    _
  // Predicated region
  $region22: #{classifier_forward.1} parent=0 // pred_check
    _
  $region23: #{classifier_forward.1} parent=0 // pred_check_branch
    %31 = sbr.rel (0) target = $region25
  $region24: #{classifier_forward.1} parent=0 // pred_region
    _
  $region25: #{classifier_forward.1} parent=0 // pred_fallthru
    _
  // Predicated region
  $region26: #{classifier_forward.1} parent=0 // pred_check
    _
  $region27: #{classifier_forward.1} parent=0 // pred_check_branch
    %33 = sbr.rel (0) target = $region29
  $region28: #{classifier_forward.1} parent=0 // pred_region
    _
  $region29: #{classifier_forward.1} parent=0 // pred_fallthru
    _
  // Predicated region
  $region30: #{classifier_forward.1} parent=0 // pred_check
    _
  $region31: #{classifier_forward.1} parent=0 // pred_check_branch
    %35 = sbr.rel (0) target = $region33
  $region32: #{classifier_forward.1} parent=0 // pred_region
    _
  $region33: #{classifier_forward.1} parent=0 // pred_fallthru
    _
  // Predicated region
  $region34: #{classifier_forward.1} parent=0 // pred_check
    _
  $region35: #{classifier_forward.1} parent=0 // pred_check_branch
    %37 = sbr.rel (0) target = $region37
  $region36: #{classifier_forward.1} parent=0 // pred_region
    _
  $region37: #{classifier_forward.1} parent=0 // pred_fallthru
    _
  // Predicated region
  $region38: #{classifier_forward.1} parent=0 // pred_check
    _
  $region39: #{classifier_forward.1} parent=0 // pred_check_branch
    %39 = sbr.rel (0) target = $region41
  $region40: #{classifier_forward.1} parent=0 // pred_region
    _
  $region41: #{classifier_forward.1} parent=0 // pred_fallthru
    _
  // Predicated region
  $region42: #{classifier_forward.1} parent=0 // pred_check
    _
  $region43: #{classifier_forward.1} parent=0 // pred_check_branch
    %41 = sbr.rel (0) target = $region45
  $region44: #{classifier_forward.1} parent=0 // pred_region
    _
  $region45: #{classifier_forward.1} parent=0 // pred_fallthru
    _
  // Predicated region
  $region46: #{classifier_forward.1} parent=0 // pred_check
    _
  $region47: #{classifier_forward.1} parent=0 // pred_check_branch
    %43 = sbr.rel (0) target = $region49
  $region48: #{classifier_forward.1} parent=0 // pred_region
    _
  $region49: #{classifier_forward.1} parent=0 // pred_fallthru
    _
  // Predicated region
  $region50: #{classifier_forward.1} parent=0 // pred_check
    _
  $region51: #{classifier_forward.1} parent=0 // pred_check_branch
    %45 = sbr.rel (0) target = $region53
  $region52: #{classifier_forward.1} parent=0 // pred_region
    _
  $region53: #{classifier_forward.1} parent=0 // pred_fallthru
    _
  %v46 = vld [vmem:[%s0] sm:$0xff]
  %v47 = vld [vmem:[%s0 + $0x8] sm:$0xff]
  %v48 = vld [vmem:[%s0 + $0x10] sm:$0xff]
  %v49 = vld [vmem:[%s0 + $0x18] sm:$0xff]
  %v50 = vld [vmem:[%s0 + $0x20] sm:$0xff]
  %v51 = vld [vmem:[%s0 + $0x28] sm:$0xff]
  %v52 = vld [vmem:[%s0 + $0x30] sm:$0xff]
  %v53 = vld [vmem:[%s0 + $0x38] sm:$0xff]
  %v54 = vld [vmem:[%s2] sm:$0x1]
  %v55 = vmul.f32 %v46, %v46
  %v56 = vmul.f32 %v47, %v47
  %v57 = vmul.f32 %v48, %v48
  %v58 = vmul.f32 %v49, %v49
  %v59 = vmul.f32 %v50, %v50
  %v60 = vmul.f32 %v51, %v51
  %v61 = vmul.f32 %v52, %v52
  %v62 = vmul.f32 %v53, %v53
  %vm63 = vcmask 261120
  %v64 = vsel %vm63, %v55, 0.0
  %65 = vadd.xlane.f32.xlu0 %v64
  %v66 = vpop.xlane.xlu0 %65
  %v67 = vsel %vm63, %v56, 0.0
  %68 = vadd.xlane.f32.xlu0 %v67
  %v69 = vpop.xlane.xlu0 %68
  %v70 = vsel %vm63, %v57, 0.0
  %71 = vadd.xlane.f32.xlu0 %v70
  %v72 = vpop.xlane.xlu0 %71
  %v73 = vsel %vm63, %v58, 0.0
  %74 = vadd.xlane.f32.xlu0 %v73
  %v75 = vpop.xlane.xlu0 %74
  %v76 = vsel %vm63, %v59, 0.0
  %77 = vadd.xlane.f32.xlu0 %v76
  %v78 = vpop.xlane.xlu0 %77
  %v79 = vsel %vm63, %v60, 0.0
  %80 = vadd.xlane.f32.xlu0 %v79
  %v81 = vpop.xlane.xlu0 %80
  %v82 = vsel %vm63, %v61, 0.0
  %83 = vadd.xlane.f32.xlu0 %v82
  %v84 = vpop.xlane.xlu0 %83
  %v85 = vsel %vm63, %v62, 0.0
  %86 = vadd.xlane.f32.xlu0 %v85
  %v87 = vpop.xlane.xlu0 %86
  %v88 = vrcp.pop 32.0
  %v89 = vmul.f32 32.0, %v88
  %v90 = vsub.f32 1.0, %v89
  %v91 = vmul.f32 %v88, %v90
  %v92 = vadd.f32 %v88, %v91
  %vm93 = vweird.f32 %v88
  %v94 = vsel %vm93, %v88, %v92
  %v95 = vmul.f32 %v66, %v94
  %v96 = vmul.f32 %v69, %v94
  %v97 = vmul.f32 %v72, %v94
  %v98 = vmul.f32 %v75, %v94
  %v99 = vmul.f32 %v78, %v94
  %v100 = vmul.f32 %v81, %v94
  %v101 = vmul.f32 %v84, %v94
  %v102 = vmul.f32 %v87, %v94
  %v103 = vadd.f32 %v95, 1e-06
  %v104 = vadd.f32 %v96, 1e-06
  %v105 = vadd.f32 %v97, 1e-06
  %v106 = vadd.f32 %v98, 1e-06
  %v107 = vadd.f32 %v99, 1e-06
  %v108 = vadd.f32 %v100, 1e-06
  %v109 = vadd.f32 %v101, 1e-06
  %v110 = vadd.f32 %v102, 1e-06
  %v111 = vrsqrt.pop %v103
  %v112 = vmul.f32 %v111, %v103
  %v113 = vmul.f32 %v112, %v111
  %v114 = vmul.f32 0.5, %v113
  %v115 = vsub.f32 1.5, %v114
  %v116 = vmul.f32 %v111, %v115
  %vm117 = vweird.f32 %v103
  %vm118 = vweird.f32 %v111
  %vm119 = vmor %vm117, %vm118
  %v120 = vsel %vm119, %v111, %v116
  %v121 = vrsqrt.pop %v104
  %v122 = vmul.f32 %v121, %v104
  %v123 = vmul.f32 %v122, %v121
  %v124 = vmul.f32 0.5, %v123
  %v125 = vsub.f32 1.5, %v124
  %v126 = vmul.f32 %v121, %v125
  %vm127 = vweird.f32 %v104
  %vm128 = vweird.f32 %v121
  %vm129 = vmor %vm127, %vm128
  %v130 = vsel %vm129, %v121, %v126
  %v131 = vrsqrt.pop %v105
  %v132 = vmul.f32 %v131, %v105
  %v133 = vmul.f32 %v132, %v131
  %v134 = vmul.f32 0.5, %v133
  %v135 = vsub.f32 1.5, %v134
  %v136 = vmul.f32 %v131, %v135
  %vm137 = vweird.f32 %v105
  %vm138 = vweird.f32 %v131
  %vm139 = vmor %vm137, %vm138
  %v140 = vsel %vm139, %v131, %v136
  %v141 = vrsqrt.pop %v106
  %v142 = vmul.f32 %v141, %v106
  %v143 = vmul.f32 %v142, %v141
  %v144 = vmul.f32 0.5, %v143
  %v145 = vsub.f32 1.5, %v144
  %v146 = vmul.f32 %v141, %v145
  %vm147 = vweird.f32 %v106
  %vm148 = vweird.f32 %v141
  %vm149 = vmor %vm147, %vm148
  %v150 = vsel %vm149, %v141, %v146
  %v151 = vrsqrt.pop %v107
  %v152 = vmul.f32 %v151, %v107
  %v153 = vmul.f32 %v152, %v151
  %v154 = vmul.f32 0.5, %v153
  %v155 = vsub.f32 1.5, %v154
  %v156 = vmul.f32 %v151, %v155
  %vm157 = vweird.f32 %v107
  %vm158 = vweird.f32 %v151
  %vm159 = vmor %vm157, %vm158
  %v160 = vsel %vm159, %v151, %v156
  %v161 = vrsqrt.pop %v108
  %v162 = vmul.f32 %v161, %v108
  %v163 = vmul.f32 %v162, %v161
  %v164 = vmul.f32 0.5, %v163
  %v165 = vsub.f32 1.5, %v164
  %v166 = vmul.f32 %v161, %v165
  %vm167 = vweird.f32 %v108
  %vm168 = vweird.f32 %v161
  %vm169 = vmor %vm167, %vm168
  %v170 = vsel %vm169, %v161, %v166
  %v171 = vrsqrt.pop %v109
  %v172 = vmul.f32 %v171, %v109
  %v173 = vmul.f32 %v172, %v171
  %v174 = vmul.f32 0.5, %v173
  %v175 = vsub.f32 1.5, %v174
  %v176 = vmul.f32 %v171, %v175
  %vm177 = vweird.f32 %v109
  %vm178 = vweird.f32 %v171
  %vm179 = vmor %vm177, %vm178
  %v180 = vsel %vm179, %v171, %v176
  %v181 = vrsqrt.pop %v110
  %v182 = vmul.f32 %v181, %v110
  %v183 = vmul.f32 %v182, %v181
  %v184 = vmul.f32 0.5, %v183
  %v185 = vsub.f32 1.5, %v184
  %v186 = vmul.f32 %v181, %v185
  %vm187 = vweird.f32 %v110
  %vm188 = vweird.f32 %v181
  %vm189 = vmor %vm187, %vm188
  %v190 = vsel %vm189, %v181, %v186
  %v191 = vmul.f32 %v46, %v120
  %v192 = vmul.f32 %v47, %v130
  %v193 = vmul.f32 %v48, %v140
  %v194 = vmul.f32 %v49, %v150
  %v195 = vmul.f32 %v50, %v160
  %v196 = vmul.f32 %v51, %v170
  %v197 = vmul.f32 %v52, %v180
  %v198 = vmul.f32 %v53, %v190
  %v200 = vperm.slane %v54, 0
  %v202 = vmul.f32 %v191, %v200
  %v203 = vmul.f32 %v192, %v200
  %v204 = vmul.f32 %v193, %v200
  %v205 = vmul.f32 %v194, %v200
  %v206 = vmul.f32 %v195, %v200
  %v207 = vmul.f32 %v196, %v200
  %v208 = vmul.f32 %v197, %v200
  %v209 = vmul.f32 %v198, %v200
  %v210 = vld [vmem:[%s3] sm:$0xff]
  %v211 = vld [vmem:[%s3 + $0x8] sm:$0xff]
  %v212 = vld [vmem:[%s3 + $0x10] sm:$0xff]
  %v213 = vld [vmem:[%s3 + $0x18] sm:$0xff]
  %v215 = vsel %vm63, %v202, 0
  %v218 = vsel %vm63, %v203, 0
  %v221 = vsel %vm63, %v204, 0
  %v224 = vsel %vm63, %v205, 0
  %v227 = vsel %vm63, %v206, 0
  %v230 = vsel %vm63, %v207, 0
  %v233 = vsel %vm63, %v208, 0
  %v236 = vsel %vm63, %v209, 0
  %238 = vmatpush.msra.mxu0 0.0
  %239 = vmatpush.msra.mxu0 0.0
  %240 = vmatpush.msra.mxu0 0.0
  %241 = vmatpush.msra.mxu0 0.0
  %242 = vmatpush.msra.mxu0 0.0
  %243 = vmatpush.msra.mxu0 0.0
  %244 = vmatpush.msra.mxu0 0.0
  %245 = vmatpush.msra.mxu0 0.0
  %246 = vmatpush.msra.mxu0 0.0
  %247 = vmatpush.msra.mxu0 0.0
  %248 = vmatpush.msra.mxu0 0.0
  %249 = vmatpush.msra.mxu0 0.0
  %250 = vmatpush.msra.mxu0 %v213
  %251 = vmatpush.msra.mxu0 %v212
  %252 = vmatpush.msra.mxu0 %v211
  %253 = vmatpush.msra.mxu0 %v210
  %254 = vmatmul.f32.gmra.mxu0 %v215
  %v255 = vpop.f32.mrf.mxu0
  %v256 = vadd.f32 0.0, %v255
  %257 = vmatmul.f32.gmra.mxu0 %v218
  %v258 = vpop.f32.mrf.mxu0
  %v259 = vadd.f32 0.0, %v258
  %260 = vmatmul.f32.gmra.mxu0 %v221
  %v261 = vpop.f32.mrf.mxu0
  %v262 = vadd.f32 0.0, %v261
  %263 = vmatmul.f32.gmra.mxu0 %v224
  %v264 = vpop.f32.mrf.mxu0
  %v265 = vadd.f32 0.0, %v264
  %266 = vmatmul.f32.gmra.mxu0 %v227
  %v267 = vpop.f32.mrf.mxu0
  %v268 = vadd.f32 0.0, %v267
  %269 = vmatmul.f32.gmra.mxu0 %v230
  %v270 = vpop.f32.mrf.mxu0
  %v271 = vadd.f32 0.0, %v270
  %272 = vmatmul.f32.gmra.mxu0 %v233
  %v273 = vpop.f32.mrf.mxu0
  %v274 = vadd.f32 0.0, %v273
  %275 = vmatmul.f32.gmra.mxu0 %v236
  %v276 = vpop.f32.mrf.mxu0
  %v277 = vadd.f32 0.0, %v276
  %278 = vdwg.mxu0
  %v279 = vld [vmem:[%s4] sm:$0xff]
  %v280 = vld [vmem:[%s4 + $0x8] sm:$0xff]
  %v281 = vld [vmem:[%s4 + $0x10] sm:$0xff]
  %v282 = vld [vmem:[%s4 + $0x18] sm:$0xff]
  %v283 = vld [vmem:[%s1] sm:$0xff]
  %v284 = vld [vmem:[%s1 + $0x8] sm:$0xff]
  %v285 = vld [vmem:[%s1 + $0x10] sm:$0xff]
  %v286 = vld [vmem:[%s1 + $0x18] sm:$0xff]
  %v287 = vld [vmem:[%s1 + $0x20] sm:$0xff]
  %v288 = vld [vmem:[%s1 + $0x28] sm:$0xff]
  %v289 = vld [vmem:[%s1 + $0x30] sm:$0xff]
  %v290 = vld [vmem:[%s1 + $0x38] sm:$0xff]
  %299 = vrot.lane.b32.xlu0 %v256, 96
  %v300 = vpop.permute.xlu0 %299
  %301 = vrot.lane.b32.xlu0 %v259, 96
  %v302 = vpop.permute.xlu0 %301
  %303 = vrot.lane.b32.xlu0 %v262, 96
  %v304 = vpop.permute.xlu0 %303
  %305 = vrot.lane.b32.xlu0 %v265, 96
  %v306 = vpop.permute.xlu0 %305
  %307 = vrot.lane.b32.xlu0 %v268, 96
  %v308 = vpop.permute.xlu0 %307
  %309 = vrot.lane.b32.xlu0 %v271, 96
  %v310 = vpop.permute.xlu0 %309
  %311 = vrot.lane.b32.xlu0 %v274, 96
  %v312 = vpop.permute.xlu0 %311
  %313 = vrot.lane.b32.xlu0 %v277, 96
  %v314 = vpop.permute.xlu0 %313
  %vm315 = vcmask 64512
  %v316 = vsel %vm315, %v256, 0
  %v318 = vsel %vm315, %v259, 0
  %v320 = vsel %vm315, %v262, 0
  %v322 = vsel %vm315, %v265, 0
  %v324 = vsel %vm315, %v268, 0
  %v326 = vsel %vm315, %v271, 0
  %v328 = vsel %vm315, %v274, 0
  %v330 = vsel %vm315, %v277, 0
  %v332 = vsel %vm315, %v300, 0
  %v334 = vsel %vm315, %v302, 0
  %v336 = vsel %vm315, %v304, 0
  %v338 = vsel %vm315, %v306, 0
  %v340 = vsel %vm315, %v308, 0
  %v342 = vsel %vm315, %v310, 0
  %v344 = vsel %vm315, %v312, 0
  %v346 = vsel %vm315, %v314, 0
  %348 = vmatpush.xpose.msra.mxu0 0.0
  %349 = vmatpush.xpose.msra.mxu0 0.0
  %350 = vmatpush.xpose.msra.mxu0 0.0
  %351 = vmatpush.xpose.msra.mxu0 0.0
  %352 = vmatpush.xpose.msra.mxu0 0.0
  %353 = vmatpush.xpose.msra.mxu0 0.0
  %354 = vmatpush.xpose.msra.mxu0 0.0
  %355 = vmatpush.xpose.msra.mxu0 0.0
  %356 = vmatpush.xpose.msra.mxu0 %v346
  %357 = vmatpush.xpose.msra.mxu0 %v344
  %358 = vmatpush.xpose.msra.mxu0 %v342
  %359 = vmatpush.xpose.msra.mxu0 %v340
  %360 = vmatpush.xpose.msra.mxu0 %v338
  %361 = vmatpush.xpose.msra.mxu0 %v336
  %362 = vmatpush.xpose.msra.mxu0 %v334
  %363 = vmatpush.xpose.msra.mxu0 %v332
  %364 = vmatmul.f32.gmra.mxu0 %v316
  %v365 = vpop.f32.mrf.mxu0
  %v366 = vadd.f32 %v283, %v365
  %367 = vmatmul.f32.gmra.mxu0 %v318
  %v368 = vpop.f32.mrf.mxu0
  %v369 = vadd.f32 %v284, %v368
  %370 = vmatmul.f32.gmra.mxu0 %v320
  %v371 = vpop.f32.mrf.mxu0
  %v372 = vadd.f32 %v285, %v371
  %373 = vmatmul.f32.gmra.mxu0 %v322
  %v374 = vpop.f32.mrf.mxu0
  %v375 = vadd.f32 %v286, %v374
  %376 = vmatmul.f32.gmra.mxu0 %v324
  %v377 = vpop.f32.mrf.mxu0
  %v378 = vadd.f32 %v287, %v377
  %379 = vmatmul.f32.gmra.mxu0 %v326
  %v380 = vpop.f32.mrf.mxu0
  %v381 = vadd.f32 %v288, %v380
  %382 = vmatmul.f32.gmra.mxu0 %v328
  %v383 = vpop.f32.mrf.mxu0
  %v384 = vadd.f32 %v289, %v383
  %385 = vmatmul.f32.gmra.mxu0 %v330
  %v386 = vpop.f32.mrf.mxu0
  %v387 = vadd.f32 %v290, %v386
  %388 = vdwg.mxu0
  %vm389 = vcmask 523264
  %v390 = vsel %vm389, %v366, -inf
  %391 = vmax.xlane.f32.xlu0 %v390
  %v392 = vpop.xlane.xlu0 %391
  %v393 = vsel %vm389, %v369, -inf
  %394 = vmax.xlane.f32.xlu0 %v393
  %v395 = vpop.xlane.xlu0 %394
  %v396 = vsel %vm389, %v372, -inf
  %397 = vmax.xlane.f32.xlu0 %v396
  %v398 = vpop.xlane.xlu0 %397
  %v399 = vsel %vm389, %v375, -inf
  %400 = vmax.xlane.f32.xlu0 %v399
  %v401 = vpop.xlane.xlu0 %400
  %v402 = vsel %vm389, %v378, -inf
  %403 = vmax.xlane.f32.xlu0 %v402
  %v404 = vpop.xlane.xlu0 %403
  %v405 = vsel %vm389, %v381, -inf
  %406 = vmax.xlane.f32.xlu0 %v405
  %v407 = vpop.xlane.xlu0 %406
  %v408 = vsel %vm389, %v384, -inf
  %409 = vmax.xlane.f32.xlu0 %v408
  %v410 = vpop.xlane.xlu0 %409
  %v411 = vsel %vm389, %v387, -inf
  %412 = vmax.xlane.f32.xlu0 %v411
  %v413 = vpop.xlane.xlu0 %412
  %v414 = vsub.f32 %v366, %v392
  %v415 = vsub.f32 %v369, %v395
  %v416 = vsub.f32 %v372, %v398
  %v417 = vsub.f32 %v375, %v401
  %v418 = vsub.f32 %v378, %v404
  %v419 = vsub.f32 %v381, %v407
  %v420 = vsub.f32 %v384, %v410
  %v421 = vsub.f32 %v387, %v413
  %v422 = vmul.f32 %v414, 1.442695
  %v423 = vpow.pop %v422
  %v424 = vmul.f32 %v415, 1.442695
  %v425 = vpow.pop %v424
  %v426 = vmul.f32 %v416, 1.442695
  %v427 = vpow.pop %v426
  %v428 = vmul.f32 %v417, 1.442695
  %v429 = vpow.pop %v428
  %v430 = vmul.f32 %v418, 1.442695
  %v431 = vpow.pop %v430
  %v432 = vmul.f32 %v419, 1.442695
  %v433 = vpow.pop %v432
  %v434 = vmul.f32 %v420, 1.442695
  %v435 = vpow.pop %v434
  %v436 = vmul.f32 %v421, 1.442695
  %v437 = vpow.pop %v436
  %v438 = vsel %vm389, %v423, 0.0
  %439 = vadd.xlane.f32.xlu0 %v438
  %v440 = vpop.xlane.xlu0 %439
  %v441 = vsel %vm389, %v425, 0.0
  %442 = vadd.xlane.f32.xlu0 %v441
  %v443 = vpop.xlane.xlu0 %442
  %v444 = vsel %vm389, %v427, 0.0
  %445 = vadd.xlane.f32.xlu0 %v444
  %v446 = vpop.xlane.xlu0 %445
  %v447 = vsel %vm389, %v429, 0.0
  %448 = vadd.xlane.f32.xlu0 %v447
  %v449 = vpop.xlane.xlu0 %448
  %v450 = vsel %vm389, %v431, 0.0
  %451 = vadd.xlane.f32.xlu0 %v450
  %v452 = vpop.xlane.xlu0 %451
  %v453 = vsel %vm389, %v433, 0.0
  %454 = vadd.xlane.f32.xlu0 %v453
  %v455 = vpop.xlane.xlu0 %454
  %v456 = vsel %vm389, %v435, 0.0
  %457 = vadd.xlane.f32.xlu0 %v456
  %v458 = vpop.xlane.xlu0 %457
  %v459 = vsel %vm389, %v437, 0.0
  %460 = vadd.xlane.f32.xlu0 %v459
  %v461 = vpop.xlane.xlu0 %460
  %v462 = vrcp.pop %v440
  %v463 = vrcp.pop %v443
  %v464 = vrcp.pop %v446
  %v465 = vrcp.pop %v449
  %v466 = vrcp.pop %v452
  %v467 = vrcp.pop %v455
  %v468 = vrcp.pop %v458
  %v469 = vrcp.pop %v461
  %v470 = vmul.f32 %v423, %v462
  %v471 = vmul.f32 %v425, %v463
  %v472 = vmul.f32 %v427, %v464
  %v473 = vmul.f32 %v429, %v465
  %v474 = vmul.f32 %v431, %v466
  %v475 = vmul.f32 %v433, %v467
  %v476 = vmul.f32 %v435, %v468
  %v477 = vmul.f32 %v437, %v469
  %478 = vrot.lane.b32.xlu0 %v256, 64
  %v479 = vpop.permute.xlu0 %478
  %480 = vrot.lane.b32.xlu0 %v259, 64
  %v481 = vpop.permute.xlu0 %480
  %482 = vrot.lane.b32.xlu0 %v262, 64
  %v483 = vpop.permute.xlu0 %482
  %484 = vrot.lane.b32.xlu0 %v265, 64
  %v485 = vpop.permute.xlu0 %484
  %486 = vrot.lane.b32.xlu0 %v268, 64
  %v487 = vpop.permute.xlu0 %486
  %488 = vrot.lane.b32.xlu0 %v271, 64
  %v489 = vpop.permute.xlu0 %488
  %490 = vrot.lane.b32.xlu0 %v274, 64
  %v491 = vpop.permute.xlu0 %490
  %492 = vrot.lane.b32.xlu0 %v277, 64
  %v493 = vpop.permute.xlu0 %492
  %v503 = vsel %vm389, %v470, 0
  %v506 = vsel %vm389, %v471, 0
  %v509 = vsel %vm389, %v472, 0
  %v512 = vsel %vm389, %v473, 0
  %v515 = vsel %vm389, %v474, 0
  %v518 = vsel %vm389, %v475, 0
  %v521 = vsel %vm389, %v476, 0
  %v524 = vsel %vm389, %v477, 0
  %526 = vmatpush.msra.mxu0 0.0
  %527 = vmatpush.msra.mxu0 0.0
  %528 = vmatpush.msra.mxu0 0.0
  %529 = vmatpush.msra.mxu0 0.0
  %530 = vmatpush.msra.mxu0 0.0
  %531 = vmatpush.msra.mxu0 0.0
  %532 = vmatpush.msra.mxu0 0.0
  %533 = vmatpush.msra.mxu0 0.0
  %534 = vmatpush.msra.mxu0 %v493
  %535 = vmatpush.msra.mxu0 %v491
  %536 = vmatpush.msra.mxu0 %v489
  %537 = vmatpush.msra.mxu0 %v487
  %538 = vmatpush.msra.mxu0 %v485
  %539 = vmatpush.msra.mxu0 %v483
  %540 = vmatpush.msra.mxu0 %v481
  %541 = vmatpush.msra.mxu0 %v479
  %542 = vmatmul.f32.gmra.mxu0 %v503
  %v543 = vpop.f32.mrf.mxu0
  %v544 = vadd.f32 0.0, %v543
  %545 = vmatmul.f32.gmra.mxu0 %v506
  %v546 = vpop.f32.mrf.mxu0
  %v547 = vadd.f32 0.0, %v546
  %548 = vmatmul.f32.gmra.mxu0 %v509
  %v549 = vpop.f32.mrf.mxu0
  %v550 = vadd.f32 0.0, %v549
  %551 = vmatmul.f32.gmra.mxu0 %v512
  %v552 = vpop.f32.mrf.mxu0
  %v553 = vadd.f32 0.0, %v552
  %554 = vmatmul.f32.gmra.mxu0 %v515
  %v555 = vpop.f32.mrf.mxu0
  %v556 = vadd.f32 0.0, %v555
  %557 = vmatmul.f32.gmra.mxu0 %v518
  %v558 = vpop.f32.mrf.mxu0
  %v559 = vadd.f32 0.0, %v558
  %560 = vmatmul.f32.gmra.mxu0 %v521
  %v561 = vpop.f32.mrf.mxu0
  %v562 = vadd.f32 0.0, %v561
  %563 = vmatmul.f32.gmra.mxu0 %v524
  %v564 = vpop.f32.mrf.mxu0
  %v565 = vadd.f32 0.0, %v564
  %566 = vdwg.mxu0
  %s567 = scalar_lea.vmem %s1, 64
  %v568 = vld [vmem:[%s567] sm:$0xff]
  %v569 = vld [vmem:[%s567 + $0x8] sm:$0xff]
  %v570 = vld [vmem:[%s567 + $0x10] sm:$0xff]
  %v571 = vld [vmem:[%s567 + $0x18] sm:$0xff]
  %v572 = vld [vmem:[%s567 + $0x20] sm:$0xff]
  %v573 = vld [vmem:[%s567 + $0x28] sm:$0xff]
  %v574 = vld [vmem:[%s567 + $0x30] sm:$0xff]
  %v575 = vld [vmem:[%s567 + $0x38] sm:$0xff]
  %576 = vrot.lane.b32.xlu0 %v256, 120
  %v577 = vpop.permute.xlu0 %576
  %578 = vrot.lane.b32.xlu0 %v259, 120
  %v579 = vpop.permute.xlu0 %578
  %580 = vrot.lane.b32.xlu0 %v262, 120
  %v581 = vpop.permute.xlu0 %580
  %582 = vrot.lane.b32.xlu0 %v265, 120
  %v583 = vpop.permute.xlu0 %582
  %584 = vrot.lane.b32.xlu0 %v268, 120
  %v585 = vpop.permute.xlu0 %584
  %586 = vrot.lane.b32.xlu0 %v271, 120
  %v587 = vpop.permute.xlu0 %586
  %588 = vrot.lane.b32.xlu0 %v274, 120
  %v589 = vpop.permute.xlu0 %588
  %590 = vrot.lane.b32.xlu0 %v277, 120
  %v591 = vpop.permute.xlu0 %590
  %592 = vrot.lane.b32.xlu0 %v256, 88
  %v593 = vpop.permute.xlu0 %592
  %594 = vrot.lane.b32.xlu0 %v259, 88
  %v595 = vpop.permute.xlu0 %594
  %596 = vrot.lane.b32.xlu0 %v262, 88
  %v597 = vpop.permute.xlu0 %596
  %598 = vrot.lane.b32.xlu0 %v265, 88
  %v599 = vpop.permute.xlu0 %598
  %600 = vrot.lane.b32.xlu0 %v268, 88
  %v601 = vpop.permute.xlu0 %600
  %602 = vrot.lane.b32.xlu0 %v271, 88
  %v603 = vpop.permute.xlu0 %602
  %604 = vrot.lane.b32.xlu0 %v274, 88
  %v605 = vpop.permute.xlu0 %604
  %606 = vrot.lane.b32.xlu0 %v277, 88
  %v607 = vpop.permute.xlu0 %606
  %v608 = vsel %vm315, %v577, 0
  %v610 = vsel %vm315, %v579, 0
  %v612 = vsel %vm315, %v581, 0
  %v614 = vsel %vm315, %v583, 0
  %v616 = vsel %vm315, %v585, 0
  %v618 = vsel %vm315, %v587, 0
  %v620 = vsel %vm315, %v589, 0
  %v622 = vsel %vm315, %v591, 0
  %v624 = vsel %vm315, %v593, 0
  %v626 = vsel %vm315, %v595, 0
  %v628 = vsel %vm315, %v597, 0
  %v630 = vsel %vm315, %v599, 0
  %v632 = vsel %vm315, %v601, 0
  %v634 = vsel %vm315, %v603, 0
  %v636 = vsel %vm315, %v605, 0
  %v638 = vsel %vm315, %v607, 0
  %640 = vmatpush.xpose.msra.mxu0 0.0
  %641 = vmatpush.xpose.msra.mxu0 0.0
  %642 = vmatpush.xpose.msra.mxu0 0.0
  %643 = vmatpush.xpose.msra.mxu0 0.0
  %644 = vmatpush.xpose.msra.mxu0 0.0
  %645 = vmatpush.xpose.msra.mxu0 0.0
  %646 = vmatpush.xpose.msra.mxu0 0.0
  %647 = vmatpush.xpose.msra.mxu0 0.0
  %648 = vmatpush.xpose.msra.mxu0 %v638
  %649 = vmatpush.xpose.msra.mxu0 %v636
  %650 = vmatpush.xpose.msra.mxu0 %v634
  %651 = vmatpush.xpose.msra.mxu0 %v632
  %652 = vmatpush.xpose.msra.mxu0 %v630
  %653 = vmatpush.xpose.msra.mxu0 %v628
  %654 = vmatpush.xpose.msra.mxu0 %v626
  %655 = vmatpush.xpose.msra.mxu0 %v624
  %656 = vmatmul.f32.gmra.mxu0 %v608
  %v657 = vpop.f32.mrf.mxu0
  %v658 = vadd.f32 %v568, %v657
  %659 = vmatmul.f32.gmra.mxu0 %v610
  %v660 = vpop.f32.mrf.mxu0
  %v661 = vadd.f32 %v569, %v660
  %662 = vmatmul.f32.gmra.mxu0 %v612
  %v663 = vpop.f32.mrf.mxu0
  %v664 = vadd.f32 %v570, %v663
  %665 = vmatmul.f32.gmra.mxu0 %v614
  %v666 = vpop.f32.mrf.mxu0
  %v667 = vadd.f32 %v571, %v666
  %668 = vmatmul.f32.gmra.mxu0 %v616
  %v669 = vpop.f32.mrf.mxu0
  %v670 = vadd.f32 %v572, %v669
  %671 = vmatmul.f32.gmra.mxu0 %v618
  %v672 = vpop.f32.mrf.mxu0
  %v673 = vadd.f32 %v573, %v672
  %674 = vmatmul.f32.gmra.mxu0 %v620
  %v675 = vpop.f32.mrf.mxu0
  %v676 = vadd.f32 %v574, %v675
  %677 = vmatmul.f32.gmra.mxu0 %v622
  %v678 = vpop.f32.mrf.mxu0
  %v679 = vadd.f32 %v575, %v678
  %680 = vdwg.mxu0
  %v681 = vsel %vm389, %v658, -inf
  %682 = vmax.xlane.f32.xlu0 %v681
  %v683 = vpop.xlane.xlu0 %682
  %v684 = vsel %vm389, %v661, -inf
  %685 = vmax.xlane.f32.xlu0 %v684
  %v686 = vpop.xlane.xlu0 %685
  %v687 = vsel %vm389, %v664, -inf
  %688 = vmax.xlane.f32.xlu0 %v687
  %v689 = vpop.xlane.xlu0 %688
  %v690 = vsel %vm389, %v667, -inf
  %691 = vmax.xlane.f32.xlu0 %v690
  %v692 = vpop.xlane.xlu0 %691
  %v693 = vsel %vm389, %v670, -inf
  %694 = vmax.xlane.f32.xlu0 %v693
  %v695 = vpop.xlane.xlu0 %694
  %v696 = vsel %vm389, %v673, -inf
  %697 = vmax.xlane.f32.xlu0 %v696
  %v698 = vpop.xlane.xlu0 %697
  %v699 = vsel %vm389, %v676, -inf
  %700 = vmax.xlane.f32.xlu0 %v699
  %v701 = vpop.xlane.xlu0 %700
  %v702 = vsel %vm389, %v679, -inf
  %703 = vmax.xlane.f32.xlu0 %v702
  %v704 = vpop.xlane.xlu0 %703
  %v705 = vsub.f32 %v658, %v683
  %v706 = vsub.f32 %v661, %v686
  %v707 = vsub.f32 %v664, %v689
  %v708 = vsub.f32 %v667, %v692
  %v709 = vsub.f32 %v670, %v695
  %v710 = vsub.f32 %v673, %v698
  %v711 = vsub.f32 %v676, %v701
  %v712 = vsub.f32 %v679, %v704
  %v713 = vmul.f32 %v705, 1.442695
  %v714 = vpow.pop %v713
  %v715 = vmul.f32 %v706, 1.442695
  %v716 = vpow.pop %v715
  %v717 = vmul.f32 %v707, 1.442695
  %v718 = vpow.pop %v717
  %v719 = vmul.f32 %v708, 1.442695
  %v720 = vpow.pop %v719
  %v721 = vmul.f32 %v709, 1.442695
  %v722 = vpow.pop %v721
  %v723 = vmul.f32 %v710, 1.442695
  %v724 = vpow.pop %v723
  %v725 = vmul.f32 %v711, 1.442695
  %v726 = vpow.pop %v725
  %v727 = vmul.f32 %v712, 1.442695
  %v728 = vpow.pop %v727
  %v729 = vsel %vm389, %v714, 0.0
  %730 = vadd.xlane.f32.xlu0 %v729
  %v731 = vpop.xlane.xlu0 %730
  %v732 = vsel %vm389, %v716, 0.0
  %733 = vadd.xlane.f32.xlu0 %v732
  %v734 = vpop.xlane.xlu0 %733
  %v735 = vsel %vm389, %v718, 0.0
  %736 = vadd.xlane.f32.xlu0 %v735
  %v737 = vpop.xlane.xlu0 %736
  %v738 = vsel %vm389, %v720, 0.0
  %739 = vadd.xlane.f32.xlu0 %v738
  %v740 = vpop.xlane.xlu0 %739
  %v741 = vsel %vm389, %v722, 0.0
  %742 = vadd.xlane.f32.xlu0 %v741
  %v743 = vpop.xlane.xlu0 %742
  %v744 = vsel %vm389, %v724, 0.0
  %745 = vadd.xlane.f32.xlu0 %v744
  %v746 = vpop.xlane.xlu0 %745
  %v747 = vsel %vm389, %v726, 0.0
  %748 = vadd.xlane.f32.xlu0 %v747
  %v749 = vpop.xlane.xlu0 %748
  %v750 = vsel %vm389, %v728, 0.0
  %751 = vadd.xlane.f32.xlu0 %v750
  %v752 = vpop.xlane.xlu0 %751
  %v753 = vrcp.pop %v731
  %v754 = vrcp.pop %v734
  %v755 = vrcp.pop %v737
  %v756 = vrcp.pop %v740
  %v757 = vrcp.pop %v743
  %v758 = vrcp.pop %v746
  %v759 = vrcp.pop %v749
  %v760 = vrcp.pop %v752
  %v761 = vmul.f32 %v714, %v753
  %v762 = vmul.f32 %v716, %v754
  %v763 = vmul.f32 %v718, %v755
  %v764 = vmul.f32 %v720, %v756
  %v765 = vmul.f32 %v722, %v757
  %v766 = vmul.f32 %v724, %v758
  %v767 = vmul.f32 %v726, %v759
  %v768 = vmul.f32 %v728, %v760
  %769 = vrot.lane.b32.xlu0 %v256, 56
  %v770 = vpop.permute.xlu0 %769
  %771 = vrot.lane.b32.xlu0 %v259, 56
  %v772 = vpop.permute.xlu0 %771
  %773 = vrot.lane.b32.xlu0 %v262, 56
  %v774 = vpop.permute.xlu0 %773
  %775 = vrot.lane.b32.xlu0 %v265, 56
  %v776 = vpop.permute.xlu0 %775
  %777 = vrot.lane.b32.xlu0 %v268, 56
  %v778 = vpop.permute.xlu0 %777
  %779 = vrot.lane.b32.xlu0 %v271, 56
  %v780 = vpop.permute.xlu0 %779
  %781 = vrot.lane.b32.xlu0 %v274, 56
  %v782 = vpop.permute.xlu0 %781
  %783 = vrot.lane.b32.xlu0 %v277, 56
  %v784 = vpop.permute.xlu0 %783
  %v794 = vsel %vm389, %v761, 0
  %v797 = vsel %vm389, %v762, 0
  %v800 = vsel %vm389, %v763, 0
  %v803 = vsel %vm389, %v764, 0
  %v806 = vsel %vm389, %v765, 0
  %v809 = vsel %vm389, %v766, 0
  %v812 = vsel %vm389, %v767, 0
  %v815 = vsel %vm389, %v768, 0
  %817 = vmatpush.msra.mxu0 0.0
  %818 = vmatpush.msra.mxu0 0.0
  %819 = vmatpush.msra.mxu0 0.0
  %820 = vmatpush.msra.mxu0 0.0
  %821 = vmatpush.msra.mxu0 0.0
  %822 = vmatpush.msra.mxu0 0.0
  %823 = vmatpush.msra.mxu0 0.0
  %824 = vmatpush.msra.mxu0 0.0
  %825 = vmatpush.msra.mxu0 %v784
  %826 = vmatpush.msra.mxu0 %v782
  %827 = vmatpush.msra.mxu0 %v780
  %828 = vmatpush.msra.mxu0 %v778
  %829 = vmatpush.msra.mxu0 %v776
  %830 = vmatpush.msra.mxu0 %v774
  %831 = vmatpush.msra.mxu0 %v772
  %832 = vmatpush.msra.mxu0 %v770
  %833 = vmatmul.f32.gmra.mxu0 %v794
  %v834 = vpop.f32.mrf.mxu0
  %v835 = vadd.f32 0.0, %v834
  %836 = vmatmul.f32.gmra.mxu0 %v797
  %v837 = vpop.f32.mrf.mxu0
  %v838 = vadd.f32 0.0, %v837
  %839 = vmatmul.f32.gmra.mxu0 %v800
  %v840 = vpop.f32.mrf.mxu0
  %v841 = vadd.f32 0.0, %v840
  %842 = vmatmul.f32.gmra.mxu0 %v803
  %v843 = vpop.f32.mrf.mxu0
  %v844 = vadd.f32 0.0, %v843
  %845 = vmatmul.f32.gmra.mxu0 %v806
  %v846 = vpop.f32.mrf.mxu0
  %v847 = vadd.f32 0.0, %v846
  %848 = vmatmul.f32.gmra.mxu0 %v809
  %v849 = vpop.f32.mrf.mxu0
  %v850 = vadd.f32 0.0, %v849
  %851 = vmatmul.f32.gmra.mxu0 %v812
  %v852 = vpop.f32.mrf.mxu0
  %v853 = vadd.f32 0.0, %v852
  %854 = vmatmul.f32.gmra.mxu0 %v815
  %v855 = vpop.f32.mrf.mxu0
  %v856 = vadd.f32 0.0, %v855
  %857 = vdwg.mxu0
  %v859 = vsel %vm315, %v835, 0
  %v862 = vsel %vm315, %v838, 0
  %v865 = vsel %vm315, %v841, 0
  %v868 = vsel %vm315, %v844, 0
  %v871 = vsel %vm315, %v847, 0
  %v874 = vsel %vm315, %v850, 0
  %v877 = vsel %vm315, %v853, 0
  %v880 = vsel %vm315, %v856, 0
  %882 = vmatpush.msra.mxu0 0.0
  %883 = vmatpush.msra.mxu0 0.0
  %884 = vmatpush.msra.mxu0 0.0
  %885 = vmatpush.msra.mxu0 0.0
  %886 = vmatpush.msra.mxu0 0.0
  %887 = vmatpush.msra.mxu0 0.0
  %888 = vmatpush.msra.mxu0 0.0
  %889 = vmatpush.msra.mxu0 0.0
  %890 = vmatpush.msra.mxu0 0.0
  %891 = vmatpush.msra.mxu0 0.0
  %892 = vmatpush.msra.mxu0 0.0
  %893 = vmatpush.msra.mxu0 0.0
  %894 = vmatpush.msra.mxu0 0.0
  %895 = vmatpush.msra.mxu0 0.0
  %896 = vmatpush.msra.mxu0 0.0
  %897 = vmatpush.msra.mxu0 %v280
  %898 = vmatmul.f32.gmra.mxu0 %v859
  %v899 = vpop.f32.mrf.mxu0
  %v900 = vadd.f32 0.0, %v899
  %901 = vmatmul.f32.gmra.mxu0 %v862
  %v902 = vpop.f32.mrf.mxu0
  %v903 = vadd.f32 0.0, %v902
  %904 = vmatmul.f32.gmra.mxu0 %v865
  %v905 = vpop.f32.mrf.mxu0
  %v906 = vadd.f32 0.0, %v905
  %907 = vmatmul.f32.gmra.mxu0 %v868
  %v908 = vpop.f32.mrf.mxu0
  %v909 = vadd.f32 0.0, %v908
  %910 = vmatmul.f32.gmra.mxu0 %v871
  %v911 = vpop.f32.mrf.mxu0
  %v912 = vadd.f32 0.0, %v911
  %913 = vmatmul.f32.gmra.mxu0 %v874
  %v914 = vpop.f32.mrf.mxu0
  %v915 = vadd.f32 0.0, %v914
  %916 = vmatmul.f32.gmra.mxu0 %v877
  %v917 = vpop.f32.mrf.mxu0
  %v918 = vadd.f32 0.0, %v917
  %919 = vmatmul.f32.gmra.mxu0 %v880
  %v920 = vpop.f32.mrf.mxu0
  %v921 = vadd.f32 0.0, %v920
  %922 = vdwg.mxu0
  %v924 = vsel %vm315, %v544, 0
  %v927 = vsel %vm315, %v547, 0
  %v930 = vsel %vm315, %v550, 0
  %v933 = vsel %vm315, %v553, 0
  %v936 = vsel %vm315, %v556, 0
  %v939 = vsel %vm315, %v559, 0
  %v942 = vsel %vm315, %v562, 0
  %v945 = vsel %vm315, %v565, 0
  %947 = vmatpush.msra.mxu0 0.0
  %948 = vmatpush.msra.mxu0 0.0
  %949 = vmatpush.msra.mxu0 0.0
  %950 = vmatpush.msra.mxu0 0.0
  %951 = vmatpush.msra.mxu0 0.0
  %952 = vmatpush.msra.mxu0 0.0
  %953 = vmatpush.msra.mxu0 0.0
  %954 = vmatpush.msra.mxu0 0.0
  %955 = vmatpush.msra.mxu0 0.0
  %956 = vmatpush.msra.mxu0 0.0
  %957 = vmatpush.msra.mxu0 0.0
  %958 = vmatpush.msra.mxu0 0.0
  %959 = vmatpush.msra.mxu0 0.0
  %960 = vmatpush.msra.mxu0 0.0
  %961 = vmatpush.msra.mxu0 0.0
  %962 = vmatpush.msra.mxu0 %v279
  %963 = vmatmul.f32.gmra.mxu0 %v924
  %v964 = vpop.f32.mrf.mxu0
  %v965 = vadd.f32 %v900, %v964
  %966 = vmatmul.f32.gmra.mxu0 %v927
  %v967 = vpop.f32.mrf.mxu0
  %v968 = vadd.f32 %v903, %v967
  %969 = vmatmul.f32.gmra.mxu0 %v930
  %v970 = vpop.f32.mrf.mxu0
  %v971 = vadd.f32 %v906, %v970
  %972 = vmatmul.f32.gmra.mxu0 %v933
  %v973 = vpop.f32.mrf.mxu0
  %v974 = vadd.f32 %v909, %v973
  %975 = vmatmul.f32.gmra.mxu0 %v936
  %v976 = vpop.f32.mrf.mxu0
  %v977 = vadd.f32 %v912, %v976
  %978 = vmatmul.f32.gmra.mxu0 %v939
  %v979 = vpop.f32.mrf.mxu0
  %v980 = vadd.f32 %v915, %v979
  %981 = vmatmul.f32.gmra.mxu0 %v942
  %v982 = vpop.f32.mrf.mxu0
  %v983 = vadd.f32 %v918, %v982
  %984 = vmatmul.f32.gmra.mxu0 %v945
  %v985 = vpop.f32.mrf.mxu0
  %v986 = vadd.f32 %v921, %v985
  %987 = vdwg.mxu0
  %s988 = scalar_lea.vmem %s1, 128
  %v989 = vld [vmem:[%s988] sm:$0xff]
  %v990 = vld [vmem:[%s988 + $0x8] sm:$0xff]
  %v991 = vld [vmem:[%s988 + $0x10] sm:$0xff]
  %v992 = vld [vmem:[%s988 + $0x18] sm:$0xff]
  %v993 = vld [vmem:[%s988 + $0x20] sm:$0xff]
  %v994 = vld [vmem:[%s988 + $0x28] sm:$0xff]
  %v995 = vld [vmem:[%s988 + $0x30] sm:$0xff]
  %v996 = vld [vmem:[%s988 + $0x38] sm:$0xff]
  %997 = vrot.lane.b32.xlu0 %v256, 112
  %v998 = vpop.permute.xlu0 %997
  %999 = vrot.lane.b32.xlu0 %v259, 112
  %v1000 = vpop.permute.xlu0 %999
  %1001 = vrot.lane.b32.xlu0 %v262, 112
  %v1002 = vpop.permute.xlu0 %1001
  %1003 = vrot.lane.b32.xlu0 %v265, 112
  %v1004 = vpop.permute.xlu0 %1003
  %1005 = vrot.lane.b32.xlu0 %v268, 112
  %v1006 = vpop.permute.xlu0 %1005
  %1007 = vrot.lane.b32.xlu0 %v271, 112
  %v1008 = vpop.permute.xlu0 %1007
  %1009 = vrot.lane.b32.xlu0 %v274, 112
  %v1010 = vpop.permute.xlu0 %1009
  %1011 = vrot.lane.b32.xlu0 %v277, 112
  %v1012 = vpop.permute.xlu0 %1011
  %1013 = vrot.lane.b32.xlu0 %v256, 80
  %v1014 = vpop.permute.xlu0 %1013
  %1015 = vrot.lane.b32.xlu0 %v259, 80
  %v1016 = vpop.permute.xlu0 %1015
  %1017 = vrot.lane.b32.xlu0 %v262, 80
  %v1018 = vpop.permute.xlu0 %1017
  %1019 = vrot.lane.b32.xlu0 %v265, 80
  %v1020 = vpop.permute.xlu0 %1019
  %1021 = vrot.lane.b32.xlu0 %v268, 80
  %v1022 = vpop.permute.xlu0 %1021
  %1023 = vrot.lane.b32.xlu0 %v271, 80
  %v1024 = vpop.permute.xlu0 %1023
  %1025 = vrot.lane.b32.xlu0 %v274, 80
  %v1026 = vpop.permute.xlu0 %1025
  %1027 = vrot.lane.b32.xlu0 %v277, 80
  %v1028 = vpop.permute.xlu0 %1027
  %v1029 = vsel %vm315, %v998, 0
  %v1031 = vsel %vm315, %v1000, 0
  %v1033 = vsel %vm315, %v1002, 0
  %v1035 = vsel %vm315, %v1004, 0
  %v1037 = vsel %vm315, %v1006, 0
  %v1039 = vsel %vm315, %v1008, 0
  %v1041 = vsel %vm315, %v1010, 0
  %v1043 = vsel %vm315, %v1012, 0
  %v1045 = vsel %vm315, %v1014, 0
  %v1047 = vsel %vm315, %v1016, 0
  %v1049 = vsel %vm315, %v1018, 0
  %v1051 = vsel %vm315, %v1020, 0
  %v1053 = vsel %vm315, %v1022, 0
  %v1055 = vsel %vm315, %v1024, 0
  %v1057 = vsel %vm315, %v1026, 0
  %v1059 = vsel %vm315, %v1028, 0
  %1061 = vmatpush.xpose.msra.mxu0 0.0
  %1062 = vmatpush.xpose.msra.mxu0 0.0
  %1063 = vmatpush.xpose.msra.mxu0 0.0
  %1064 = vmatpush.xpose.msra.mxu0 0.0
  %1065 = vmatpush.xpose.msra.mxu0 0.0
  %1066 = vmatpush.xpose.msra.mxu0 0.0
  %1067 = vmatpush.xpose.msra.mxu0 0.0
  %1068 = vmatpush.xpose.msra.mxu0 0.0
  %1069 = vmatpush.xpose.msra.mxu0 %v1059
  %1070 = vmatpush.xpose.msra.mxu0 %v1057
  %1071 = vmatpush.xpose.msra.mxu0 %v1055
  %1072 = vmatpush.xpose.msra.mxu0 %v1053
  %1073 = vmatpush.xpose.msra.mxu0 %v1051
  %1074 = vmatpush.xpose.msra.mxu0 %v1049
  %1075 = vmatpush.xpose.msra.mxu0 %v1047
  %1076 = vmatpush.xpose.msra.mxu0 %v1045
  %1077 = vmatmul.f32.gmra.mxu0 %v1029
  %v1078 = vpop.f32.mrf.mxu0
  %v1079 = vadd.f32 %v989, %v1078
  %1080 = vmatmul.f32.gmra.mxu0 %v1031
  %v1081 = vpop.f32.mrf.mxu0
  %v1082 = vadd.f32 %v990, %v1081
  %1083 = vmatmul.f32.gmra.mxu0 %v1033
  %v1084 = vpop.f32.mrf.mxu0
  %v1085 = vadd.f32 %v991, %v1084
  %1086 = vmatmul.f32.gmra.mxu0 %v1035
  %v1087 = vpop.f32.mrf.mxu0
  %v1088 = vadd.f32 %v992, %v1087
  %1089 = vmatmul.f32.gmra.mxu0 %v1037
  %v1090 = vpop.f32.mrf.mxu0
  %v1091 = vadd.f32 %v993, %v1090
  %1092 = vmatmul.f32.gmra.mxu0 %v1039
  %v1093 = vpop.f32.mrf.mxu0
  %v1094 = vadd.f32 %v994, %v1093
  %1095 = vmatmul.f32.gmra.mxu0 %v1041
  %v1096 = vpop.f32.mrf.mxu0
  %v1097 = vadd.f32 %v995, %v1096
  %1098 = vmatmul.f32.gmra.mxu0 %v1043
  %v1099 = vpop.f32.mrf.mxu0
  %v1100 = vadd.f32 %v996, %v1099
  %1101 = vdwg.mxu0
  %v1102 = vsel %vm389, %v1079, -inf
  %1103 = vmax.xlane.f32.xlu0 %v1102
  %v1104 = vpop.xlane.xlu0 %1103
  %v1105 = vsel %vm389, %v1082, -inf
  %1106 = vmax.xlane.f32.xlu0 %v1105
  %v1107 = vpop.xlane.xlu0 %1106
  %v1108 = vsel %vm389, %v1085, -inf
  %1109 = vmax.xlane.f32.xlu0 %v1108
  %v1110 = vpop.xlane.xlu0 %1109
  %v1111 = vsel %vm389, %v1088, -inf
  %1112 = vmax.xlane.f32.xlu0 %v1111
  %v1113 = vpop.xlane.xlu0 %1112
  %v1114 = vsel %vm389, %v1091, -inf
  %1115 = vmax.xlane.f32.xlu0 %v1114
  %v1116 = vpop.xlane.xlu0 %1115
  %v1117 = vsel %vm389, %v1094, -inf
  %1118 = vmax.xlane.f32.xlu0 %v1117
  %v1119 = vpop.xlane.xlu0 %1118
  %v1120 = vsel %vm389, %v1097, -inf
  %1121 = vmax.xlane.f32.xlu0 %v1120
  %v1122 = vpop.xlane.xlu0 %1121
  %v1123 = vsel %vm389, %v1100, -inf
  %1124 = vmax.xlane.f32.xlu0 %v1123
  %v1125 = vpop.xlane.xlu0 %1124
  %v1126 = vsub.f32 %v1079, %v1104
  %v1127 = vsub.f32 %v1082, %v1107
  %v1128 = vsub.f32 %v1085, %v1110
  %v1129 = vsub.f32 %v1088, %v1113
  %v1130 = vsub.f32 %v1091, %v1116
  %v1131 = vsub.f32 %v1094, %v1119
  %v1132 = vsub.f32 %v1097, %v1122
  %v1133 = vsub.f32 %v1100, %v1125
  %v1134 = vmul.f32 %v1126, 1.442695
  %v1135 = vpow.pop %v1134
  %v1136 = vmul.f32 %v1127, 1.442695
  %v1137 = vpow.pop %v1136
  %v1138 = vmul.f32 %v1128, 1.442695
  %v1139 = vpow.pop %v1138
  %v1140 = vmul.f32 %v1129, 1.442695
  %v1141 = vpow.pop %v1140
  %v1142 = vmul.f32 %v1130, 1.442695
  %v1143 = vpow.pop %v1142
  %v1144 = vmul.f32 %v1131, 1.442695
  %v1145 = vpow.pop %v1144
  %v1146 = vmul.f32 %v1132, 1.442695
  %v1147 = vpow.pop %v1146
  %v1148 = vmul.f32 %v1133, 1.442695
  %v1149 = vpow.pop %v1148
  %v1150 = vsel %vm389, %v1135, 0.0
  %1151 = vadd.xlane.f32.xlu0 %v1150
  %v1152 = vpop.xlane.xlu0 %1151
  %v1153 = vsel %vm389, %v1137, 0.0
  %1154 = vadd.xlane.f32.xlu0 %v1153
  %v1155 = vpop.xlane.xlu0 %1154
  %v1156 = vsel %vm389, %v1139, 0.0
  %1157 = vadd.xlane.f32.xlu0 %v1156
  %v1158 = vpop.xlane.xlu0 %1157
  %v1159 = vsel %vm389, %v1141, 0.0
  %1160 = vadd.xlane.f32.xlu0 %v1159
  %v1161 = vpop.xlane.xlu0 %1160
  %v1162 = vsel %vm389, %v1143, 0.0
  %1163 = vadd.xlane.f32.xlu0 %v1162
  %v1164 = vpop.xlane.xlu0 %1163
  %v1165 = vsel %vm389, %v1145, 0.0
  %1166 = vadd.xlane.f32.xlu0 %v1165
  %v1167 = vpop.xlane.xlu0 %1166
  %v1168 = vsel %vm389, %v1147, 0.0
  %1169 = vadd.xlane.f32.xlu0 %v1168
  %v1170 = vpop.xlane.xlu0 %1169
  %v1171 = vsel %vm389, %v1149, 0.0
  %1172 = vadd.xlane.f32.xlu0 %v1171
  %v1173 = vpop.xlane.xlu0 %1172
  %v1174 = vrcp.pop %v1152
  %v1175 = vrcp.pop %v1155
  %v1176 = vrcp.pop %v1158
  %v1177 = vrcp.pop %v1161
  %v1178 = vrcp.pop %v1164
  %v1179 = vrcp.pop %v1167
  %v1180 = vrcp.pop %v1170
  %v1181 = vrcp.pop %v1173
  %v1182 = vmul.f32 %v1135, %v1174
  %v1183 = vmul.f32 %v1137, %v1175
  %v1184 = vmul.f32 %v1139, %v1176
  %v1185 = vmul.f32 %v1141, %v1177
  %v1186 = vmul.f32 %v1143, %v1178
  %v1187 = vmul.f32 %v1145, %v1179
  %v1188 = vmul.f32 %v1147, %v1180
  %v1189 = vmul.f32 %v1149, %v1181
  %1190 = vrot.lane.b32.xlu0 %v256, 48
  %v1191 = vpop.permute.xlu0 %1190
  %1192 = vrot.lane.b32.xlu0 %v259, 48
  %v1193 = vpop.permute.xlu0 %1192
  %1194 = vrot.lane.b32.xlu0 %v262, 48
  %v1195 = vpop.permute.xlu0 %1194
  %1196 = vrot.lane.b32.xlu0 %v265, 48
  %v1197 = vpop.permute.xlu0 %1196
  %1198 = vrot.lane.b32.xlu0 %v268, 48
  %v1199 = vpop.permute.xlu0 %1198
  %1200 = vrot.lane.b32.xlu0 %v271, 48
  %v1201 = vpop.permute.xlu0 %1200
  %1202 = vrot.lane.b32.xlu0 %v274, 48
  %v1203 = vpop.permute.xlu0 %1202
  %1204 = vrot.lane.b32.xlu0 %v277, 48
  %v1205 = vpop.permute.xlu0 %1204
  %v1215 = vsel %vm389, %v1182, 0
  %v1218 = vsel %vm389, %v1183, 0
  %v1221 = vsel %vm389, %v1184, 0
  %v1224 = vsel %vm389, %v1185, 0
  %v1227 = vsel %vm389, %v1186, 0
  %v1230 = vsel %vm389, %v1187, 0
  %v1233 = vsel %vm389, %v1188, 0
  %v1236 = vsel %vm389, %v1189, 0
  %1238 = vmatpush.msra.mxu0 0.0
  %1239 = vmatpush.msra.mxu0 0.0
  %1240 = vmatpush.msra.mxu0 0.0
  %1241 = vmatpush.msra.mxu0 0.0
  %1242 = vmatpush.msra.mxu0 0.0
  %1243 = vmatpush.msra.mxu0 0.0
  %1244 = vmatpush.msra.mxu0 0.0
  %1245 = vmatpush.msra.mxu0 0.0
  %1246 = vmatpush.msra.mxu0 %v1205
  %1247 = vmatpush.msra.mxu0 %v1203
  %1248 = vmatpush.msra.mxu0 %v1201
  %1249 = vmatpush.msra.mxu0 %v1199
  %1250 = vmatpush.msra.mxu0 %v1197
  %1251 = vmatpush.msra.mxu0 %v1195
  %1252 = vmatpush.msra.mxu0 %v1193
  %1253 = vmatpush.msra.mxu0 %v1191
  %1254 = vmatmul.f32.gmra.mxu0 %v1215
  %v1255 = vpop.f32.mrf.mxu0
  %v1256 = vadd.f32 0.0, %v1255
  %1257 = vmatmul.f32.gmra.mxu0 %v1218
  %v1258 = vpop.f32.mrf.mxu0
  %v1259 = vadd.f32 0.0, %v1258
  %1260 = vmatmul.f32.gmra.mxu0 %v1221
  %v1261 = vpop.f32.mrf.mxu0
  %v1262 = vadd.f32 0.0, %v1261
  %1263 = vmatmul.f32.gmra.mxu0 %v1224
  %v1264 = vpop.f32.mrf.mxu0
  %v1265 = vadd.f32 0.0, %v1264
  %1266 = vmatmul.f32.gmra.mxu0 %v1227
  %v1267 = vpop.f32.mrf.mxu0
  %v1268 = vadd.f32 0.0, %v1267
  %1269 = vmatmul.f32.gmra.mxu0 %v1230
  %v1270 = vpop.f32.mrf.mxu0
  %v1271 = vadd.f32 0.0, %v1270
  %1272 = vmatmul.f32.gmra.mxu0 %v1233
  %v1273 = vpop.f32.mrf.mxu0
  %v1274 = vadd.f32 0.0, %v1273
  %1275 = vmatmul.f32.gmra.mxu0 %v1236
  %v1276 = vpop.f32.mrf.mxu0
  %v1277 = vadd.f32 0.0, %v1276
  %1278 = vdwg.mxu0
  %v1280 = vsel %vm315, %v1256, 0
  %v1283 = vsel %vm315, %v1259, 0
  %v1286 = vsel %vm315, %v1262, 0
  %v1289 = vsel %vm315, %v1265, 0
  %v1292 = vsel %vm315, %v1268, 0
  %v1295 = vsel %vm315, %v1271, 0
  %v1298 = vsel %vm315, %v1274, 0
  %v1301 = vsel %vm315, %v1277, 0
  %1303 = vmatpush.msra.mxu0 0.0
  %1304 = vmatpush.msra.mxu0 0.0
  %1305 = vmatpush.msra.mxu0 0.0
  %1306 = vmatpush.msra.mxu0 0.0
  %1307 = vmatpush.msra.mxu0 0.0
  %1308 = vmatpush.msra.mxu0 0.0
  %1309 = vmatpush.msra.mxu0 0.0
  %1310 = vmatpush.msra.mxu0 0.0
  %1311 = vmatpush.msra.mxu0 0.0
  %1312 = vmatpush.msra.mxu0 0.0
  %1313 = vmatpush.msra.mxu0 0.0
  %1314 = vmatpush.msra.mxu0 0.0
  %1315 = vmatpush.msra.mxu0 0.0
  %1316 = vmatpush.msra.mxu0 0.0
  %1317 = vmatpush.msra.mxu0 0.0
  %1318 = vmatpush.msra.mxu0 %v281
  %1319 = vmatmul.f32.gmra.mxu0 %v1280
  %v1320 = vpop.f32.mrf.mxu0
  %v1321 = vadd.f32 0.0, %v1320
  %1322 = vmatmul.f32.gmra.mxu0 %v1283
  %v1323 = vpop.f32.mrf.mxu0
  %v1324 = vadd.f32 0.0, %v1323
  %1325 = vmatmul.f32.gmra.mxu0 %v1286
  %v1326 = vpop.f32.mrf.mxu0
  %v1327 = vadd.f32 0.0, %v1326
  %1328 = vmatmul.f32.gmra.mxu0 %v1289
  %v1329 = vpop.f32.mrf.mxu0
  %v1330 = vadd.f32 0.0, %v1329
  %1331 = vmatmul.f32.gmra.mxu0 %v1292
  %v1332 = vpop.f32.mrf.mxu0
  %v1333 = vadd.f32 0.0, %v1332
  %1334 = vmatmul.f32.gmra.mxu0 %v1295
  %v1335 = vpop.f32.mrf.mxu0
  %v1336 = vadd.f32 0.0, %v1335
  %1337 = vmatmul.f32.gmra.mxu0 %v1298
  %v1338 = vpop.f32.mrf.mxu0
  %v1339 = vadd.f32 0.0, %v1338
  %1340 = vmatmul.f32.gmra.mxu0 %v1301
  %v1341 = vpop.f32.mrf.mxu0
  %v1342 = vadd.f32 0.0, %v1341
  %1343 = vdwg.mxu0
  %v1344 = vadd.f32 %v965, %v1321
  %v1345 = vadd.f32 %v968, %v1324
  %v1346 = vadd.f32 %v971, %v1327
  %v1347 = vadd.f32 %v974, %v1330
  %v1348 = vadd.f32 %v977, %v1333
  %v1349 = vadd.f32 %v980, %v1336
  %v1350 = vadd.f32 %v983, %v1339
  %v1351 = vadd.f32 %v986, %v1342
  %s1352 = scalar_lea.vmem %s1, 192
  %v1353 = vld [vmem:[%s1352] sm:$0xff]
  %v1354 = vld [vmem:[%s1352 + $0x8] sm:$0xff]
  %v1355 = vld [vmem:[%s1352 + $0x10] sm:$0xff]
  %v1356 = vld [vmem:[%s1352 + $0x18] sm:$0xff]
  %v1357 = vld [vmem:[%s1352 + $0x20] sm:$0xff]
  %v1358 = vld [vmem:[%s1352 + $0x28] sm:$0xff]
  %v1359 = vld [vmem:[%s1352 + $0x30] sm:$0xff]
  %v1360 = vld [vmem:[%s1352 + $0x38] sm:$0xff]
  %1361 = vrot.lane.b32.xlu0 %v256, 104
  %v1362 = vpop.permute.xlu0 %1361
  %1363 = vrot.lane.b32.xlu0 %v259, 104
  %v1364 = vpop.permute.xlu0 %1363
  %1365 = vrot.lane.b32.xlu0 %v262, 104
  %v1366 = vpop.permute.xlu0 %1365
  %1367 = vrot.lane.b32.xlu0 %v265, 104
  %v1368 = vpop.permute.xlu0 %1367
  %1369 = vrot.lane.b32.xlu0 %v268, 104
  %v1370 = vpop.permute.xlu0 %1369
  %1371 = vrot.lane.b32.xlu0 %v271, 104
  %v1372 = vpop.permute.xlu0 %1371
  %1373 = vrot.lane.b32.xlu0 %v274, 104
  %v1374 = vpop.permute.xlu0 %1373
  %1375 = vrot.lane.b32.xlu0 %v277, 104
  %v1376 = vpop.permute.xlu0 %1375
  %1377 = vrot.lane.b32.xlu0 %v256, 72
  %v1378 = vpop.permute.xlu0 %1377
  %1379 = vrot.lane.b32.xlu0 %v259, 72
  %v1380 = vpop.permute.xlu0 %1379
  %1381 = vrot.lane.b32.xlu0 %v262, 72
  %v1382 = vpop.permute.xlu0 %1381
  %1383 = vrot.lane.b32.xlu0 %v265, 72
  %v1384 = vpop.permute.xlu0 %1383
  %1385 = vrot.lane.b32.xlu0 %v268, 72
  %v1386 = vpop.permute.xlu0 %1385
  %1387 = vrot.lane.b32.xlu0 %v271, 72
  %v1388 = vpop.permute.xlu0 %1387
  %1389 = vrot.lane.b32.xlu0 %v274, 72
  %v1390 = vpop.permute.xlu0 %1389
  %1391 = vrot.lane.b32.xlu0 %v277, 72
  %v1392 = vpop.permute.xlu0 %1391
  %v1393 = vsel %vm315, %v1362, 0
  %v1395 = vsel %vm315, %v1364, 0
  %v1397 = vsel %vm315, %v1366, 0
  %v1399 = vsel %vm315, %v1368, 0
  %v1401 = vsel %vm315, %v1370, 0
  %v1403 = vsel %vm315, %v1372, 0
  %v1405 = vsel %vm315, %v1374, 0
  %v1407 = vsel %vm315, %v1376, 0
  %v1409 = vsel %vm315, %v1378, 0
  %v1411 = vsel %vm315, %v1380, 0
  %v1413 = vsel %vm315, %v1382, 0
  %v1415 = vsel %vm315, %v1384, 0
  %v1417 = vsel %vm315, %v1386, 0
  %v1419 = vsel %vm315, %v1388, 0
  %v1421 = vsel %vm315, %v1390, 0
  %v1423 = vsel %vm315, %v1392, 0
  %1425 = vmatpush.xpose.msra.mxu0 0.0
  %1426 = vmatpush.xpose.msra.mxu0 0.0
  %1427 = vmatpush.xpose.msra.mxu0 0.0
  %1428 = vmatpush.xpose.msra.mxu0 0.0
  %1429 = vmatpush.xpose.msra.mxu0 0.0
  %1430 = vmatpush.xpose.msra.mxu0 0.0
  %1431 = vmatpush.xpose.msra.mxu0 0.0
  %1432 = vmatpush.xpose.msra.mxu0 0.0
  %1433 = vmatpush.xpose.msra.mxu0 %v1423
  %1434 = vmatpush.xpose.msra.mxu0 %v1421
  %1435 = vmatpush.xpose.msra.mxu0 %v1419
  %1436 = vmatpush.xpose.msra.mxu0 %v1417
  %1437 = vmatpush.xpose.msra.mxu0 %v1415
  %1438 = vmatpush.xpose.msra.mxu0 %v1413
  %1439 = vmatpush.xpose.msra.mxu0 %v1411
  %1440 = vmatpush.xpose.msra.mxu0 %v1409
  %1441 = vmatmul.f32.gmra.mxu0 %v1393
  %v1442 = vpop.f32.mrf.mxu0
  %v1443 = vadd.f32 %v1353, %v1442
  %1444 = vmatmul.f32.gmra.mxu0 %v1395
  %v1445 = vpop.f32.mrf.mxu0
  %v1446 = vadd.f32 %v1354, %v1445
  %1447 = vmatmul.f32.gmra.mxu0 %v1397
  %v1448 = vpop.f32.mrf.mxu0
  %v1449 = vadd.f32 %v1355, %v1448
  %1450 = vmatmul.f32.gmra.mxu0 %v1399
  %v1451 = vpop.f32.mrf.mxu0
  %v1452 = vadd.f32 %v1356, %v1451
  %1453 = vmatmul.f32.gmra.mxu0 %v1401
  %v1454 = vpop.f32.mrf.mxu0
  %v1455 = vadd.f32 %v1357, %v1454
  %1456 = vmatmul.f32.gmra.mxu0 %v1403
  %v1457 = vpop.f32.mrf.mxu0
  %v1458 = vadd.f32 %v1358, %v1457
  %1459 = vmatmul.f32.gmra.mxu0 %v1405
  %v1460 = vpop.f32.mrf.mxu0
  %v1461 = vadd.f32 %v1359, %v1460
  %1462 = vmatmul.f32.gmra.mxu0 %v1407
  %v1463 = vpop.f32.mrf.mxu0
  %v1464 = vadd.f32 %v1360, %v1463
  %1465 = vdwg.mxu0
  %v1466 = vsel %vm389, %v1443, -inf
  %1467 = vmax.xlane.f32.xlu0 %v1466
  %v1468 = vpop.xlane.xlu0 %1467
  %v1469 = vsel %vm389, %v1446, -inf
  %1470 = vmax.xlane.f32.xlu0 %v1469
  %v1471 = vpop.xlane.xlu0 %1470
  %v1472 = vsel %vm389, %v1449, -inf
  %1473 = vmax.xlane.f32.xlu0 %v1472
  %v1474 = vpop.xlane.xlu0 %1473
  %v1475 = vsel %vm389, %v1452, -inf
  %1476 = vmax.xlane.f32.xlu0 %v1475
  %v1477 = vpop.xlane.xlu0 %1476
  %v1478 = vsel %vm389, %v1455, -inf
  %1479 = vmax.xlane.f32.xlu0 %v1478
  %v1480 = vpop.xlane.xlu0 %1479
  %v1481 = vsel %vm389, %v1458, -inf
  %1482 = vmax.xlane.f32.xlu0 %v1481
  %v1483 = vpop.xlane.xlu0 %1482
  %v1484 = vsel %vm389, %v1461, -inf
  %1485 = vmax.xlane.f32.xlu0 %v1484
  %v1486 = vpop.xlane.xlu0 %1485
  %v1487 = vsel %vm389, %v1464, -inf
  %1488 = vmax.xlane.f32.xlu0 %v1487
  %v1489 = vpop.xlane.xlu0 %1488
  %v1490 = vsub.f32 %v1443, %v1468
  %v1491 = vsub.f32 %v1446, %v1471
  %v1492 = vsub.f32 %v1449, %v1474
  %v1493 = vsub.f32 %v1452, %v1477
  %v1494 = vsub.f32 %v1455, %v1480
  %v1495 = vsub.f32 %v1458, %v1483
  %v1496 = vsub.f32 %v1461, %v1486
  %v1497 = vsub.f32 %v1464, %v1489
  %v1498 = vmul.f32 %v1490, 1.442695
  %v1499 = vpow.pop %v1498
  %v1500 = vmul.f32 %v1491, 1.442695
  %v1501 = vpow.pop %v1500
  %v1502 = vmul.f32 %v1492, 1.442695
  %v1503 = vpow.pop %v1502
  %v1504 = vmul.f32 %v1493, 1.442695
  %v1505 = vpow.pop %v1504
  %v1506 = vmul.f32 %v1494, 1.442695
  %v1507 = vpow.pop %v1506
  %v1508 = vmul.f32 %v1495, 1.442695
  %v1509 = vpow.pop %v1508
  %v1510 = vmul.f32 %v1496, 1.442695
  %v1511 = vpow.pop %v1510
  %v1512 = vmul.f32 %v1497, 1.442695
  %v1513 = vpow.pop %v1512
  %v1514 = vsel %vm389, %v1499, 0.0
  %1515 = vadd.xlane.f32.xlu0 %v1514
  %v1516 = vpop.xlane.xlu0 %1515
  %v1517 = vsel %vm389, %v1501, 0.0
  %1518 = vadd.xlane.f32.xlu0 %v1517
  %v1519 = vpop.xlane.xlu0 %1518
  %v1520 = vsel %vm389, %v1503, 0.0
  %1521 = vadd.xlane.f32.xlu0 %v1520
  %v1522 = vpop.xlane.xlu0 %1521
  %v1523 = vsel %vm389, %v1505, 0.0
  %1524 = vadd.xlane.f32.xlu0 %v1523
  %v1525 = vpop.xlane.xlu0 %1524
  %v1526 = vsel %vm389, %v1507, 0.0
  %1527 = vadd.xlane.f32.xlu0 %v1526
  %v1528 = vpop.xlane.xlu0 %1527
  %v1529 = vsel %vm389, %v1509, 0.0
  %1530 = vadd.xlane.f32.xlu0 %v1529
  %v1531 = vpop.xlane.xlu0 %1530
  %v1532 = vsel %vm389, %v1511, 0.0
  %1533 = vadd.xlane.f32.xlu0 %v1532
  %v1534 = vpop.xlane.xlu0 %1533
  %v1535 = vsel %vm389, %v1513, 0.0
  %1536 = vadd.xlane.f32.xlu0 %v1535
  %v1537 = vpop.xlane.xlu0 %1536
  %v1538 = vrcp.pop %v1516
  %v1539 = vrcp.pop %v1519
  %v1540 = vrcp.pop %v1522
  %v1541 = vrcp.pop %v1525
  %v1542 = vrcp.pop %v1528
  %v1543 = vrcp.pop %v1531
  %v1544 = vrcp.pop %v1534
  %v1545 = vrcp.pop %v1537
  %v1546 = vmul.f32 %v1499, %v1538
  %v1547 = vmul.f32 %v1501, %v1539
  %v1548 = vmul.f32 %v1503, %v1540
  %v1549 = vmul.f32 %v1505, %v1541
  %v1550 = vmul.f32 %v1507, %v1542
  %v1551 = vmul.f32 %v1509, %v1543
  %v1552 = vmul.f32 %v1511, %v1544
  %v1553 = vmul.f32 %v1513, %v1545
  %1554 = vrot.lane.b32.xlu0 %v256, 40
  %v1555 = vpop.permute.xlu0 %1554
  %1556 = vrot.lane.b32.xlu0 %v259, 40
  %v1557 = vpop.permute.xlu0 %1556
  %1558 = vrot.lane.b32.xlu0 %v262, 40
  %v1559 = vpop.permute.xlu0 %1558
  %1560 = vrot.lane.b32.xlu0 %v265, 40
  %v1561 = vpop.permute.xlu0 %1560
  %1562 = vrot.lane.b32.xlu0 %v268, 40
  %v1563 = vpop.permute.xlu0 %1562
  %1564 = vrot.lane.b32.xlu0 %v271, 40
  %v1565 = vpop.permute.xlu0 %1564
  %1566 = vrot.lane.b32.xlu0 %v274, 40
  %v1567 = vpop.permute.xlu0 %1566
  %1568 = vrot.lane.b32.xlu0 %v277, 40
  %v1569 = vpop.permute.xlu0 %1568
  %v1579 = vsel %vm389, %v1546, 0
  %v1582 = vsel %vm389, %v1547, 0
  %v1585 = vsel %vm389, %v1548, 0
  %v1588 = vsel %vm389, %v1549, 0
  %v1591 = vsel %vm389, %v1550, 0
  %v1594 = vsel %vm389, %v1551, 0
  %v1597 = vsel %vm389, %v1552, 0
  %v1600 = vsel %vm389, %v1553, 0
  %1602 = vmatpush.msra.mxu0 0.0
  %1603 = vmatpush.msra.mxu0 0.0
  %1604 = vmatpush.msra.mxu0 0.0
  %1605 = vmatpush.msra.mxu0 0.0
  %1606 = vmatpush.msra.mxu0 0.0
  %1607 = vmatpush.msra.mxu0 0.0
  %1608 = vmatpush.msra.mxu0 0.0
  %1609 = vmatpush.msra.mxu0 0.0
  %1610 = vmatpush.msra.mxu0 %v1569
  %1611 = vmatpush.msra.mxu0 %v1567
  %1612 = vmatpush.msra.mxu0 %v1565
  %1613 = vmatpush.msra.mxu0 %v1563
  %1614 = vmatpush.msra.mxu0 %v1561
  %1615 = vmatpush.msra.mxu0 %v1559
  %1616 = vmatpush.msra.mxu0 %v1557
  %1617 = vmatpush.msra.mxu0 %v1555
  %1618 = vmatmul.f32.gmra.mxu0 %v1579
  %v1619 = vpop.f32.mrf.mxu0
  %v1620 = vadd.f32 0.0, %v1619
  %1621 = vmatmul.f32.gmra.mxu0 %v1582
  %v1622 = vpop.f32.mrf.mxu0
  %v1623 = vadd.f32 0.0, %v1622
  %1624 = vmatmul.f32.gmra.mxu0 %v1585
  %v1625 = vpop.f32.mrf.mxu0
  %v1626 = vadd.f32 0.0, %v1625
  %1627 = vmatmul.f32.gmra.mxu0 %v1588
  %v1628 = vpop.f32.mrf.mxu0
  %v1629 = vadd.f32 0.0, %v1628
  %1630 = vmatmul.f32.gmra.mxu0 %v1591
  %v1631 = vpop.f32.mrf.mxu0
  %v1632 = vadd.f32 0.0, %v1631
  %1633 = vmatmul.f32.gmra.mxu0 %v1594
  %v1634 = vpop.f32.mrf.mxu0
  %v1635 = vadd.f32 0.0, %v1634
  %1636 = vmatmul.f32.gmra.mxu0 %v1597
  %v1637 = vpop.f32.mrf.mxu0
  %v1638 = vadd.f32 0.0, %v1637
  %1639 = vmatmul.f32.gmra.mxu0 %v1600
  %v1640 = vpop.f32.mrf.mxu0
  %v1641 = vadd.f32 0.0, %v1640
  %1642 = vdwg.mxu0
  %v1644 = vsel %vm315, %v1620, 0
  %v1647 = vsel %vm315, %v1623, 0
  %v1650 = vsel %vm315, %v1626, 0
  %v1653 = vsel %vm315, %v1629, 0
  %v1656 = vsel %vm315, %v1632, 0
  %v1659 = vsel %vm315, %v1635, 0
  %v1662 = vsel %vm315, %v1638, 0
  %v1665 = vsel %vm315, %v1641, 0
  %1667 = vmatpush.msra.mxu0 0.0
  %1668 = vmatpush.msra.mxu0 0.0
  %1669 = vmatpush.msra.mxu0 0.0
  %1670 = vmatpush.msra.mxu0 0.0
  %1671 = vmatpush.msra.mxu0 0.0
  %1672 = vmatpush.msra.mxu0 0.0
  %1673 = vmatpush.msra.mxu0 0.0
  %1674 = vmatpush.msra.mxu0 0.0
  %1675 = vmatpush.msra.mxu0 0.0
  %1676 = vmatpush.msra.mxu0 0.0
  %1677 = vmatpush.msra.mxu0 0.0
  %1678 = vmatpush.msra.mxu0 0.0
  %1679 = vmatpush.msra.mxu0 0.0
  %1680 = vmatpush.msra.mxu0 0.0
  %1681 = vmatpush.msra.mxu0 0.0
  %1682 = vmatpush.msra.mxu0 %v282
  %1683 = vmatmul.f32.gmra.mxu0 %v1644
  %v1684 = vpop.f32.mrf.mxu0
  %v1685 = vadd.f32 0.0, %v1684
  %1686 = vmatmul.f32.gmra.mxu0 %v1647
  %v1687 = vpop.f32.mrf.mxu0
  %v1688 = vadd.f32 0.0, %v1687
  %1689 = vmatmul.f32.gmra.mxu0 %v1650
  %v1690 = vpop.f32.mrf.mxu0
  %v1691 = vadd.f32 0.0, %v1690
  %1692 = vmatmul.f32.gmra.mxu0 %v1653
  %v1693 = vpop.f32.mrf.mxu0
  %v1694 = vadd.f32 0.0, %v1693
  %1695 = vmatmul.f32.gmra.mxu0 %v1656
  %v1696 = vpop.f32.mrf.mxu0
  %v1697 = vadd.f32 0.0, %v1696
  %1698 = vmatmul.f32.gmra.mxu0 %v1659
  %v1699 = vpop.f32.mrf.mxu0
  %v1700 = vadd.f32 0.0, %v1699
  %1701 = vmatmul.f32.gmra.mxu0 %v1662
  %v1702 = vpop.f32.mrf.mxu0
  %v1703 = vadd.f32 0.0, %v1702
  %1704 = vmatmul.f32.gmra.mxu0 %v1665
  %v1705 = vpop.f32.mrf.mxu0
  %v1706 = vadd.f32 0.0, %v1705
  %1707 = vdwg.mxu0
  %v1708 = vadd.f32 %v1344, %v1685
  %v1709 = vadd.f32 %v1345, %v1688
  %v1710 = vadd.f32 %v1346, %v1691
  %v1711 = vadd.f32 %v1347, %v1694
  %v1712 = vadd.f32 %v1348, %v1697
  %v1713 = vadd.f32 %v1349, %v1700
  %v1714 = vadd.f32 %v1350, %v1703
  %v1715 = vadd.f32 %v1351, %v1706
  %v1716 = vadd.f32 %v46, %v1708
  %v1717 = vadd.f32 %v47, %v1709
  %v1718 = vadd.f32 %v48, %v1710
  %v1719 = vadd.f32 %v49, %v1711
  %v1720 = vadd.f32 %v50, %v1712
  %v1721 = vadd.f32 %v51, %v1713
  %v1722 = vadd.f32 %v52, %v1714
  %v1723 = vadd.f32 %v53, %v1715
  %v1724 = vld [vmem:[%s5] sm:$0x1]
  %v1725 = vmul.f32 %v1716, %v1716
  %v1726 = vmul.f32 %v1717, %v1717
  %v1727 = vmul.f32 %v1718, %v1718
  %v1728 = vmul.f32 %v1719, %v1719
  %v1729 = vmul.f32 %v1720, %v1720
  %v1730 = vmul.f32 %v1721, %v1721
  %v1731 = vmul.f32 %v1722, %v1722
  %v1732 = vmul.f32 %v1723, %v1723
  %v1733 = vsel %vm63, %v1725, 0.0
  %1734 = vadd.xlane.f32.xlu0 %v1733
  %v1735 = vpop.xlane.xlu0 %1734
  %v1736 = vsel %vm63, %v1726, 0.0
  %1737 = vadd.xlane.f32.xlu0 %v1736
  %v1738 = vpop.xlane.xlu0 %1737
  %v1739 = vsel %vm63, %v1727, 0.0
  %1740 = vadd.xlane.f32.xlu0 %v1739
  %v1741 = vpop.xlane.xlu0 %1740
  %v1742 = vsel %vm63, %v1728, 0.0
  %1743 = vadd.xlane.f32.xlu0 %v1742
  %v1744 = vpop.xlane.xlu0 %1743
  %v1745 = vsel %vm63, %v1729, 0.0
  %1746 = vadd.xlane.f32.xlu0 %v1745
  %v1747 = vpop.xlane.xlu0 %1746
  %v1748 = vsel %vm63, %v1730, 0.0
  %1749 = vadd.xlane.f32.xlu0 %v1748
  %v1750 = vpop.xlane.xlu0 %1749
  %v1751 = vsel %vm63, %v1731, 0.0
  %1752 = vadd.xlane.f32.xlu0 %v1751
  %v1753 = vpop.xlane.xlu0 %1752
  %v1754 = vsel %vm63, %v1732, 0.0
  %1755 = vadd.xlane.f32.xlu0 %v1754
  %v1756 = vpop.xlane.xlu0 %1755
  %v1757 = vmul.f32 %v1735, %v94
  %v1758 = vmul.f32 %v1738, %v94
  %v1759 = vmul.f32 %v1741, %v94
  %v1760 = vmul.f32 %v1744, %v94
  %v1761 = vmul.f32 %v1747, %v94
  %v1762 = vmul.f32 %v1750, %v94
  %v1763 = vmul.f32 %v1753, %v94
  %v1764 = vmul.f32 %v1756, %v94
  %v1765 = vadd.f32 %v1757, 1e-06
  %v1766 = vadd.f32 %v1758, 1e-06
  %v1767 = vadd.f32 %v1759, 1e-06
  %v1768 = vadd.f32 %v1760, 1e-06
  %v1769 = vadd.f32 %v1761, 1e-06
  %v1770 = vadd.f32 %v1762, 1e-06
  %v1771 = vadd.f32 %v1763, 1e-06
  %v1772 = vadd.f32 %v1764, 1e-06
  %v1773 = vrsqrt.pop %v1765
  %v1774 = vmul.f32 %v1773, %v1765
  %v1775 = vmul.f32 %v1774, %v1773
  %v1776 = vmul.f32 0.5, %v1775
  %v1777 = vsub.f32 1.5, %v1776
  %v1778 = vmul.f32 %v1773, %v1777
  %vm1779 = vweird.f32 %v1765
  %vm1780 = vweird.f32 %v1773
  %vm1781 = vmor %vm1779, %vm1780
  %v1782 = vsel %vm1781, %v1773, %v1778
  %v1783 = vrsqrt.pop %v1766
  %v1784 = vmul.f32 %v1783, %v1766
  %v1785 = vmul.f32 %v1784, %v1783
  %v1786 = vmul.f32 0.5, %v1785
  %v1787 = vsub.f32 1.5, %v1786
  %v1788 = vmul.f32 %v1783, %v1787
  %vm1789 = vweird.f32 %v1766
  %vm1790 = vweird.f32 %v1783
  %vm1791 = vmor %vm1789, %vm1790
  %v1792 = vsel %vm1791, %v1783, %v1788
  %v1793 = vrsqrt.pop %v1767
  %v1794 = vmul.f32 %v1793, %v1767
  %v1795 = vmul.f32 %v1794, %v1793
  %v1796 = vmul.f32 0.5, %v1795
  %v1797 = vsub.f32 1.5, %v1796
  %v1798 = vmul.f32 %v1793, %v1797
  %vm1799 = vweird.f32 %v1767
  %vm1800 = vweird.f32 %v1793
  %vm1801 = vmor %vm1799, %vm1800
  %v1802 = vsel %vm1801, %v1793, %v1798
  %v1803 = vrsqrt.pop %v1768
  %v1804 = vmul.f32 %v1803, %v1768
  %v1805 = vmul.f32 %v1804, %v1803
  %v1806 = vmul.f32 0.5, %v1805
  %v1807 = vsub.f32 1.5, %v1806
  %v1808 = vmul.f32 %v1803, %v1807
  %vm1809 = vweird.f32 %v1768
  %vm1810 = vweird.f32 %v1803
  %vm1811 = vmor %vm1809, %vm1810
  %v1812 = vsel %vm1811, %v1803, %v1808
  %v1813 = vrsqrt.pop %v1769
  %v1814 = vmul.f32 %v1813, %v1769
  %v1815 = vmul.f32 %v1814, %v1813
  %v1816 = vmul.f32 0.5, %v1815
  %v1817 = vsub.f32 1.5, %v1816
  %v1818 = vmul.f32 %v1813, %v1817
  %vm1819 = vweird.f32 %v1769
  %vm1820 = vweird.f32 %v1813
  %vm1821 = vmor %vm1819, %vm1820
  %v1822 = vsel %vm1821, %v1813, %v1818
  %v1823 = vrsqrt.pop %v1770
  %v1824 = vmul.f32 %v1823, %v1770
  %v1825 = vmul.f32 %v1824, %v1823
  %v1826 = vmul.f32 0.5, %v1825
  %v1827 = vsub.f32 1.5, %v1826
  %v1828 = vmul.f32 %v1823, %v1827
  %vm1829 = vweird.f32 %v1770
  %vm1830 = vweird.f32 %v1823
  %vm1831 = vmor %vm1829, %vm1830
  %v1832 = vsel %vm1831, %v1823, %v1828
  %v1833 = vrsqrt.pop %v1771
  %v1834 = vmul.f32 %v1833, %v1771
  %v1835 = vmul.f32 %v1834, %v1833
  %v1836 = vmul.f32 0.5, %v1835
  %v1837 = vsub.f32 1.5, %v1836
  %v1838 = vmul.f32 %v1833, %v1837
  %vm1839 = vweird.f32 %v1771
  %vm1840 = vweird.f32 %v1833
  %vm1841 = vmor %vm1839, %vm1840
  %v1842 = vsel %vm1841, %v1833, %v1838
  %v1843 = vrsqrt.pop %v1772
  %v1844 = vmul.f32 %v1843, %v1772
  %v1845 = vmul.f32 %v1844, %v1843
  %v1846 = vmul.f32 0.5, %v1845
  %v1847 = vsub.f32 1.5, %v1846
  %v1848 = vmul.f32 %v1843, %v1847
  %vm1849 = vweird.f32 %v1772
  %vm1850 = vweird.f32 %v1843
  %vm1851 = vmor %vm1849, %vm1850
  %v1852 = vsel %vm1851, %v1843, %v1848
  %v1853 = vmul.f32 %v1716, %v1782
  %v1854 = vmul.f32 %v1717, %v1792
  %v1855 = vmul.f32 %v1718, %v1802
  %v1856 = vmul.f32 %v1719, %v1812
  %v1857 = vmul.f32 %v1720, %v1822
  %v1858 = vmul.f32 %v1721, %v1832
  %v1859 = vmul.f32 %v1722, %v1842
  %v1860 = vmul.f32 %v1723, %v1852
  %v1862 = vperm.slane %v1724, 0
  %v1864 = vmul.f32 %v1853, %v1862
  %v1865 = vmul.f32 %v1854, %v1862
  %v1866 = vmul.f32 %v1855, %v1862
  %v1867 = vmul.f32 %v1856, %v1862
  %v1868 = vmul.f32 %v1857, %v1862
  %v1869 = vmul.f32 %v1858, %v1862
  %v1870 = vmul.f32 %v1859, %v1862
  %v1871 = vmul.f32 %v1860, %v1862
  %v1872 = vld [vmem:[%s6] sm:$0xff]
  %v1873 = vld [vmem:[%s6 + $0x8] sm:$0xff]
  %v1874 = vld [vmem:[%s6 + $0x10] sm:$0xff]
  %v1875 = vld [vmem:[%s6 + $0x18] sm:$0xff]
  %v1877 = vsel %vm63, %v1864, 0
  %v1880 = vsel %vm63, %v1865, 0
  %v1883 = vsel %vm63, %v1866, 0
  %v1886 = vsel %vm63, %v1867, 0
  %v1889 = vsel %vm63, %v1868, 0
  %v1892 = vsel %vm63, %v1869, 0
  %v1895 = vsel %vm63, %v1870, 0
  %v1898 = vsel %vm63, %v1871, 0
  %1900 = vmatpush.msra.mxu0 0.0
  %1901 = vmatpush.msra.mxu0 0.0
  %1902 = vmatpush.msra.mxu0 0.0
  %1903 = vmatpush.msra.mxu0 0.0
  %1904 = vmatpush.msra.mxu0 0.0
  %1905 = vmatpush.msra.mxu0 0.0
  %1906 = vmatpush.msra.mxu0 0.0
  %1907 = vmatpush.msra.mxu0 0.0
  %1908 = vmatpush.msra.mxu0 0.0
  %1909 = vmatpush.msra.mxu0 0.0
  %1910 = vmatpush.msra.mxu0 0.0
  %1911 = vmatpush.msra.mxu0 0.0
  %1912 = vmatpush.msra.mxu0 %v1875
  %1913 = vmatpush.msra.mxu0 %v1874
  %1914 = vmatpush.msra.mxu0 %v1873
  %1915 = vmatpush.msra.mxu0 %v1872
  %1916 = vmatmul.f32.gmra.mxu0 %v1877
  %v1917 = vpop.f32.mrf.mxu0
  %v1918 = vadd.f32 0.0, %v1917
  %1919 = vmatmul.f32.gmra.mxu0 %v1880
  %v1920 = vpop.f32.mrf.mxu0
  %v1921 = vadd.f32 0.0, %v1920
  %1922 = vmatmul.f32.gmra.mxu0 %v1883
  %v1923 = vpop.f32.mrf.mxu0
  %v1924 = vadd.f32 0.0, %v1923
  %1925 = vmatmul.f32.gmra.mxu0 %v1886
  %v1926 = vpop.f32.mrf.mxu0
  %v1927 = vadd.f32 0.0, %v1926
  %1928 = vmatmul.f32.gmra.mxu0 %v1889
  %v1929 = vpop.f32.mrf.mxu0
  %v1930 = vadd.f32 0.0, %v1929
  %1931 = vmatmul.f32.gmra.mxu0 %v1892
  %v1932 = vpop.f32.mrf.mxu0
  %v1933 = vadd.f32 0.0, %v1932
  %1934 = vmatmul.f32.gmra.mxu0 %v1895
  %v1935 = vpop.f32.mrf.mxu0
  %v1936 = vadd.f32 0.0, %v1935
  %1937 = vmatmul.f32.gmra.mxu0 %v1898
  %v1938 = vpop.f32.mrf.mxu0
  %v1939 = vadd.f32 0.0, %v1938
  %1940 = vdwg.mxu0
  %v1941 = vmax.f32 %v1918, 0.0
  %v1942 = vmax.f32 %v1921, 0.0
  %v1943 = vmax.f32 %v1924, 0.0
  %v1944 = vmax.f32 %v1927, 0.0
  %v1945 = vmax.f32 %v1930, 0.0
  %v1946 = vmax.f32 %v1933, 0.0
  %v1947 = vmax.f32 %v1936, 0.0
  %v1948 = vmax.f32 %v1939, 0.0
  %v1949 = vld [vmem:[%s7] sm:$0xff]
  %v1950 = vld [vmem:[%s7 + $0x8] sm:$0xff]
  %v1951 = vld [vmem:[%s7 + $0x10] sm:$0xff]
  %v1952 = vld [vmem:[%s7 + $0x18] sm:$0xff]
  %v1953 = vld [vmem:[%s7 + $0x20] sm:$0xff]
  %v1954 = vld [vmem:[%s7 + $0x28] sm:$0xff]
  %v1955 = vld [vmem:[%s7 + $0x30] sm:$0xff]
  %v1956 = vld [vmem:[%s7 + $0x38] sm:$0xff]
  %v1958 = vsel %vm389, %v1941, 0
  %v1961 = vsel %vm389, %v1942, 0
  %v1964 = vsel %vm389, %v1943, 0
  %v1967 = vsel %vm389, %v1944, 0
  %v1970 = vsel %vm389, %v1945, 0
  %v1973 = vsel %vm389, %v1946, 0
  %v1976 = vsel %vm389, %v1947, 0
  %v1979 = vsel %vm389, %v1948, 0
  %1981 = vmatpush.msra.mxu0 0.0
  %1982 = vmatpush.msra.mxu0 0.0
  %1983 = vmatpush.msra.mxu0 0.0
  %1984 = vmatpush.msra.mxu0 0.0
  %1985 = vmatpush.msra.mxu0 0.0
  %1986 = vmatpush.msra.mxu0 0.0
  %1987 = vmatpush.msra.mxu0 0.0
  %1988 = vmatpush.msra.mxu0 0.0
  %1989 = vmatpush.msra.mxu0 %v1956
  %1990 = vmatpush.msra.mxu0 %v1955
  %1991 = vmatpush.msra.mxu0 %v1954
  %1992 = vmatpush.msra.mxu0 %v1953
  %1993 = vmatpush.msra.mxu0 %v1952
  %1994 = vmatpush.msra.mxu0 %v1951
  %1995 = vmatpush.msra.mxu0 %v1950
  %1996 = vmatpush.msra.mxu0 %v1949
  %1997 = vmatmul.f32.gmra.mxu0 %v1958
  %v1998 = vpop.f32.mrf.mxu0
  %v1999 = vadd.f32 0.0, %v1998
  %2000 = vmatmul.f32.gmra.mxu0 %v1961
  %v2001 = vpop.f32.mrf.mxu0
  %v2002 = vadd.f32 0.0, %v2001
  %2003 = vmatmul.f32.gmra.mxu0 %v1964
  %v2004 = vpop.f32.mrf.mxu0
  %v2005 = vadd.f32 0.0, %v2004
  %2006 = vmatmul.f32.gmra.mxu0 %v1967
  %v2007 = vpop.f32.mrf.mxu0
  %v2008 = vadd.f32 0.0, %v2007
  %2009 = vmatmul.f32.gmra.mxu0 %v1970
  %v2010 = vpop.f32.mrf.mxu0
  %v2011 = vadd.f32 0.0, %v2010
  %2012 = vmatmul.f32.gmra.mxu0 %v1973
  %v2013 = vpop.f32.mrf.mxu0
  %v2014 = vadd.f32 0.0, %v2013
  %2015 = vmatmul.f32.gmra.mxu0 %v1976
  %v2016 = vpop.f32.mrf.mxu0
  %v2017 = vadd.f32 0.0, %v2016
  %2018 = vmatmul.f32.gmra.mxu0 %v1979
  %v2019 = vpop.f32.mrf.mxu0
  %v2020 = vadd.f32 0.0, %v2019
  %2021 = vdwg.mxu0
  %v2022 = vadd.f32 %v1716, %v1999
  %v2023 = vadd.f32 %v1717, %v2002
  %v2024 = vadd.f32 %v1718, %v2005
  %v2025 = vadd.f32 %v1719, %v2008
  %v2026 = vadd.f32 %v1720, %v2011
  %v2027 = vadd.f32 %v1721, %v2014
  %v2028 = vadd.f32 %v1722, %v2017
  %v2029 = vadd.f32 %v1723, %v2020
  %s2030 = scalar_lea.vmem %s2, 1
  %v2031 = vld [vmem:[%s2030] sm:$0x1]
  %v2032 = vmul.f32 %v2022, %v2022
  %v2033 = vmul.f32 %v2023, %v2023
  %v2034 = vmul.f32 %v2024, %v2024
  %v2035 = vmul.f32 %v2025, %v2025
  %v2036 = vmul.f32 %v2026, %v2026
  %v2037 = vmul.f32 %v2027, %v2027
  %v2038 = vmul.f32 %v2028, %v2028
  %v2039 = vmul.f32 %v2029, %v2029
  %v2040 = vsel %vm63, %v2032, 0.0
  %2041 = vadd.xlane.f32.xlu0 %v2040
  %v2042 = vpop.xlane.xlu0 %2041
  %v2043 = vsel %vm63, %v2033, 0.0
  %2044 = vadd.xlane.f32.xlu0 %v2043
  %v2045 = vpop.xlane.xlu0 %2044
  %v2046 = vsel %vm63, %v2034, 0.0
  %2047 = vadd.xlane.f32.xlu0 %v2046
  %v2048 = vpop.xlane.xlu0 %2047
  %v2049 = vsel %vm63, %v2035, 0.0
  %2050 = vadd.xlane.f32.xlu0 %v2049
  %v2051 = vpop.xlane.xlu0 %2050
  %v2052 = vsel %vm63, %v2036, 0.0
  %2053 = vadd.xlane.f32.xlu0 %v2052
  %v2054 = vpop.xlane.xlu0 %2053
  %v2055 = vsel %vm63, %v2037, 0.0
  %2056 = vadd.xlane.f32.xlu0 %v2055
  %v2057 = vpop.xlane.xlu0 %2056
  %v2058 = vsel %vm63, %v2038, 0.0
  %2059 = vadd.xlane.f32.xlu0 %v2058
  %v2060 = vpop.xlane.xlu0 %2059
  %v2061 = vsel %vm63, %v2039, 0.0
  %2062 = vadd.xlane.f32.xlu0 %v2061
  %v2063 = vpop.xlane.xlu0 %2062
  %v2064 = vmul.f32 %v2042, %v94
  %v2065 = vmul.f32 %v2045, %v94
  %v2066 = vmul.f32 %v2048, %v94
  %v2067 = vmul.f32 %v2051, %v94
  %v2068 = vmul.f32 %v2054, %v94
  %v2069 = vmul.f32 %v2057, %v94
  %v2070 = vmul.f32 %v2060, %v94
  %v2071 = vmul.f32 %v2063, %v94
  %v2072 = vadd.f32 %v2064, 1e-06
  %v2073 = vadd.f32 %v2065, 1e-06
  %v2074 = vadd.f32 %v2066, 1e-06
  %v2075 = vadd.f32 %v2067, 1e-06
  %v2076 = vadd.f32 %v2068, 1e-06
  %v2077 = vadd.f32 %v2069, 1e-06
  %v2078 = vadd.f32 %v2070, 1e-06
  %v2079 = vadd.f32 %v2071, 1e-06
  %v2080 = vrsqrt.pop %v2072
  %v2081 = vmul.f32 %v2080, %v2072
  %v2082 = vmul.f32 %v2081, %v2080
  %v2083 = vmul.f32 0.5, %v2082
  %v2084 = vsub.f32 1.5, %v2083
  %v2085 = vmul.f32 %v2080, %v2084
  %vm2086 = vweird.f32 %v2072
  %vm2087 = vweird.f32 %v2080
  %vm2088 = vmor %vm2086, %vm2087
  %v2089 = vsel %vm2088, %v2080, %v2085
  %v2090 = vrsqrt.pop %v2073
  %v2091 = vmul.f32 %v2090, %v2073
  %v2092 = vmul.f32 %v2091, %v2090
  %v2093 = vmul.f32 0.5, %v2092
  %v2094 = vsub.f32 1.5, %v2093
  %v2095 = vmul.f32 %v2090, %v2094
  %vm2096 = vweird.f32 %v2073
  %vm2097 = vweird.f32 %v2090
  %vm2098 = vmor %vm2096, %vm2097
  %v2099 = vsel %vm2098, %v2090, %v2095
  %v2100 = vrsqrt.pop %v2074
  %v2101 = vmul.f32 %v2100, %v2074
  %v2102 = vmul.f32 %v2101, %v2100
  %v2103 = vmul.f32 0.5, %v2102
  %v2104 = vsub.f32 1.5, %v2103
  %v2105 = vmul.f32 %v2100, %v2104
  %vm2106 = vweird.f32 %v2074
  %vm2107 = vweird.f32 %v2100
  %vm2108 = vmor %vm2106, %vm2107
  %v2109 = vsel %vm2108, %v2100, %v2105
  %v2110 = vrsqrt.pop %v2075
  %v2111 = vmul.f32 %v2110, %v2075
  %v2112 = vmul.f32 %v2111, %v2110
  %v2113 = vmul.f32 0.5, %v2112
  %v2114 = vsub.f32 1.5, %v2113
  %v2115 = vmul.f32 %v2110, %v2114
  %vm2116 = vweird.f32 %v2075
  %vm2117 = vweird.f32 %v2110
  %vm2118 = vmor %vm2116, %vm2117
  %v2119 = vsel %vm2118, %v2110, %v2115
  %v2120 = vrsqrt.pop %v2076
  %v2121 = vmul.f32 %v2120, %v2076
  %v2122 = vmul.f32 %v2121, %v2120
  %v2123 = vmul.f32 0.5, %v2122
  %v2124 = vsub.f32 1.5, %v2123
  %v2125 = vmul.f32 %v2120, %v2124
  %vm2126 = vweird.f32 %v2076
  %vm2127 = vweird.f32 %v2120
  %vm2128 = vmor %vm2126, %vm2127
  %v2129 = vsel %vm2128, %v2120, %v2125
  %v2130 = vrsqrt.pop %v2077
  %v2131 = vmul.f32 %v2130, %v2077
  %v2132 = vmul.f32 %v2131, %v2130
  %v2133 = vmul.f32 0.5, %v2132
  %v2134 = vsub.f32 1.5, %v2133
  %v2135 = vmul.f32 %v2130, %v2134
  %vm2136 = vweird.f32 %v2077
  %vm2137 = vweird.f32 %v2130
  %vm2138 = vmor %vm2136, %vm2137
  %v2139 = vsel %vm2138, %v2130, %v2135
  %v2140 = vrsqrt.pop %v2078
  %v2141 = vmul.f32 %v2140, %v2078
  %v2142 = vmul.f32 %v2141, %v2140
  %v2143 = vmul.f32 0.5, %v2142
  %v2144 = vsub.f32 1.5, %v2143
  %v2145 = vmul.f32 %v2140, %v2144
  %vm2146 = vweird.f32 %v2078
  %vm2147 = vweird.f32 %v2140
  %vm2148 = vmor %vm2146, %vm2147
  %v2149 = vsel %vm2148, %v2140, %v2145
  %v2150 = vrsqrt.pop %v2079
  %v2151 = vmul.f32 %v2150, %v2079
  %v2152 = vmul.f32 %v2151, %v2150
  %v2153 = vmul.f32 0.5, %v2152
  %v2154 = vsub.f32 1.5, %v2153
  %v2155 = vmul.f32 %v2150, %v2154
  %vm2156 = vweird.f32 %v2079
  %vm2157 = vweird.f32 %v2150
  %vm2158 = vmor %vm2156, %vm2157
  %v2159 = vsel %vm2158, %v2150, %v2155
  %v2160 = vmul.f32 %v2022, %v2089
  %v2161 = vmul.f32 %v2023, %v2099
  %v2162 = vmul.f32 %v2024, %v2109
  %v2163 = vmul.f32 %v2025, %v2119
  %v2164 = vmul.f32 %v2026, %v2129
  %v2165 = vmul.f32 %v2027, %v2139
  %v2166 = vmul.f32 %v2028, %v2149
  %v2167 = vmul.f32 %v2029, %v2159
  %v2169 = vperm.slane %v2031, 0
  %v2171 = vmul.f32 %v2160, %v2169
  %v2172 = vmul.f32 %v2161, %v2169
  %v2173 = vmul.f32 %v2162, %v2169
  %v2174 = vmul.f32 %v2163, %v2169
  %v2175 = vmul.f32 %v2164, %v2169
  %v2176 = vmul.f32 %v2165, %v2169
  %v2177 = vmul.f32 %v2166, %v2169
  %v2178 = vmul.f32 %v2167, %v2169
  %s2179 = scalar_lea.vmem %s3, 32
  %v2180 = vld [vmem:[%s2179] sm:$0xff]
  %v2181 = vld [vmem:[%s2179 + $0x8] sm:$0xff]
  %v2182 = vld [vmem:[%s2179 + $0x10] sm:$0xff]
  %v2183 = vld [vmem:[%s2179 + $0x18] sm:$0xff]
  %v2185 = vsel %vm63, %v2171, 0
  %v2188 = vsel %vm63, %v2172, 0
  %v2191 = vsel %vm63, %v2173, 0
  %v2194 = vsel %vm63, %v2174, 0
  %v2197 = vsel %vm63, %v2175, 0
  %v2200 = vsel %vm63, %v2176, 0
  %v2203 = vsel %vm63, %v2177, 0
  %v2206 = vsel %vm63, %v2178, 0
  %2208 = vmatpush.msra.mxu0 0.0
  %2209 = vmatpush.msra.mxu0 0.0
  %2210 = vmatpush.msra.mxu0 0.0
  %2211 = vmatpush.msra.mxu0 0.0
  %2212 = vmatpush.msra.mxu0 0.0
  %2213 = vmatpush.msra.mxu0 0.0
  %2214 = vmatpush.msra.mxu0 0.0
  %2215 = vmatpush.msra.mxu0 0.0
  %2216 = vmatpush.msra.mxu0 0.0
  %2217 = vmatpush.msra.mxu0 0.0
  %2218 = vmatpush.msra.mxu0 0.0
  %2219 = vmatpush.msra.mxu0 0.0
  %2220 = vmatpush.msra.mxu0 %v2183
  %2221 = vmatpush.msra.mxu0 %v2182
  %2222 = vmatpush.msra.mxu0 %v2181
  %2223 = vmatpush.msra.mxu0 %v2180
  %2224 = vmatmul.f32.gmra.mxu0 %v2185
  %v2225 = vpop.f32.mrf.mxu0
  %v2226 = vadd.f32 0.0, %v2225
  %2227 = vmatmul.f32.gmra.mxu0 %v2188
  %v2228 = vpop.f32.mrf.mxu0
  %v2229 = vadd.f32 0.0, %v2228
  %2230 = vmatmul.f32.gmra.mxu0 %v2191
  %v2231 = vpop.f32.mrf.mxu0
  %v2232 = vadd.f32 0.0, %v2231
  %2233 = vmatmul.f32.gmra.mxu0 %v2194
  %v2234 = vpop.f32.mrf.mxu0
  %v2235 = vadd.f32 0.0, %v2234
  %2236 = vmatmul.f32.gmra.mxu0 %v2197
  %v2237 = vpop.f32.mrf.mxu0
  %v2238 = vadd.f32 0.0, %v2237
  %2239 = vmatmul.f32.gmra.mxu0 %v2200
  %v2240 = vpop.f32.mrf.mxu0
  %v2241 = vadd.f32 0.0, %v2240
  %2242 = vmatmul.f32.gmra.mxu0 %v2203
  %v2243 = vpop.f32.mrf.mxu0
  %v2244 = vadd.f32 0.0, %v2243
  %2245 = vmatmul.f32.gmra.mxu0 %v2206
  %v2246 = vpop.f32.mrf.mxu0
  %v2247 = vadd.f32 0.0, %v2246
  %2248 = vdwg.mxu0
  %s2249 = scalar_lea.vmem %s4, 32
  %v2250 = vld [vmem:[%s2249] sm:$0xff]
  %v2251 = vld [vmem:[%s2249 + $0x8] sm:$0xff]
  %v2252 = vld [vmem:[%s2249 + $0x10] sm:$0xff]
  %v2253 = vld [vmem:[%s2249 + $0x18] sm:$0xff]
  %2262 = vrot.lane.b32.xlu0 %v2226, 96
  %v2263 = vpop.permute.xlu0 %2262
  %2264 = vrot.lane.b32.xlu0 %v2229, 96
  %v2265 = vpop.permute.xlu0 %2264
  %2266 = vrot.lane.b32.xlu0 %v2232, 96
  %v2267 = vpop.permute.xlu0 %2266
  %2268 = vrot.lane.b32.xlu0 %v2235, 96
  %v2269 = vpop.permute.xlu0 %2268
  %2270 = vrot.lane.b32.xlu0 %v2238, 96
  %v2271 = vpop.permute.xlu0 %2270
  %2272 = vrot.lane.b32.xlu0 %v2241, 96
  %v2273 = vpop.permute.xlu0 %2272
  %2274 = vrot.lane.b32.xlu0 %v2244, 96
  %v2275 = vpop.permute.xlu0 %2274
  %2276 = vrot.lane.b32.xlu0 %v2247, 96
  %v2277 = vpop.permute.xlu0 %2276
  %v2278 = vsel %vm315, %v2226, 0
  %v2280 = vsel %vm315, %v2229, 0
  %v2282 = vsel %vm315, %v2232, 0
  %v2284 = vsel %vm315, %v2235, 0
  %v2286 = vsel %vm315, %v2238, 0
  %v2288 = vsel %vm315, %v2241, 0
  %v2290 = vsel %vm315, %v2244, 0
  %v2292 = vsel %vm315, %v2247, 0
  %v2294 = vsel %vm315, %v2263, 0
  %v2296 = vsel %vm315, %v2265, 0
  %v2298 = vsel %vm315, %v2267, 0
  %v2300 = vsel %vm315, %v2269, 0
  %v2302 = vsel %vm315, %v2271, 0
  %v2304 = vsel %vm315, %v2273, 0
  %v2306 = vsel %vm315, %v2275, 0
  %v2308 = vsel %vm315, %v2277, 0
  %2310 = vmatpush.xpose.msra.mxu0 0.0
  %2311 = vmatpush.xpose.msra.mxu0 0.0
  %2312 = vmatpush.xpose.msra.mxu0 0.0
  %2313 = vmatpush.xpose.msra.mxu0 0.0
  %2314 = vmatpush.xpose.msra.mxu0 0.0
  %2315 = vmatpush.xpose.msra.mxu0 0.0
  %2316 = vmatpush.xpose.msra.mxu0 0.0
  %2317 = vmatpush.xpose.msra.mxu0 0.0
  %2318 = vmatpush.xpose.msra.mxu0 %v2308
  %2319 = vmatpush.xpose.msra.mxu0 %v2306
  %2320 = vmatpush.xpose.msra.mxu0 %v2304
  %2321 = vmatpush.xpose.msra.mxu0 %v2302
  %2322 = vmatpush.xpose.msra.mxu0 %v2300
  %2323 = vmatpush.xpose.msra.mxu0 %v2298
  %2324 = vmatpush.xpose.msra.mxu0 %v2296
  %2325 = vmatpush.xpose.msra.mxu0 %v2294
  %2326 = vmatmul.f32.gmra.mxu0 %v2278
  %v2327 = vpop.f32.mrf.mxu0
  %v2328 = vadd.f32 %v283, %v2327
  %2329 = vmatmul.f32.gmra.mxu0 %v2280
  %v2330 = vpop.f32.mrf.mxu0
  %v2331 = vadd.f32 %v284, %v2330
  %2332 = vmatmul.f32.gmra.mxu0 %v2282
  %v2333 = vpop.f32.mrf.mxu0
  %v2334 = vadd.f32 %v285, %v2333
  %2335 = vmatmul.f32.gmra.mxu0 %v2284
  %v2336 = vpop.f32.mrf.mxu0
  %v2337 = vadd.f32 %v286, %v2336
  %2338 = vmatmul.f32.gmra.mxu0 %v2286
  %v2339 = vpop.f32.mrf.mxu0
  %v2340 = vadd.f32 %v287, %v2339
  %2341 = vmatmul.f32.gmra.mxu0 %v2288
  %v2342 = vpop.f32.mrf.mxu0
  %v2343 = vadd.f32 %v288, %v2342
  %2344 = vmatmul.f32.gmra.mxu0 %v2290
  %v2345 = vpop.f32.mrf.mxu0
  %v2346 = vadd.f32 %v289, %v2345
  %2347 = vmatmul.f32.gmra.mxu0 %v2292
  %v2348 = vpop.f32.mrf.mxu0
  %v2349 = vadd.f32 %v290, %v2348
  %2350 = vdwg.mxu0
  %v2351 = vsel %vm389, %v2328, -inf
  %2352 = vmax.xlane.f32.xlu0 %v2351
  %v2353 = vpop.xlane.xlu0 %2352
  %v2354 = vsel %vm389, %v2331, -inf
  %2355 = vmax.xlane.f32.xlu0 %v2354
  %v2356 = vpop.xlane.xlu0 %2355
  %v2357 = vsel %vm389, %v2334, -inf
  %2358 = vmax.xlane.f32.xlu0 %v2357
  %v2359 = vpop.xlane.xlu0 %2358
  %v2360 = vsel %vm389, %v2337, -inf
  %2361 = vmax.xlane.f32.xlu0 %v2360
  %v2362 = vpop.xlane.xlu0 %2361
  %v2363 = vsel %vm389, %v2340, -inf
  %2364 = vmax.xlane.f32.xlu0 %v2363
  %v2365 = vpop.xlane.xlu0 %2364
  %v2366 = vsel %vm389, %v2343, -inf
  %2367 = vmax.xlane.f32.xlu0 %v2366
  %v2368 = vpop.xlane.xlu0 %2367
  %v2369 = vsel %vm389, %v2346, -inf
  %2370 = vmax.xlane.f32.xlu0 %v2369
  %v2371 = vpop.xlane.xlu0 %2370
  %v2372 = vsel %vm389, %v2349, -inf
  %2373 = vmax.xlane.f32.xlu0 %v2372
  %v2374 = vpop.xlane.xlu0 %2373
  %v2375 = vsub.f32 %v2328, %v2353
  %v2376 = vsub.f32 %v2331, %v2356
  %v2377 = vsub.f32 %v2334, %v2359
  %v2378 = vsub.f32 %v2337, %v2362
  %v2379 = vsub.f32 %v2340, %v2365
  %v2380 = vsub.f32 %v2343, %v2368
  %v2381 = vsub.f32 %v2346, %v2371
  %v2382 = vsub.f32 %v2349, %v2374
  %v2383 = vmul.f32 %v2375, 1.442695
  %v2384 = vpow.pop %v2383
  %v2385 = vmul.f32 %v2376, 1.442695
  %v2386 = vpow.pop %v2385
  %v2387 = vmul.f32 %v2377, 1.442695
  %v2388 = vpow.pop %v2387
  %v2389 = vmul.f32 %v2378, 1.442695
  %v2390 = vpow.pop %v2389
  %v2391 = vmul.f32 %v2379, 1.442695
  %v2392 = vpow.pop %v2391
  %v2393 = vmul.f32 %v2380, 1.442695
  %v2394 = vpow.pop %v2393
  %v2395 = vmul.f32 %v2381, 1.442695
  %v2396 = vpow.pop %v2395
  %v2397 = vmul.f32 %v2382, 1.442695
  %v2398 = vpow.pop %v2397
  %v2399 = vsel %vm389, %v2384, 0.0
  %2400 = vadd.xlane.f32.xlu0 %v2399
  %v2401 = vpop.xlane.xlu0 %2400
  %v2402 = vsel %vm389, %v2386, 0.0
  %2403 = vadd.xlane.f32.xlu0 %v2402
  %v2404 = vpop.xlane.xlu0 %2403
  %v2405 = vsel %vm389, %v2388, 0.0
  %2406 = vadd.xlane.f32.xlu0 %v2405
  %v2407 = vpop.xlane.xlu0 %2406
  %v2408 = vsel %vm389, %v2390, 0.0
  %2409 = vadd.xlane.f32.xlu0 %v2408
  %v2410 = vpop.xlane.xlu0 %2409
  %v2411 = vsel %vm389, %v2392, 0.0
  %2412 = vadd.xlane.f32.xlu0 %v2411
  %v2413 = vpop.xlane.xlu0 %2412
  %v2414 = vsel %vm389, %v2394, 0.0
  %2415 = vadd.xlane.f32.xlu0 %v2414
  %v2416 = vpop.xlane.xlu0 %2415
  %v2417 = vsel %vm389, %v2396, 0.0
  %2418 = vadd.xlane.f32.xlu0 %v2417
  %v2419 = vpop.xlane.xlu0 %2418
  %v2420 = vsel %vm389, %v2398, 0.0
  %2421 = vadd.xlane.f32.xlu0 %v2420
  %v2422 = vpop.xlane.xlu0 %2421
  %v2423 = vrcp.pop %v2401
  %v2424 = vrcp.pop %v2404
  %v2425 = vrcp.pop %v2407
  %v2426 = vrcp.pop %v2410
  %v2427 = vrcp.pop %v2413
  %v2428 = vrcp.pop %v2416
  %v2429 = vrcp.pop %v2419
  %v2430 = vrcp.pop %v2422
  %v2431 = vmul.f32 %v2384, %v2423
  %v2432 = vmul.f32 %v2386, %v2424
  %v2433 = vmul.f32 %v2388, %v2425
  %v2434 = vmul.f32 %v2390, %v2426
  %v2435 = vmul.f32 %v2392, %v2427
  %v2436 = vmul.f32 %v2394, %v2428
  %v2437 = vmul.f32 %v2396, %v2429
  %v2438 = vmul.f32 %v2398, %v2430
  %2439 = vrot.lane.b32.xlu0 %v2226, 64
  %v2440 = vpop.permute.xlu0 %2439
  %2441 = vrot.lane.b32.xlu0 %v2229, 64
  %v2442 = vpop.permute.xlu0 %2441
  %2443 = vrot.lane.b32.xlu0 %v2232, 64
  %v2444 = vpop.permute.xlu0 %2443
  %2445 = vrot.lane.b32.xlu0 %v2235, 64
  %v2446 = vpop.permute.xlu0 %2445
  %2447 = vrot.lane.b32.xlu0 %v2238, 64
  %v2448 = vpop.permute.xlu0 %2447
  %2449 = vrot.lane.b32.xlu0 %v2241, 64
  %v2450 = vpop.permute.xlu0 %2449
  %2451 = vrot.lane.b32.xlu0 %v2244, 64
  %v2452 = vpop.permute.xlu0 %2451
  %2453 = vrot.lane.b32.xlu0 %v2247, 64
  %v2454 = vpop.permute.xlu0 %2453
  %v2464 = vsel %vm389, %v2431, 0
  %v2467 = vsel %vm389, %v2432, 0
  %v2470 = vsel %vm389, %v2433, 0
  %v2473 = vsel %vm389, %v2434, 0
  %v2476 = vsel %vm389, %v2435, 0
  %v2479 = vsel %vm389, %v2436, 0
  %v2482 = vsel %vm389, %v2437, 0
  %v2485 = vsel %vm389, %v2438, 0
  %2487 = vmatpush.msra.mxu0 0.0
  %2488 = vmatpush.msra.mxu0 0.0
  %2489 = vmatpush.msra.mxu0 0.0
  %2490 = vmatpush.msra.mxu0 0.0
  %2491 = vmatpush.msra.mxu0 0.0
  %2492 = vmatpush.msra.mxu0 0.0
  %2493 = vmatpush.msra.mxu0 0.0
  %2494 = vmatpush.msra.mxu0 0.0
  %2495 = vmatpush.msra.mxu0 %v2454
  %2496 = vmatpush.msra.mxu0 %v2452
  %2497 = vmatpush.msra.mxu0 %v2450
  %2498 = vmatpush.msra.mxu0 %v2448
  %2499 = vmatpush.msra.mxu0 %v2446
  %2500 = vmatpush.msra.mxu0 %v2444
  %2501 = vmatpush.msra.mxu0 %v2442
  %2502 = vmatpush.msra.mxu0 %v2440
  %2503 = vmatmul.f32.gmra.mxu0 %v2464
  %v2504 = vpop.f32.mrf.mxu0
  %v2505 = vadd.f32 0.0, %v2504
  %2506 = vmatmul.f32.gmra.mxu0 %v2467
  %v2507 = vpop.f32.mrf.mxu0
  %v2508 = vadd.f32 0.0, %v2507
  %2509 = vmatmul.f32.gmra.mxu0 %v2470
  %v2510 = vpop.f32.mrf.mxu0
  %v2511 = vadd.f32 0.0, %v2510
  %2512 = vmatmul.f32.gmra.mxu0 %v2473
  %v2513 = vpop.f32.mrf.mxu0
  %v2514 = vadd.f32 0.0, %v2513
  %2515 = vmatmul.f32.gmra.mxu0 %v2476
  %v2516 = vpop.f32.mrf.mxu0
  %v2517 = vadd.f32 0.0, %v2516
  %2518 = vmatmul.f32.gmra.mxu0 %v2479
  %v2519 = vpop.f32.mrf.mxu0
  %v2520 = vadd.f32 0.0, %v2519
  %2521 = vmatmul.f32.gmra.mxu0 %v2482
  %v2522 = vpop.f32.mrf.mxu0
  %v2523 = vadd.f32 0.0, %v2522
  %2524 = vmatmul.f32.gmra.mxu0 %v2485
  %v2525 = vpop.f32.mrf.mxu0
  %v2526 = vadd.f32 0.0, %v2525
  %2527 = vdwg.mxu0
  %2528 = vrot.lane.b32.xlu0 %v2226, 120
  %v2529 = vpop.permute.xlu0 %2528
  %2530 = vrot.lane.b32.xlu0 %v2229, 120
  %v2531 = vpop.permute.xlu0 %2530
  %2532 = vrot.lane.b32.xlu0 %v2232, 120
  %v2533 = vpop.permute.xlu0 %2532
  %2534 = vrot.lane.b32.xlu0 %v2235, 120
  %v2535 = vpop.permute.xlu0 %2534
  %2536 = vrot.lane.b32.xlu0 %v2238, 120
  %v2537 = vpop.permute.xlu0 %2536
  %2538 = vrot.lane.b32.xlu0 %v2241, 120
  %v2539 = vpop.permute.xlu0 %2538
  %2540 = vrot.lane.b32.xlu0 %v2244, 120
  %v2541 = vpop.permute.xlu0 %2540
  %2542 = vrot.lane.b32.xlu0 %v2247, 120
  %v2543 = vpop.permute.xlu0 %2542
  %2544 = vrot.lane.b32.xlu0 %v2226, 88
  %v2545 = vpop.permute.xlu0 %2544
  %2546 = vrot.lane.b32.xlu0 %v2229, 88
  %v2547 = vpop.permute.xlu0 %2546
  %2548 = vrot.lane.b32.xlu0 %v2232, 88
  %v2549 = vpop.permute.xlu0 %2548
  %2550 = vrot.lane.b32.xlu0 %v2235, 88
  %v2551 = vpop.permute.xlu0 %2550
  %2552 = vrot.lane.b32.xlu0 %v2238, 88
  %v2553 = vpop.permute.xlu0 %2552
  %2554 = vrot.lane.b32.xlu0 %v2241, 88
  %v2555 = vpop.permute.xlu0 %2554
  %2556 = vrot.lane.b32.xlu0 %v2244, 88
  %v2557 = vpop.permute.xlu0 %2556
  %2558 = vrot.lane.b32.xlu0 %v2247, 88
  %v2559 = vpop.permute.xlu0 %2558
  %v2560 = vsel %vm315, %v2529, 0
  %v2562 = vsel %vm315, %v2531, 0
  %v2564 = vsel %vm315, %v2533, 0
  %v2566 = vsel %vm315, %v2535, 0
  %v2568 = vsel %vm315, %v2537, 0
  %v2570 = vsel %vm315, %v2539, 0
  %v2572 = vsel %vm315, %v2541, 0
  %v2574 = vsel %vm315, %v2543, 0
  %v2576 = vsel %vm315, %v2545, 0
  %v2578 = vsel %vm315, %v2547, 0
  %v2580 = vsel %vm315, %v2549, 0
  %v2582 = vsel %vm315, %v2551, 0
  %v2584 = vsel %vm315, %v2553, 0
  %v2586 = vsel %vm315, %v2555, 0
  %v2588 = vsel %vm315, %v2557, 0
  %v2590 = vsel %vm315, %v2559, 0
  %2592 = vmatpush.xpose.msra.mxu0 0.0
  %2593 = vmatpush.xpose.msra.mxu0 0.0
  %2594 = vmatpush.xpose.msra.mxu0 0.0
  %2595 = vmatpush.xpose.msra.mxu0 0.0
  %2596 = vmatpush.xpose.msra.mxu0 0.0
  %2597 = vmatpush.xpose.msra.mxu0 0.0
  %2598 = vmatpush.xpose.msra.mxu0 0.0
  %2599 = vmatpush.xpose.msra.mxu0 0.0
  %2600 = vmatpush.xpose.msra.mxu0 %v2590
  %2601 = vmatpush.xpose.msra.mxu0 %v2588
  %2602 = vmatpush.xpose.msra.mxu0 %v2586
  %2603 = vmatpush.xpose.msra.mxu0 %v2584
  %2604 = vmatpush.xpose.msra.mxu0 %v2582
  %2605 = vmatpush.xpose.msra.mxu0 %v2580
  %2606 = vmatpush.xpose.msra.mxu0 %v2578
  %2607 = vmatpush.xpose.msra.mxu0 %v2576
  %2608 = vmatmul.f32.gmra.mxu0 %v2560
  %v2609 = vpop.f32.mrf.mxu0
  %v2610 = vadd.f32 %v568, %v2609
  %2611 = vmatmul.f32.gmra.mxu0 %v2562
  %v2612 = vpop.f32.mrf.mxu0
  %v2613 = vadd.f32 %v569, %v2612
  %2614 = vmatmul.f32.gmra.mxu0 %v2564
  %v2615 = vpop.f32.mrf.mxu0
  %v2616 = vadd.f32 %v570, %v2615
  %2617 = vmatmul.f32.gmra.mxu0 %v2566
  %v2618 = vpop.f32.mrf.mxu0
  %v2619 = vadd.f32 %v571, %v2618
  %2620 = vmatmul.f32.gmra.mxu0 %v2568
  %v2621 = vpop.f32.mrf.mxu0
  %v2622 = vadd.f32 %v572, %v2621
  %2623 = vmatmul.f32.gmra.mxu0 %v2570
  %v2624 = vpop.f32.mrf.mxu0
  %v2625 = vadd.f32 %v573, %v2624
  %2626 = vmatmul.f32.gmra.mxu0 %v2572
  %v2627 = vpop.f32.mrf.mxu0
  %v2628 = vadd.f32 %v574, %v2627
  %2629 = vmatmul.f32.gmra.mxu0 %v2574
  %v2630 = vpop.f32.mrf.mxu0
  %v2631 = vadd.f32 %v575, %v2630
  %2632 = vdwg.mxu0
  %v2633 = vsel %vm389, %v2610, -inf
  %2634 = vmax.xlane.f32.xlu0 %v2633
  %v2635 = vpop.xlane.xlu0 %2634
  %v2636 = vsel %vm389, %v2613, -inf
  %2637 = vmax.xlane.f32.xlu0 %v2636
  %v2638 = vpop.xlane.xlu0 %2637
  %v2639 = vsel %vm389, %v2616, -inf
  %2640 = vmax.xlane.f32.xlu0 %v2639
  %v2641 = vpop.xlane.xlu0 %2640
  %v2642 = vsel %vm389, %v2619, -inf
  %2643 = vmax.xlane.f32.xlu0 %v2642
  %v2644 = vpop.xlane.xlu0 %2643
  %v2645 = vsel %vm389, %v2622, -inf
  %2646 = vmax.xlane.f32.xlu0 %v2645
  %v2647 = vpop.xlane.xlu0 %2646
  %v2648 = vsel %vm389, %v2625, -inf
  %2649 = vmax.xlane.f32.xlu0 %v2648
  %v2650 = vpop.xlane.xlu0 %2649
  %v2651 = vsel %vm389, %v2628, -inf
  %2652 = vmax.xlane.f32.xlu0 %v2651
  %v2653 = vpop.xlane.xlu0 %2652
  %v2654 = vsel %vm389, %v2631, -inf
  %2655 = vmax.xlane.f32.xlu0 %v2654
  %v2656 = vpop.xlane.xlu0 %2655
  %v2657 = vsub.f32 %v2610, %v2635
  %v2658 = vsub.f32 %v2613, %v2638
  %v2659 = vsub.f32 %v2616, %v2641
  %v2660 = vsub.f32 %v2619, %v2644
  %v2661 = vsub.f32 %v2622, %v2647
  %v2662 = vsub.f32 %v2625, %v2650
  %v2663 = vsub.f32 %v2628, %v2653
  %v2664 = vsub.f32 %v2631, %v2656
  %v2665 = vmul.f32 %v2657, 1.442695
  %v2666 = vpow.pop %v2665
  %v2667 = vmul.f32 %v2658, 1.442695
  %v2668 = vpow.pop %v2667
  %v2669 = vmul.f32 %v2659, 1.442695
  %v2670 = vpow.pop %v2669
  %v2671 = vmul.f32 %v2660, 1.442695
  %v2672 = vpow.pop %v2671
  %v2673 = vmul.f32 %v2661, 1.442695
  %v2674 = vpow.pop %v2673
  %v2675 = vmul.f32 %v2662, 1.442695
  %v2676 = vpow.pop %v2675
  %v2677 = vmul.f32 %v2663, 1.442695
  %v2678 = vpow.pop %v2677
  %v2679 = vmul.f32 %v2664, 1.442695
  %v2680 = vpow.pop %v2679
  %v2681 = vsel %vm389, %v2666, 0.0
  %2682 = vadd.xlane.f32.xlu0 %v2681
  %v2683 = vpop.xlane.xlu0 %2682
  %v2684 = vsel %vm389, %v2668, 0.0
  %2685 = vadd.xlane.f32.xlu0 %v2684
  %v2686 = vpop.xlane.xlu0 %2685
  %v2687 = vsel %vm389, %v2670, 0.0
  %2688 = vadd.xlane.f32.xlu0 %v2687
  %v2689 = vpop.xlane.xlu0 %2688
  %v2690 = vsel %vm389, %v2672, 0.0
  %2691 = vadd.xlane.f32.xlu0 %v2690
  %v2692 = vpop.xlane.xlu0 %2691
  %v2693 = vsel %vm389, %v2674, 0.0
  %2694 = vadd.xlane.f32.xlu0 %v2693
  %v2695 = vpop.xlane.xlu0 %2694
  %v2696 = vsel %vm389, %v2676, 0.0
  %2697 = vadd.xlane.f32.xlu0 %v2696
  %v2698 = vpop.xlane.xlu0 %2697
  %v2699 = vsel %vm389, %v2678, 0.0
  %2700 = vadd.xlane.f32.xlu0 %v2699
  %v2701 = vpop.xlane.xlu0 %2700
  %v2702 = vsel %vm389, %v2680, 0.0
  %2703 = vadd.xlane.f32.xlu0 %v2702
  %v2704 = vpop.xlane.xlu0 %2703
  %v2705 = vrcp.pop %v2683
  %v2706 = vrcp.pop %v2686
  %v2707 = vrcp.pop %v2689
  %v2708 = vrcp.pop %v2692
  %v2709 = vrcp.pop %v2695
  %v2710 = vrcp.pop %v2698
  %v2711 = vrcp.pop %v2701
  %v2712 = vrcp.pop %v2704
  %v2713 = vmul.f32 %v2666, %v2705
  %v2714 = vmul.f32 %v2668, %v2706
  %v2715 = vmul.f32 %v2670, %v2707
  %v2716 = vmul.f32 %v2672, %v2708
  %v2717 = vmul.f32 %v2674, %v2709
  %v2718 = vmul.f32 %v2676, %v2710
  %v2719 = vmul.f32 %v2678, %v2711
  %v2720 = vmul.f32 %v2680, %v2712
  %2721 = vrot.lane.b32.xlu0 %v2226, 56
  %v2722 = vpop.permute.xlu0 %2721
  %2723 = vrot.lane.b32.xlu0 %v2229, 56
  %v2724 = vpop.permute.xlu0 %2723
  %2725 = vrot.lane.b32.xlu0 %v2232, 56
  %v2726 = vpop.permute.xlu0 %2725
  %2727 = vrot.lane.b32.xlu0 %v2235, 56
  %v2728 = vpop.permute.xlu0 %2727
  %2729 = vrot.lane.b32.xlu0 %v2238, 56
  %v2730 = vpop.permute.xlu0 %2729
  %2731 = vrot.lane.b32.xlu0 %v2241, 56
  %v2732 = vpop.permute.xlu0 %2731
  %2733 = vrot.lane.b32.xlu0 %v2244, 56
  %v2734 = vpop.permute.xlu0 %2733
  %2735 = vrot.lane.b32.xlu0 %v2247, 56
  %v2736 = vpop.permute.xlu0 %2735
  %v2746 = vsel %vm389, %v2713, 0
  %v2749 = vsel %vm389, %v2714, 0
  %v2752 = vsel %vm389, %v2715, 0
  %v2755 = vsel %vm389, %v2716, 0
  %v2758 = vsel %vm389, %v2717, 0
  %v2761 = vsel %vm389, %v2718, 0
  %v2764 = vsel %vm389, %v2719, 0
  %v2767 = vsel %vm389, %v2720, 0
  %2769 = vmatpush.msra.mxu0 0.0
  %2770 = vmatpush.msra.mxu0 0.0
  %2771 = vmatpush.msra.mxu0 0.0
  %2772 = vmatpush.msra.mxu0 0.0
  %2773 = vmatpush.msra.mxu0 0.0
  %2774 = vmatpush.msra.mxu0 0.0
  %2775 = vmatpush.msra.mxu0 0.0
  %2776 = vmatpush.msra.mxu0 0.0
  %2777 = vmatpush.msra.mxu0 %v2736
  %2778 = vmatpush.msra.mxu0 %v2734
  %2779 = vmatpush.msra.mxu0 %v2732
  %2780 = vmatpush.msra.mxu0 %v2730
  %2781 = vmatpush.msra.mxu0 %v2728
  %2782 = vmatpush.msra.mxu0 %v2726
  %2783 = vmatpush.msra.mxu0 %v2724
  %2784 = vmatpush.msra.mxu0 %v2722
  %2785 = vmatmul.f32.gmra.mxu0 %v2746
  %v2786 = vpop.f32.mrf.mxu0
  %v2787 = vadd.f32 0.0, %v2786
  %2788 = vmatmul.f32.gmra.mxu0 %v2749
  %v2789 = vpop.f32.mrf.mxu0
  %v2790 = vadd.f32 0.0, %v2789
  %2791 = vmatmul.f32.gmra.mxu0 %v2752
  %v2792 = vpop.f32.mrf.mxu0
  %v2793 = vadd.f32 0.0, %v2792
  %2794 = vmatmul.f32.gmra.mxu0 %v2755
  %v2795 = vpop.f32.mrf.mxu0
  %v2796 = vadd.f32 0.0, %v2795
  %2797 = vmatmul.f32.gmra.mxu0 %v2758
  %v2798 = vpop.f32.mrf.mxu0
  %v2799 = vadd.f32 0.0, %v2798
  %2800 = vmatmul.f32.gmra.mxu0 %v2761
  %v2801 = vpop.f32.mrf.mxu0
  %v2802 = vadd.f32 0.0, %v2801
  %2803 = vmatmul.f32.gmra.mxu0 %v2764
  %v2804 = vpop.f32.mrf.mxu0
  %v2805 = vadd.f32 0.0, %v2804
  %2806 = vmatmul.f32.gmra.mxu0 %v2767
  %v2807 = vpop.f32.mrf.mxu0
  %v2808 = vadd.f32 0.0, %v2807
  %2809 = vdwg.mxu0
  %v2811 = vsel %vm315, %v2787, 0
  %v2814 = vsel %vm315, %v2790, 0
  %v2817 = vsel %vm315, %v2793, 0
  %v2820 = vsel %vm315, %v2796, 0
  %v2823 = vsel %vm315, %v2799, 0
  %v2826 = vsel %vm315, %v2802, 0
  %v2829 = vsel %vm315, %v2805, 0
  %v2832 = vsel %vm315, %v2808, 0
  %2834 = vmatpush.msra.mxu0 0.0
  %2835 = vmatpush.msra.mxu0 0.0
  %2836 = vmatpush.msra.mxu0 0.0
  %2837 = vmatpush.msra.mxu0 0.0
  %2838 = vmatpush.msra.mxu0 0.0
  %2839 = vmatpush.msra.mxu0 0.0
  %2840 = vmatpush.msra.mxu0 0.0
  %2841 = vmatpush.msra.mxu0 0.0
  %2842 = vmatpush.msra.mxu0 0.0
  %2843 = vmatpush.msra.mxu0 0.0
  %2844 = vmatpush.msra.mxu0 0.0
  %2845 = vmatpush.msra.mxu0 0.0
  %2846 = vmatpush.msra.mxu0 0.0
  %2847 = vmatpush.msra.mxu0 0.0
  %2848 = vmatpush.msra.mxu0 0.0
  %2849 = vmatpush.msra.mxu0 %v2251
  %2850 = vmatmul.f32.gmra.mxu0 %v2811
  %v2851 = vpop.f32.mrf.mxu0
  %v2852 = vadd.f32 0.0, %v2851
  %2853 = vmatmul.f32.gmra.mxu0 %v2814
  %v2854 = vpop.f32.mrf.mxu0
  %v2855 = vadd.f32 0.0, %v2854
  %2856 = vmatmul.f32.gmra.mxu0 %v2817
  %v2857 = vpop.f32.mrf.mxu0
  %v2858 = vadd.f32 0.0, %v2857
  %2859 = vmatmul.f32.gmra.mxu0 %v2820
  %v2860 = vpop.f32.mrf.mxu0
  %v2861 = vadd.f32 0.0, %v2860
  %2862 = vmatmul.f32.gmra.mxu0 %v2823
  %v2863 = vpop.f32.mrf.mxu0
  %v2864 = vadd.f32 0.0, %v2863
  %2865 = vmatmul.f32.gmra.mxu0 %v2826
  %v2866 = vpop.f32.mrf.mxu0
  %v2867 = vadd.f32 0.0, %v2866
  %2868 = vmatmul.f32.gmra.mxu0 %v2829
  %v2869 = vpop.f32.mrf.mxu0
  %v2870 = vadd.f32 0.0, %v2869
  %2871 = vmatmul.f32.gmra.mxu0 %v2832
  %v2872 = vpop.f32.mrf.mxu0
  %v2873 = vadd.f32 0.0, %v2872
  %2874 = vdwg.mxu0
  %v2876 = vsel %vm315, %v2505, 0
  %v2879 = vsel %vm315, %v2508, 0
  %v2882 = vsel %vm315, %v2511, 0
  %v2885 = vsel %vm315, %v2514, 0
  %v2888 = vsel %vm315, %v2517, 0
  %v2891 = vsel %vm315, %v2520, 0
  %v2894 = vsel %vm315, %v2523, 0
  %v2897 = vsel %vm315, %v2526, 0
  %2899 = vmatpush.msra.mxu0 0.0
  %2900 = vmatpush.msra.mxu0 0.0
  %2901 = vmatpush.msra.mxu0 0.0
  %2902 = vmatpush.msra.mxu0 0.0
  %2903 = vmatpush.msra.mxu0 0.0
  %2904 = vmatpush.msra.mxu0 0.0
  %2905 = vmatpush.msra.mxu0 0.0
  %2906 = vmatpush.msra.mxu0 0.0
  %2907 = vmatpush.msra.mxu0 0.0
  %2908 = vmatpush.msra.mxu0 0.0
  %2909 = vmatpush.msra.mxu0 0.0
  %2910 = vmatpush.msra.mxu0 0.0
  %2911 = vmatpush.msra.mxu0 0.0
  %2912 = vmatpush.msra.mxu0 0.0
  %2913 = vmatpush.msra.mxu0 0.0
  %2914 = vmatpush.msra.mxu0 %v2250
  %2915 = vmatmul.f32.gmra.mxu0 %v2876
  %v2916 = vpop.f32.mrf.mxu0
  %v2917 = vadd.f32 %v2852, %v2916
  %2918 = vmatmul.f32.gmra.mxu0 %v2879
  %v2919 = vpop.f32.mrf.mxu0
  %v2920 = vadd.f32 %v2855, %v2919
  %2921 = vmatmul.f32.gmra.mxu0 %v2882
  %v2922 = vpop.f32.mrf.mxu0
  %v2923 = vadd.f32 %v2858, %v2922
  %2924 = vmatmul.f32.gmra.mxu0 %v2885
  %v2925 = vpop.f32.mrf.mxu0
  %v2926 = vadd.f32 %v2861, %v2925
  %2927 = vmatmul.f32.gmra.mxu0 %v2888
  %v2928 = vpop.f32.mrf.mxu0
  %v2929 = vadd.f32 %v2864, %v2928
  %2930 = vmatmul.f32.gmra.mxu0 %v2891
  %v2931 = vpop.f32.mrf.mxu0
  %v2932 = vadd.f32 %v2867, %v2931
  %2933 = vmatmul.f32.gmra.mxu0 %v2894
  %v2934 = vpop.f32.mrf.mxu0
  %v2935 = vadd.f32 %v2870, %v2934
  %2936 = vmatmul.f32.gmra.mxu0 %v2897
  %v2937 = vpop.f32.mrf.mxu0
  %v2938 = vadd.f32 %v2873, %v2937
  %2939 = vdwg.mxu0
  %2940 = vrot.lane.b32.xlu0 %v2226, 112
  %v2941 = vpop.permute.xlu0 %2940
  %2942 = vrot.lane.b32.xlu0 %v2229, 112
  %v2943 = vpop.permute.xlu0 %2942
  %2944 = vrot.lane.b32.xlu0 %v2232, 112
  %v2945 = vpop.permute.xlu0 %2944
  %2946 = vrot.lane.b32.xlu0 %v2235, 112
  %v2947 = vpop.permute.xlu0 %2946
  %2948 = vrot.lane.b32.xlu0 %v2238, 112
  %v2949 = vpop.permute.xlu0 %2948
  %2950 = vrot.lane.b32.xlu0 %v2241, 112
  %v2951 = vpop.permute.xlu0 %2950
  %2952 = vrot.lane.b32.xlu0 %v2244, 112
  %v2953 = vpop.permute.xlu0 %2952
  %2954 = vrot.lane.b32.xlu0 %v2247, 112
  %v2955 = vpop.permute.xlu0 %2954
  %2956 = vrot.lane.b32.xlu0 %v2226, 80
  %v2957 = vpop.permute.xlu0 %2956
  %2958 = vrot.lane.b32.xlu0 %v2229, 80
  %v2959 = vpop.permute.xlu0 %2958
  %2960 = vrot.lane.b32.xlu0 %v2232, 80
  %v2961 = vpop.permute.xlu0 %2960
  %2962 = vrot.lane.b32.xlu0 %v2235, 80
  %v2963 = vpop.permute.xlu0 %2962
  %2964 = vrot.lane.b32.xlu0 %v2238, 80
  %v2965 = vpop.permute.xlu0 %2964
  %2966 = vrot.lane.b32.xlu0 %v2241, 80
  %v2967 = vpop.permute.xlu0 %2966
  %2968 = vrot.lane.b32.xlu0 %v2244, 80
  %v2969 = vpop.permute.xlu0 %2968
  %2970 = vrot.lane.b32.xlu0 %v2247, 80
  %v2971 = vpop.permute.xlu0 %2970
  %v2972 = vsel %vm315, %v2941, 0
  %v2974 = vsel %vm315, %v2943, 0
  %v2976 = vsel %vm315, %v2945, 0
  %v2978 = vsel %vm315, %v2947, 0
  %v2980 = vsel %vm315, %v2949, 0
  %v2982 = vsel %vm315, %v2951, 0
  %v2984 = vsel %vm315, %v2953, 0
  %v2986 = vsel %vm315, %v2955, 0
  %v2988 = vsel %vm315, %v2957, 0
  %v2990 = vsel %vm315, %v2959, 0
  %v2992 = vsel %vm315, %v2961, 0
  %v2994 = vsel %vm315, %v2963, 0
  %v2996 = vsel %vm315, %v2965, 0
  %v2998 = vsel %vm315, %v2967, 0
  %v3000 = vsel %vm315, %v2969, 0
  %v3002 = vsel %vm315, %v2971, 0
  %3004 = vmatpush.xpose.msra.mxu0 0.0
  %3005 = vmatpush.xpose.msra.mxu0 0.0
  %3006 = vmatpush.xpose.msra.mxu0 0.0
  %3007 = vmatpush.xpose.msra.mxu0 0.0
  %3008 = vmatpush.xpose.msra.mxu0 0.0
  %3009 = vmatpush.xpose.msra.mxu0 0.0
  %3010 = vmatpush.xpose.msra.mxu0 0.0
  %3011 = vmatpush.xpose.msra.mxu0 0.0
  %3012 = vmatpush.xpose.msra.mxu0 %v3002
  %3013 = vmatpush.xpose.msra.mxu0 %v3000
  %3014 = vmatpush.xpose.msra.mxu0 %v2998
  %3015 = vmatpush.xpose.msra.mxu0 %v2996
  %3016 = vmatpush.xpose.msra.mxu0 %v2994
  %3017 = vmatpush.xpose.msra.mxu0 %v2992
  %3018 = vmatpush.xpose.msra.mxu0 %v2990
  %3019 = vmatpush.xpose.msra.mxu0 %v2988
  %3020 = vmatmul.f32.gmra.mxu0 %v2972
  %v3021 = vpop.f32.mrf.mxu0
  %v3022 = vadd.f32 %v989, %v3021
  %3023 = vmatmul.f32.gmra.mxu0 %v2974
  %v3024 = vpop.f32.mrf.mxu0
  %v3025 = vadd.f32 %v990, %v3024
  %3026 = vmatmul.f32.gmra.mxu0 %v2976
  %v3027 = vpop.f32.mrf.mxu0
  %v3028 = vadd.f32 %v991, %v3027
  %3029 = vmatmul.f32.gmra.mxu0 %v2978
  %v3030 = vpop.f32.mrf.mxu0
  %v3031 = vadd.f32 %v992, %v3030
  %3032 = vmatmul.f32.gmra.mxu0 %v2980
  %v3033 = vpop.f32.mrf.mxu0
  %v3034 = vadd.f32 %v993, %v3033
  %3035 = vmatmul.f32.gmra.mxu0 %v2982
  %v3036 = vpop.f32.mrf.mxu0
  %v3037 = vadd.f32 %v994, %v3036
  %3038 = vmatmul.f32.gmra.mxu0 %v2984
  %v3039 = vpop.f32.mrf.mxu0
  %v3040 = vadd.f32 %v995, %v3039
  %3041 = vmatmul.f32.gmra.mxu0 %v2986
  %v3042 = vpop.f32.mrf.mxu0
  %v3043 = vadd.f32 %v996, %v3042
  %3044 = vdwg.mxu0
  %v3045 = vsel %vm389, %v3022, -inf
  %3046 = vmax.xlane.f32.xlu0 %v3045
  %v3047 = vpop.xlane.xlu0 %3046
  %v3048 = vsel %vm389, %v3025, -inf
  %3049 = vmax.xlane.f32.xlu0 %v3048
  %v3050 = vpop.xlane.xlu0 %3049
  %v3051 = vsel %vm389, %v3028, -inf
  %3052 = vmax.xlane.f32.xlu0 %v3051
  %v3053 = vpop.xlane.xlu0 %3052
  %v3054 = vsel %vm389, %v3031, -inf
  %3055 = vmax.xlane.f32.xlu0 %v3054
  %v3056 = vpop.xlane.xlu0 %3055
  %v3057 = vsel %vm389, %v3034, -inf
  %3058 = vmax.xlane.f32.xlu0 %v3057
  %v3059 = vpop.xlane.xlu0 %3058
  %v3060 = vsel %vm389, %v3037, -inf
  %3061 = vmax.xlane.f32.xlu0 %v3060
  %v3062 = vpop.xlane.xlu0 %3061
  %v3063 = vsel %vm389, %v3040, -inf
  %3064 = vmax.xlane.f32.xlu0 %v3063
  %v3065 = vpop.xlane.xlu0 %3064
  %v3066 = vsel %vm389, %v3043, -inf
  %3067 = vmax.xlane.f32.xlu0 %v3066
  %v3068 = vpop.xlane.xlu0 %3067
  %v3069 = vsub.f32 %v3022, %v3047
  %v3070 = vsub.f32 %v3025, %v3050
  %v3071 = vsub.f32 %v3028, %v3053
  %v3072 = vsub.f32 %v3031, %v3056
  %v3073 = vsub.f32 %v3034, %v3059
  %v3074 = vsub.f32 %v3037, %v3062
  %v3075 = vsub.f32 %v3040, %v3065
  %v3076 = vsub.f32 %v3043, %v3068
  %v3077 = vmul.f32 %v3069, 1.442695
  %v3078 = vpow.pop %v3077
  %v3079 = vmul.f32 %v3070, 1.442695
  %v3080 = vpow.pop %v3079
  %v3081 = vmul.f32 %v3071, 1.442695
  %v3082 = vpow.pop %v3081
  %v3083 = vmul.f32 %v3072, 1.442695
  %v3084 = vpow.pop %v3083
  %v3085 = vmul.f32 %v3073, 1.442695
  %v3086 = vpow.pop %v3085
  %v3087 = vmul.f32 %v3074, 1.442695
  %v3088 = vpow.pop %v3087
  %v3089 = vmul.f32 %v3075, 1.442695
  %v3090 = vpow.pop %v3089
  %v3091 = vmul.f32 %v3076, 1.442695
  %v3092 = vpow.pop %v3091
  %v3093 = vsel %vm389, %v3078, 0.0
  %3094 = vadd.xlane.f32.xlu0 %v3093
  %v3095 = vpop.xlane.xlu0 %3094
  %v3096 = vsel %vm389, %v3080, 0.0
  %3097 = vadd.xlane.f32.xlu0 %v3096
  %v3098 = vpop.xlane.xlu0 %3097
  %v3099 = vsel %vm389, %v3082, 0.0
  %3100 = vadd.xlane.f32.xlu0 %v3099
  %v3101 = vpop.xlane.xlu0 %3100
  %v3102 = vsel %vm389, %v3084, 0.0
  %3103 = vadd.xlane.f32.xlu0 %v3102
  %v3104 = vpop.xlane.xlu0 %3103
  %v3105 = vsel %vm389, %v3086, 0.0
  %3106 = vadd.xlane.f32.xlu0 %v3105
  %v3107 = vpop.xlane.xlu0 %3106
  %v3108 = vsel %vm389, %v3088, 0.0
  %3109 = vadd.xlane.f32.xlu0 %v3108
  %v3110 = vpop.xlane.xlu0 %3109
  %v3111 = vsel %vm389, %v3090, 0.0
  %3112 = vadd.xlane.f32.xlu0 %v3111
  %v3113 = vpop.xlane.xlu0 %3112
  %v3114 = vsel %vm389, %v3092, 0.0
  %3115 = vadd.xlane.f32.xlu0 %v3114
  %v3116 = vpop.xlane.xlu0 %3115
  %v3117 = vrcp.pop %v3095
  %v3118 = vrcp.pop %v3098
  %v3119 = vrcp.pop %v3101
  %v3120 = vrcp.pop %v3104
  %v3121 = vrcp.pop %v3107
  %v3122 = vrcp.pop %v3110
  %v3123 = vrcp.pop %v3113
  %v3124 = vrcp.pop %v3116
  %v3125 = vmul.f32 %v3078, %v3117
  %v3126 = vmul.f32 %v3080, %v3118
  %v3127 = vmul.f32 %v3082, %v3119
  %v3128 = vmul.f32 %v3084, %v3120
  %v3129 = vmul.f32 %v3086, %v3121
  %v3130 = vmul.f32 %v3088, %v3122
  %v3131 = vmul.f32 %v3090, %v3123
  %v3132 = vmul.f32 %v3092, %v3124
  %3133 = vrot.lane.b32.xlu0 %v2226, 48
  %v3134 = vpop.permute.xlu0 %3133
  %3135 = vrot.lane.b32.xlu0 %v2229, 48
  %v3136 = vpop.permute.xlu0 %3135
  %3137 = vrot.lane.b32.xlu0 %v2232, 48
  %v3138 = vpop.permute.xlu0 %3137
  %3139 = vrot.lane.b32.xlu0 %v2235, 48
  %v3140 = vpop.permute.xlu0 %3139
  %3141 = vrot.lane.b32.xlu0 %v2238, 48
  %v3142 = vpop.permute.xlu0 %3141
  %3143 = vrot.lane.b32.xlu0 %v2241, 48
  %v3144 = vpop.permute.xlu0 %3143
  %3145 = vrot.lane.b32.xlu0 %v2244, 48
  %v3146 = vpop.permute.xlu0 %3145
  %3147 = vrot.lane.b32.xlu0 %v2247, 48
  %v3148 = vpop.permute.xlu0 %3147
  %v3158 = vsel %vm389, %v3125, 0
  %v3161 = vsel %vm389, %v3126, 0
  %v3164 = vsel %vm389, %v3127, 0
  %v3167 = vsel %vm389, %v3128, 0
  %v3170 = vsel %vm389, %v3129, 0
  %v3173 = vsel %vm389, %v3130, 0
  %v3176 = vsel %vm389, %v3131, 0
  %v3179 = vsel %vm389, %v3132, 0
  %3181 = vmatpush.msra.mxu0 0.0
  %3182 = vmatpush.msra.mxu0 0.0
  %3183 = vmatpush.msra.mxu0 0.0
  %3184 = vmatpush.msra.mxu0 0.0
  %3185 = vmatpush.msra.mxu0 0.0
  %3186 = vmatpush.msra.mxu0 0.0
  %3187 = vmatpush.msra.mxu0 0.0
  %3188 = vmatpush.msra.mxu0 0.0
  %3189 = vmatpush.msra.mxu0 %v3148
  %3190 = vmatpush.msra.mxu0 %v3146
  %3191 = vmatpush.msra.mxu0 %v3144
  %3192 = vmatpush.msra.mxu0 %v3142
  %3193 = vmatpush.msra.mxu0 %v3140
  %3194 = vmatpush.msra.mxu0 %v3138
  %3195 = vmatpush.msra.mxu0 %v3136
  %3196 = vmatpush.msra.mxu0 %v3134
  %3197 = vmatmul.f32.gmra.mxu0 %v3158
  %v3198 = vpop.f32.mrf.mxu0
  %v3199 = vadd.f32 0.0, %v3198
  %3200 = vmatmul.f32.gmra.mxu0 %v3161
  %v3201 = vpop.f32.mrf.mxu0
  %v3202 = vadd.f32 0.0, %v3201
  %3203 = vmatmul.f32.gmra.mxu0 %v3164
  %v3204 = vpop.f32.mrf.mxu0
  %v3205 = vadd.f32 0.0, %v3204
  %3206 = vmatmul.f32.gmra.mxu0 %v3167
  %v3207 = vpop.f32.mrf.mxu0
  %v3208 = vadd.f32 0.0, %v3207
  %3209 = vmatmul.f32.gmra.mxu0 %v3170
  %v3210 = vpop.f32.mrf.mxu0
  %v3211 = vadd.f32 0.0, %v3210
  %3212 = vmatmul.f32.gmra.mxu0 %v3173
  %v3213 = vpop.f32.mrf.mxu0
  %v3214 = vadd.f32 0.0, %v3213
  %3215 = vmatmul.f32.gmra.mxu0 %v3176
  %v3216 = vpop.f32.mrf.mxu0
  %v3217 = vadd.f32 0.0, %v3216
  %3218 = vmatmul.f32.gmra.mxu0 %v3179
  %v3219 = vpop.f32.mrf.mxu0
  %v3220 = vadd.f32 0.0, %v3219
  %3221 = vdwg.mxu0
  %v3223 = vsel %vm315, %v3199, 0
  %v3226 = vsel %vm315, %v3202, 0
  %v3229 = vsel %vm315, %v3205, 0
  %v3232 = vsel %vm315, %v3208, 0
  %v3235 = vsel %vm315, %v3211, 0
  %v3238 = vsel %vm315, %v3214, 0
  %v3241 = vsel %vm315, %v3217, 0
  %v3244 = vsel %vm315, %v3220, 0
  %3246 = vmatpush.msra.mxu0 0.0
  %3247 = vmatpush.msra.mxu0 0.0
  %3248 = vmatpush.msra.mxu0 0.0
  %3249 = vmatpush.msra.mxu0 0.0
  %3250 = vmatpush.msra.mxu0 0.0
  %3251 = vmatpush.msra.mxu0 0.0
  %3252 = vmatpush.msra.mxu0 0.0
  %3253 = vmatpush.msra.mxu0 0.0
  %3254 = vmatpush.msra.mxu0 0.0
  %3255 = vmatpush.msra.mxu0 0.0
  %3256 = vmatpush.msra.mxu0 0.0
  %3257 = vmatpush.msra.mxu0 0.0
  %3258 = vmatpush.msra.mxu0 0.0
  %3259 = vmatpush.msra.mxu0 0.0
  %3260 = vmatpush.msra.mxu0 0.0
  %3261 = vmatpush.msra.mxu0 %v2252
  %3262 = vmatmul.f32.gmra.mxu0 %v3223
  %v3263 = vpop.f32.mrf.mxu0
  %v3264 = vadd.f32 0.0, %v3263
  %3265 = vmatmul.f32.gmra.mxu0 %v3226
  %v3266 = vpop.f32.mrf.mxu0
  %v3267 = vadd.f32 0.0, %v3266
  %3268 = vmatmul.f32.gmra.mxu0 %v3229
  %v3269 = vpop.f32.mrf.mxu0
  %v3270 = vadd.f32 0.0, %v3269
  %3271 = vmatmul.f32.gmra.mxu0 %v3232
  %v3272 = vpop.f32.mrf.mxu0
  %v3273 = vadd.f32 0.0, %v3272
  %3274 = vmatmul.f32.gmra.mxu0 %v3235
  %v3275 = vpop.f32.mrf.mxu0
  %v3276 = vadd.f32 0.0, %v3275
  %3277 = vmatmul.f32.gmra.mxu0 %v3238
  %v3278 = vpop.f32.mrf.mxu0
  %v3279 = vadd.f32 0.0, %v3278
  %3280 = vmatmul.f32.gmra.mxu0 %v3241
  %v3281 = vpop.f32.mrf.mxu0
  %v3282 = vadd.f32 0.0, %v3281
  %3283 = vmatmul.f32.gmra.mxu0 %v3244
  %v3284 = vpop.f32.mrf.mxu0
  %v3285 = vadd.f32 0.0, %v3284
  %3286 = vdwg.mxu0
  %v3287 = vadd.f32 %v2917, %v3264
  %v3288 = vadd.f32 %v2920, %v3267
  %v3289 = vadd.f32 %v2923, %v3270
  %v3290 = vadd.f32 %v2926, %v3273
  %v3291 = vadd.f32 %v2929, %v3276
  %v3292 = vadd.f32 %v2932, %v3279
  %v3293 = vadd.f32 %v2935, %v3282
  %v3294 = vadd.f32 %v2938, %v3285
  %3295 = vrot.lane.b32.xlu0 %v2226, 104
  %v3296 = vpop.permute.xlu0 %3295
  %3297 = vrot.lane.b32.xlu0 %v2229, 104
  %v3298 = vpop.permute.xlu0 %3297
  %3299 = vrot.lane.b32.xlu0 %v2232, 104
  %v3300 = vpop.permute.xlu0 %3299
  %3301 = vrot.lane.b32.xlu0 %v2235, 104
  %v3302 = vpop.permute.xlu0 %3301
  %3303 = vrot.lane.b32.xlu0 %v2238, 104
  %v3304 = vpop.permute.xlu0 %3303
  %3305 = vrot.lane.b32.xlu0 %v2241, 104
  %v3306 = vpop.permute.xlu0 %3305
  %3307 = vrot.lane.b32.xlu0 %v2244, 104
  %v3308 = vpop.permute.xlu0 %3307
  %3309 = vrot.lane.b32.xlu0 %v2247, 104
  %v3310 = vpop.permute.xlu0 %3309
  %3311 = vrot.lane.b32.xlu0 %v2226, 72
  %v3312 = vpop.permute.xlu0 %3311
  %3313 = vrot.lane.b32.xlu0 %v2229, 72
  %v3314 = vpop.permute.xlu0 %3313
  %3315 = vrot.lane.b32.xlu0 %v2232, 72
  %v3316 = vpop.permute.xlu0 %3315
  %3317 = vrot.lane.b32.xlu0 %v2235, 72
  %v3318 = vpop.permute.xlu0 %3317
  %3319 = vrot.lane.b32.xlu0 %v2238, 72
  %v3320 = vpop.permute.xlu0 %3319
  %3321 = vrot.lane.b32.xlu0 %v2241, 72
  %v3322 = vpop.permute.xlu0 %3321
  %3323 = vrot.lane.b32.xlu0 %v2244, 72
  %v3324 = vpop.permute.xlu0 %3323
  %3325 = vrot.lane.b32.xlu0 %v2247, 72
  %v3326 = vpop.permute.xlu0 %3325
  %v3327 = vsel %vm315, %v3296, 0
  %v3329 = vsel %vm315, %v3298, 0
  %v3331 = vsel %vm315, %v3300, 0
  %v3333 = vsel %vm315, %v3302, 0
  %v3335 = vsel %vm315, %v3304, 0
  %v3337 = vsel %vm315, %v3306, 0
  %v3339 = vsel %vm315, %v3308, 0
  %v3341 = vsel %vm315, %v3310, 0
  %v3343 = vsel %vm315, %v3312, 0
  %v3345 = vsel %vm315, %v3314, 0
  %v3347 = vsel %vm315, %v3316, 0
  %v3349 = vsel %vm315, %v3318, 0
  %v3351 = vsel %vm315, %v3320, 0
  %v3353 = vsel %vm315, %v3322, 0
  %v3355 = vsel %vm315, %v3324, 0
  %v3357 = vsel %vm315, %v3326, 0
  %3359 = vmatpush.xpose.msra.mxu0 0.0
  %3360 = vmatpush.xpose.msra.mxu0 0.0
  %3361 = vmatpush.xpose.msra.mxu0 0.0
  %3362 = vmatpush.xpose.msra.mxu0 0.0
  %3363 = vmatpush.xpose.msra.mxu0 0.0
  %3364 = vmatpush.xpose.msra.mxu0 0.0
  %3365 = vmatpush.xpose.msra.mxu0 0.0
  %3366 = vmatpush.xpose.msra.mxu0 0.0
  %3367 = vmatpush.xpose.msra.mxu0 %v3357
  %3368 = vmatpush.xpose.msra.mxu0 %v3355
  %3369 = vmatpush.xpose.msra.mxu0 %v3353
  %3370 = vmatpush.xpose.msra.mxu0 %v3351
  %3371 = vmatpush.xpose.msra.mxu0 %v3349
  %3372 = vmatpush.xpose.msra.mxu0 %v3347
  %3373 = vmatpush.xpose.msra.mxu0 %v3345
  %3374 = vmatpush.xpose.msra.mxu0 %v3343
  %3375 = vmatmul.f32.gmra.mxu0 %v3327
  %v3376 = vpop.f32.mrf.mxu0
  %v3377 = vadd.f32 %v1353, %v3376
  %3378 = vmatmul.f32.gmra.mxu0 %v3329
  %v3379 = vpop.f32.mrf.mxu0
  %v3380 = vadd.f32 %v1354, %v3379
  %3381 = vmatmul.f32.gmra.mxu0 %v3331
  %v3382 = vpop.f32.mrf.mxu0
  %v3383 = vadd.f32 %v1355, %v3382
  %3384 = vmatmul.f32.gmra.mxu0 %v3333
  %v3385 = vpop.f32.mrf.mxu0
  %v3386 = vadd.f32 %v1356, %v3385
  %3387 = vmatmul.f32.gmra.mxu0 %v3335
  %v3388 = vpop.f32.mrf.mxu0
  %v3389 = vadd.f32 %v1357, %v3388
  %3390 = vmatmul.f32.gmra.mxu0 %v3337
  %v3391 = vpop.f32.mrf.mxu0
  %v3392 = vadd.f32 %v1358, %v3391
  %3393 = vmatmul.f32.gmra.mxu0 %v3339
  %v3394 = vpop.f32.mrf.mxu0
  %v3395 = vadd.f32 %v1359, %v3394
  %3396 = vmatmul.f32.gmra.mxu0 %v3341
  %v3397 = vpop.f32.mrf.mxu0
  %v3398 = vadd.f32 %v1360, %v3397
  %3399 = vdwg.mxu0
  %v3400 = vsel %vm389, %v3377, -inf
  %3401 = vmax.xlane.f32.xlu0 %v3400
  %v3402 = vpop.xlane.xlu0 %3401
  %v3403 = vsel %vm389, %v3380, -inf
  %3404 = vmax.xlane.f32.xlu0 %v3403
  %v3405 = vpop.xlane.xlu0 %3404
  %v3406 = vsel %vm389, %v3383, -inf
  %3407 = vmax.xlane.f32.xlu0 %v3406
  %v3408 = vpop.xlane.xlu0 %3407
  %v3409 = vsel %vm389, %v3386, -inf
  %3410 = vmax.xlane.f32.xlu0 %v3409
  %v3411 = vpop.xlane.xlu0 %3410
  %v3412 = vsel %vm389, %v3389, -inf
  %3413 = vmax.xlane.f32.xlu0 %v3412
  %v3414 = vpop.xlane.xlu0 %3413
  %v3415 = vsel %vm389, %v3392, -inf
  %3416 = vmax.xlane.f32.xlu0 %v3415
  %v3417 = vpop.xlane.xlu0 %3416
  %v3418 = vsel %vm389, %v3395, -inf
  %3419 = vmax.xlane.f32.xlu0 %v3418
  %v3420 = vpop.xlane.xlu0 %3419
  %v3421 = vsel %vm389, %v3398, -inf
  %3422 = vmax.xlane.f32.xlu0 %v3421
  %v3423 = vpop.xlane.xlu0 %3422
  %v3424 = vsub.f32 %v3377, %v3402
  %v3425 = vsub.f32 %v3380, %v3405
  %v3426 = vsub.f32 %v3383, %v3408
  %v3427 = vsub.f32 %v3386, %v3411
  %v3428 = vsub.f32 %v3389, %v3414
  %v3429 = vsub.f32 %v3392, %v3417
  %v3430 = vsub.f32 %v3395, %v3420
  %v3431 = vsub.f32 %v3398, %v3423
  %v3432 = vmul.f32 %v3424, 1.442695
  %v3433 = vpow.pop %v3432
  %v3434 = vmul.f32 %v3425, 1.442695
  %v3435 = vpow.pop %v3434
  %v3436 = vmul.f32 %v3426, 1.442695
  %v3437 = vpow.pop %v3436
  %v3438 = vmul.f32 %v3427, 1.442695
  %v3439 = vpow.pop %v3438
  %v3440 = vmul.f32 %v3428, 1.442695
  %v3441 = vpow.pop %v3440
  %v3442 = vmul.f32 %v3429, 1.442695
  %v3443 = vpow.pop %v3442
  %v3444 = vmul.f32 %v3430, 1.442695
  %v3445 = vpow.pop %v3444
  %v3446 = vmul.f32 %v3431, 1.442695
  %v3447 = vpow.pop %v3446
  %v3448 = vsel %vm389, %v3433, 0.0
  %3449 = vadd.xlane.f32.xlu0 %v3448
  %v3450 = vpop.xlane.xlu0 %3449
  %v3451 = vsel %vm389, %v3435, 0.0
  %3452 = vadd.xlane.f32.xlu0 %v3451
  %v3453 = vpop.xlane.xlu0 %3452
  %v3454 = vsel %vm389, %v3437, 0.0
  %3455 = vadd.xlane.f32.xlu0 %v3454
  %v3456 = vpop.xlane.xlu0 %3455
  %v3457 = vsel %vm389, %v3439, 0.0
  %3458 = vadd.xlane.f32.xlu0 %v3457
  %v3459 = vpop.xlane.xlu0 %3458
  %v3460 = vsel %vm389, %v3441, 0.0
  %3461 = vadd.xlane.f32.xlu0 %v3460
  %v3462 = vpop.xlane.xlu0 %3461
  %v3463 = vsel %vm389, %v3443, 0.0
  %3464 = vadd.xlane.f32.xlu0 %v3463
  %v3465 = vpop.xlane.xlu0 %3464
  %v3466 = vsel %vm389, %v3445, 0.0
  %3467 = vadd.xlane.f32.xlu0 %v3466
  %v3468 = vpop.xlane.xlu0 %3467
  %v3469 = vsel %vm389, %v3447, 0.0
  %3470 = vadd.xlane.f32.xlu0 %v3469
  %v3471 = vpop.xlane.xlu0 %3470
  %v3472 = vrcp.pop %v3450
  %v3473 = vrcp.pop %v3453
  %v3474 = vrcp.pop %v3456
  %v3475 = vrcp.pop %v3459
  %v3476 = vrcp.pop %v3462
  %v3477 = vrcp.pop %v3465
  %v3478 = vrcp.pop %v3468
  %v3479 = vrcp.pop %v3471
  %v3480 = vmul.f32 %v3433, %v3472
  %v3481 = vmul.f32 %v3435, %v3473
  %v3482 = vmul.f32 %v3437, %v3474
  %v3483 = vmul.f32 %v3439, %v3475
  %v3484 = vmul.f32 %v3441, %v3476
  %v3485 = vmul.f32 %v3443, %v3477
  %v3486 = vmul.f32 %v3445, %v3478
  %v3487 = vmul.f32 %v3447, %v3479
  %3488 = vrot.lane.b32.xlu0 %v2226, 40
  %v3489 = vpop.permute.xlu0 %3488
  %3490 = vrot.lane.b32.xlu0 %v2229, 40
  %v3491 = vpop.permute.xlu0 %3490
  %3492 = vrot.lane.b32.xlu0 %v2232, 40
  %v3493 = vpop.permute.xlu0 %3492
  %3494 = vrot.lane.b32.xlu0 %v2235, 40
  %v3495 = vpop.permute.xlu0 %3494
  %3496 = vrot.lane.b32.xlu0 %v2238, 40
  %v3497 = vpop.permute.xlu0 %3496
  %3498 = vrot.lane.b32.xlu0 %v2241, 40
  %v3499 = vpop.permute.xlu0 %3498
  %3500 = vrot.lane.b32.xlu0 %v2244, 40
  %v3501 = vpop.permute.xlu0 %3500
  %3502 = vrot.lane.b32.xlu0 %v2247, 40
  %v3503 = vpop.permute.xlu0 %3502
  %v3513 = vsel %vm389, %v3480, 0
  %v3516 = vsel %vm389, %v3481, 0
  %v3519 = vsel %vm389, %v3482, 0
  %v3522 = vsel %vm389, %v3483, 0
  %v3525 = vsel %vm389, %v3484, 0
  %v3528 = vsel %vm389, %v3485, 0
  %v3531 = vsel %vm389, %v3486, 0
  %v3534 = vsel %vm389, %v3487, 0
  %3536 = vmatpush.msra.mxu0 0.0
  %3537 = vmatpush.msra.mxu0 0.0
  %3538 = vmatpush.msra.mxu0 0.0
  %3539 = vmatpush.msra.mxu0 0.0
  %3540 = vmatpush.msra.mxu0 0.0
  %3541 = vmatpush.msra.mxu0 0.0
  %3542 = vmatpush.msra.mxu0 0.0
  %3543 = vmatpush.msra.mxu0 0.0
  %3544 = vmatpush.msra.mxu0 %v3503
  %3545 = vmatpush.msra.mxu0 %v3501
  %3546 = vmatpush.msra.mxu0 %v3499
  %3547 = vmatpush.msra.mxu0 %v3497
  %3548 = vmatpush.msra.mxu0 %v3495
  %3549 = vmatpush.msra.mxu0 %v3493
  %3550 = vmatpush.msra.mxu0 %v3491
  %3551 = vmatpush.msra.mxu0 %v3489
  %3552 = vmatmul.f32.gmra.mxu0 %v3513
  %v3553 = vpop.f32.mrf.mxu0
  %v3554 = vadd.f32 0.0, %v3553
  %3555 = vmatmul.f32.gmra.mxu0 %v3516
  %v3556 = vpop.f32.mrf.mxu0
  %v3557 = vadd.f32 0.0, %v3556
  %3558 = vmatmul.f32.gmra.mxu0 %v3519
  %v3559 = vpop.f32.mrf.mxu0
  %v3560 = vadd.f32 0.0, %v3559
  %3561 = vmatmul.f32.gmra.mxu0 %v3522
  %v3562 = vpop.f32.mrf.mxu0
  %v3563 = vadd.f32 0.0, %v3562
  %3564 = vmatmul.f32.gmra.mxu0 %v3525
  %v3565 = vpop.f32.mrf.mxu0
  %v3566 = vadd.f32 0.0, %v3565
  %3567 = vmatmul.f32.gmra.mxu0 %v3528
  %v3568 = vpop.f32.mrf.mxu0
  %v3569 = vadd.f32 0.0, %v3568
  %3570 = vmatmul.f32.gmra.mxu0 %v3531
  %v3571 = vpop.f32.mrf.mxu0
  %v3572 = vadd.f32 0.0, %v3571
  %3573 = vmatmul.f32.gmra.mxu0 %v3534
  %v3574 = vpop.f32.mrf.mxu0
  %v3575 = vadd.f32 0.0, %v3574
  %3576 = vdwg.mxu0
  %v3578 = vsel %vm315, %v3554, 0
  %v3581 = vsel %vm315, %v3557, 0
  %v3584 = vsel %vm315, %v3560, 0
  %v3587 = vsel %vm315, %v3563, 0
  %v3590 = vsel %vm315, %v3566, 0
  %v3593 = vsel %vm315, %v3569, 0
  %v3596 = vsel %vm315, %v3572, 0
  %v3599 = vsel %vm315, %v3575, 0
  %3601 = vmatpush.msra.mxu0 0.0
  %3602 = vmatpush.msra.mxu0 0.0
  %3603 = vmatpush.msra.mxu0 0.0
  %3604 = vmatpush.msra.mxu0 0.0
  %3605 = vmatpush.msra.mxu0 0.0
  %3606 = vmatpush.msra.mxu0 0.0
  %3607 = vmatpush.msra.mxu0 0.0
  %3608 = vmatpush.msra.mxu0 0.0
  %3609 = vmatpush.msra.mxu0 0.0
  %3610 = vmatpush.msra.mxu0 0.0
  %3611 = vmatpush.msra.mxu0 0.0
  %3612 = vmatpush.msra.mxu0 0.0
  %3613 = vmatpush.msra.mxu0 0.0
  %3614 = vmatpush.msra.mxu0 0.0
  %3615 = vmatpush.msra.mxu0 0.0
  %3616 = vmatpush.msra.mxu0 %v2253
  %3617 = vmatmul.f32.gmra.mxu0 %v3578
  %v3618 = vpop.f32.mrf.mxu0
  %v3619 = vadd.f32 0.0, %v3618
  %3620 = vmatmul.f32.gmra.mxu0 %v3581
  %v3621 = vpop.f32.mrf.mxu0
  %v3622 = vadd.f32 0.0, %v3621
  %3623 = vmatmul.f32.gmra.mxu0 %v3584
  %v3624 = vpop.f32.mrf.mxu0
  %v3625 = vadd.f32 0.0, %v3624
  %3626 = vmatmul.f32.gmra.mxu0 %v3587
  %v3627 = vpop.f32.mrf.mxu0
  %v3628 = vadd.f32 0.0, %v3627
  %3629 = vmatmul.f32.gmra.mxu0 %v3590
  %v3630 = vpop.f32.mrf.mxu0
  %v3631 = vadd.f32 0.0, %v3630
  %3632 = vmatmul.f32.gmra.mxu0 %v3593
  %v3633 = vpop.f32.mrf.mxu0
  %v3634 = vadd.f32 0.0, %v3633
  %3635 = vmatmul.f32.gmra.mxu0 %v3596
  %v3636 = vpop.f32.mrf.mxu0
  %v3637 = vadd.f32 0.0, %v3636
  %3638 = vmatmul.f32.gmra.mxu0 %v3599
  %v3639 = vpop.f32.mrf.mxu0
  %v3640 = vadd.f32 0.0, %v3639
  %3641 = vdwg.mxu0
  %v3642 = vadd.f32 %v3287, %v3619
  %v3643 = vadd.f32 %v3288, %v3622
  %v3644 = vadd.f32 %v3289, %v3625
  %v3645 = vadd.f32 %v3290, %v3628
  %v3646 = vadd.f32 %v3291, %v3631
  %v3647 = vadd.f32 %v3292, %v3634
  %v3648 = vadd.f32 %v3293, %v3637
  %v3649 = vadd.f32 %v3294, %v3640
  %v3650 = vadd.f32 %v2022, %v3642
  %v3651 = vadd.f32 %v2023, %v3643
  %v3652 = vadd.f32 %v2024, %v3644
  %v3653 = vadd.f32 %v2025, %v3645
  %v3654 = vadd.f32 %v2026, %v3646
  %v3655 = vadd.f32 %v2027, %v3647
  %v3656 = vadd.f32 %v2028, %v3648
  %v3657 = vadd.f32 %v2029, %v3649
  %s3658 = scalar_lea.vmem %s5, 1
  %v3659 = vld [vmem:[%s3658] sm:$0x1]
  %v3660 = vmul.f32 %v3650, %v3650
  %v3661 = vmul.f32 %v3651, %v3651
  %v3662 = vmul.f32 %v3652, %v3652
  %v3663 = vmul.f32 %v3653, %v3653
  %v3664 = vmul.f32 %v3654, %v3654
  %v3665 = vmul.f32 %v3655, %v3655
  %v3666 = vmul.f32 %v3656, %v3656
  %v3667 = vmul.f32 %v3657, %v3657
  %v3668 = vsel %vm63, %v3660, 0.0
  %3669 = vadd.xlane.f32.xlu0 %v3668
  %v3670 = vpop.xlane.xlu0 %3669
  %v3671 = vsel %vm63, %v3661, 0.0
  %3672 = vadd.xlane.f32.xlu0 %v3671
  %v3673 = vpop.xlane.xlu0 %3672
  %v3674 = vsel %vm63, %v3662, 0.0
  %3675 = vadd.xlane.f32.xlu0 %v3674
  %v3676 = vpop.xlane.xlu0 %3675
  %v3677 = vsel %vm63, %v3663, 0.0
  %3678 = vadd.xlane.f32.xlu0 %v3677
  %v3679 = vpop.xlane.xlu0 %3678
  %v3680 = vsel %vm63, %v3664, 0.0
  %3681 = vadd.xlane.f32.xlu0 %v3680
  %v3682 = vpop.xlane.xlu0 %3681
  %v3683 = vsel %vm63, %v3665, 0.0
  %3684 = vadd.xlane.f32.xlu0 %v3683
  %v3685 = vpop.xlane.xlu0 %3684
  %v3686 = vsel %vm63, %v3666, 0.0
  %3687 = vadd.xlane.f32.xlu0 %v3686
  %v3688 = vpop.xlane.xlu0 %3687
  %v3689 = vsel %vm63, %v3667, 0.0
  %3690 = vadd.xlane.f32.xlu0 %v3689
  %v3691 = vpop.xlane.xlu0 %3690
  %v3692 = vmul.f32 %v3670, %v94
  %v3693 = vmul.f32 %v3673, %v94
  %v3694 = vmul.f32 %v3676, %v94
  %v3695 = vmul.f32 %v3679, %v94
  %v3696 = vmul.f32 %v3682, %v94
  %v3697 = vmul.f32 %v3685, %v94
  %v3698 = vmul.f32 %v3688, %v94
  %v3699 = vmul.f32 %v3691, %v94
  %v3700 = vadd.f32 %v3692, 1e-06
  %v3701 = vadd.f32 %v3693, 1e-06
  %v3702 = vadd.f32 %v3694, 1e-06
  %v3703 = vadd.f32 %v3695, 1e-06
  %v3704 = vadd.f32 %v3696, 1e-06
  %v3705 = vadd.f32 %v3697, 1e-06
  %v3706 = vadd.f32 %v3698, 1e-06
  %v3707 = vadd.f32 %v3699, 1e-06
  %v3708 = vrsqrt.pop %v3700
  %v3709 = vmul.f32 %v3708, %v3700
  %v3710 = vmul.f32 %v3709, %v3708
  %v3711 = vmul.f32 0.5, %v3710
  %v3712 = vsub.f32 1.5, %v3711
  %v3713 = vmul.f32 %v3708, %v3712
  %vm3714 = vweird.f32 %v3700
  %vm3715 = vweird.f32 %v3708
  %vm3716 = vmor %vm3714, %vm3715
  %v3717 = vsel %vm3716, %v3708, %v3713
  %v3718 = vrsqrt.pop %v3701
  %v3719 = vmul.f32 %v3718, %v3701
  %v3720 = vmul.f32 %v3719, %v3718
  %v3721 = vmul.f32 0.5, %v3720
  %v3722 = vsub.f32 1.5, %v3721
  %v3723 = vmul.f32 %v3718, %v3722
  %vm3724 = vweird.f32 %v3701
  %vm3725 = vweird.f32 %v3718
  %vm3726 = vmor %vm3724, %vm3725
  %v3727 = vsel %vm3726, %v3718, %v3723
  %v3728 = vrsqrt.pop %v3702
  %v3729 = vmul.f32 %v3728, %v3702
  %v3730 = vmul.f32 %v3729, %v3728
  %v3731 = vmul.f32 0.5, %v3730
  %v3732 = vsub.f32 1.5, %v3731
  %v3733 = vmul.f32 %v3728, %v3732
  %vm3734 = vweird.f32 %v3702
  %vm3735 = vweird.f32 %v3728
  %vm3736 = vmor %vm3734, %vm3735
  %v3737 = vsel %vm3736, %v3728, %v3733
  %v3738 = vrsqrt.pop %v3703
  %v3739 = vmul.f32 %v3738, %v3703
  %v3740 = vmul.f32 %v3739, %v3738
  %v3741 = vmul.f32 0.5, %v3740
  %v3742 = vsub.f32 1.5, %v3741
  %v3743 = vmul.f32 %v3738, %v3742
  %vm3744 = vweird.f32 %v3703
  %vm3745 = vweird.f32 %v3738
  %vm3746 = vmor %vm3744, %vm3745
  %v3747 = vsel %vm3746, %v3738, %v3743
  %v3748 = vrsqrt.pop %v3704
  %v3749 = vmul.f32 %v3748, %v3704
  %v3750 = vmul.f32 %v3749, %v3748
  %v3751 = vmul.f32 0.5, %v3750
  %v3752 = vsub.f32 1.5, %v3751
  %v3753 = vmul.f32 %v3748, %v3752
  %vm3754 = vweird.f32 %v3704
  %vm3755 = vweird.f32 %v3748
  %vm3756 = vmor %vm3754, %vm3755
  %v3757 = vsel %vm3756, %v3748, %v3753
  %v3758 = vrsqrt.pop %v3705
  %v3759 = vmul.f32 %v3758, %v3705
  %v3760 = vmul.f32 %v3759, %v3758
  %v3761 = vmul.f32 0.5, %v3760
  %v3762 = vsub.f32 1.5, %v3761
  %v3763 = vmul.f32 %v3758, %v3762
  %vm3764 = vweird.f32 %v3705
  %vm3765 = vweird.f32 %v3758
  %vm3766 = vmor %vm3764, %vm3765
  %v3767 = vsel %vm3766, %v3758, %v3763
  %v3768 = vrsqrt.pop %v3706
  %v3769 = vmul.f32 %v3768, %v3706
  %v3770 = vmul.f32 %v3769, %v3768
  %v3771 = vmul.f32 0.5, %v3770
  %v3772 = vsub.f32 1.5, %v3771
  %v3773 = vmul.f32 %v3768, %v3772
  %vm3774 = vweird.f32 %v3706
  %vm3775 = vweird.f32 %v3768
  %vm3776 = vmor %vm3774, %vm3775
  %v3777 = vsel %vm3776, %v3768, %v3773
  %v3778 = vrsqrt.pop %v3707
  %v3779 = vmul.f32 %v3778, %v3707
  %v3780 = vmul.f32 %v3779, %v3778
  %v3781 = vmul.f32 0.5, %v3780
  %v3782 = vsub.f32 1.5, %v3781
  %v3783 = vmul.f32 %v3778, %v3782
  %vm3784 = vweird.f32 %v3707
  %vm3785 = vweird.f32 %v3778
  %vm3786 = vmor %vm3784, %vm3785
  %v3787 = vsel %vm3786, %v3778, %v3783
  %v3788 = vmul.f32 %v3650, %v3717
  %v3789 = vmul.f32 %v3651, %v3727
  %v3790 = vmul.f32 %v3652, %v3737
  %v3791 = vmul.f32 %v3653, %v3747
  %v3792 = vmul.f32 %v3654, %v3757
  %v3793 = vmul.f32 %v3655, %v3767
  %v3794 = vmul.f32 %v3656, %v3777
  %v3795 = vmul.f32 %v3657, %v3787
  %v3797 = vperm.slane %v3659, 0
  %v3799 = vmul.f32 %v3788, %v3797
  %v3800 = vmul.f32 %v3789, %v3797
  %v3801 = vmul.f32 %v3790, %v3797
  %v3802 = vmul.f32 %v3791, %v3797
  %v3803 = vmul.f32 %v3792, %v3797
  %v3804 = vmul.f32 %v3793, %v3797
  %v3805 = vmul.f32 %v3794, %v3797
  %v3806 = vmul.f32 %v3795, %v3797
  %s3807 = scalar_lea.vmem %s6, 32
  %v3808 = vld [vmem:[%s3807] sm:$0xff]
  %v3809 = vld [vmem:[%s3807 + $0x8] sm:$0xff]
  %v3810 = vld [vmem:[%s3807 + $0x10] sm:$0xff]
  %v3811 = vld [vmem:[%s3807 + $0x18] sm:$0xff]
  %v3813 = vsel %vm63, %v3799, 0
  %v3816 = vsel %vm63, %v3800, 0
  %v3819 = vsel %vm63, %v3801, 0
  %v3822 = vsel %vm63, %v3802, 0
  %v3825 = vsel %vm63, %v3803, 0
  %v3828 = vsel %vm63, %v3804, 0
  %v3831 = vsel %vm63, %v3805, 0
  %v3834 = vsel %vm63, %v3806, 0
  %3836 = vmatpush.msra.mxu0 0.0
  %3837 = vmatpush.msra.mxu0 0.0
  %3838 = vmatpush.msra.mxu0 0.0
  %3839 = vmatpush.msra.mxu0 0.0
  %3840 = vmatpush.msra.mxu0 0.0
  %3841 = vmatpush.msra.mxu0 0.0
  %3842 = vmatpush.msra.mxu0 0.0
  %3843 = vmatpush.msra.mxu0 0.0
  %3844 = vmatpush.msra.mxu0 0.0
  %3845 = vmatpush.msra.mxu0 0.0
  %3846 = vmatpush.msra.mxu0 0.0
  %3847 = vmatpush.msra.mxu0 0.0
  %3848 = vmatpush.msra.mxu0 %v3811
  %3849 = vmatpush.msra.mxu0 %v3810
  %3850 = vmatpush.msra.mxu0 %v3809
  %3851 = vmatpush.msra.mxu0 %v3808
  %3852 = vmatmul.f32.gmra.mxu0 %v3813
  %v3853 = vpop.f32.mrf.mxu0
  %v3854 = vadd.f32 0.0, %v3853
  %3855 = vmatmul.f32.gmra.mxu0 %v3816
  %v3856 = vpop.f32.mrf.mxu0
  %v3857 = vadd.f32 0.0, %v3856
  %3858 = vmatmul.f32.gmra.mxu0 %v3819
  %v3859 = vpop.f32.mrf.mxu0
  %v3860 = vadd.f32 0.0, %v3859
  %3861 = vmatmul.f32.gmra.mxu0 %v3822
  %v3862 = vpop.f32.mrf.mxu0
  %v3863 = vadd.f32 0.0, %v3862
  %3864 = vmatmul.f32.gmra.mxu0 %v3825
  %v3865 = vpop.f32.mrf.mxu0
  %v3866 = vadd.f32 0.0, %v3865
  %3867 = vmatmul.f32.gmra.mxu0 %v3828
  %v3868 = vpop.f32.mrf.mxu0
  %v3869 = vadd.f32 0.0, %v3868
  %3870 = vmatmul.f32.gmra.mxu0 %v3831
  %v3871 = vpop.f32.mrf.mxu0
  %v3872 = vadd.f32 0.0, %v3871
  %3873 = vmatmul.f32.gmra.mxu0 %v3834
  %v3874 = vpop.f32.mrf.mxu0
  %v3875 = vadd.f32 0.0, %v3874
  %3876 = vdwg.mxu0
  %v3877 = vmax.f32 %v3854, 0.0
  %v3878 = vmax.f32 %v3857, 0.0
  %v3879 = vmax.f32 %v3860, 0.0
  %v3880 = vmax.f32 %v3863, 0.0
  %v3881 = vmax.f32 %v3866, 0.0
  %v3882 = vmax.f32 %v3869, 0.0
  %v3883 = vmax.f32 %v3872, 0.0
  %v3884 = vmax.f32 %v3875, 0.0
  %s3885 = scalar_lea.vmem %s7, 64
  %v3886 = vld [vmem:[%s3885] sm:$0xff]
  %v3887 = vld [vmem:[%s3885 + $0x8] sm:$0xff]
  %v3888 = vld [vmem:[%s3885 + $0x10] sm:$0xff]
  %v3889 = vld [vmem:[%s3885 + $0x18] sm:$0xff]
  %v3890 = vld [vmem:[%s3885 + $0x20] sm:$0xff]
  %v3891 = vld [vmem:[%s3885 + $0x28] sm:$0xff]
  %v3892 = vld [vmem:[%s3885 + $0x30] sm:$0xff]
  %v3893 = vld [vmem:[%s3885 + $0x38] sm:$0xff]
  %v3895 = vsel %vm389, %v3877, 0
  %v3898 = vsel %vm389, %v3878, 0
  %v3901 = vsel %vm389, %v3879, 0
  %v3904 = vsel %vm389, %v3880, 0
  %v3907 = vsel %vm389, %v3881, 0
  %v3910 = vsel %vm389, %v3882, 0
  %v3913 = vsel %vm389, %v3883, 0
  %v3916 = vsel %vm389, %v3884, 0
  %3918 = vmatpush.msra.mxu0 0.0
  %3919 = vmatpush.msra.mxu0 0.0
  %3920 = vmatpush.msra.mxu0 0.0
  %3921 = vmatpush.msra.mxu0 0.0
  %3922 = vmatpush.msra.mxu0 0.0
  %3923 = vmatpush.msra.mxu0 0.0
  %3924 = vmatpush.msra.mxu0 0.0
  %3925 = vmatpush.msra.mxu0 0.0
  %3926 = vmatpush.msra.mxu0 %v3893
  %3927 = vmatpush.msra.mxu0 %v3892
  %3928 = vmatpush.msra.mxu0 %v3891
  %3929 = vmatpush.msra.mxu0 %v3890
  %3930 = vmatpush.msra.mxu0 %v3889
  %3931 = vmatpush.msra.mxu0 %v3888
  %3932 = vmatpush.msra.mxu0 %v3887
  %3933 = vmatpush.msra.mxu0 %v3886
  %3934 = vmatmul.f32.gmra.mxu0 %v3895
  %v3935 = vpop.f32.mrf.mxu0
  %v3936 = vadd.f32 0.0, %v3935
  %3937 = vmatmul.f32.gmra.mxu0 %v3898
  %v3938 = vpop.f32.mrf.mxu0
  %v3939 = vadd.f32 0.0, %v3938
  %3940 = vmatmul.f32.gmra.mxu0 %v3901
  %v3941 = vpop.f32.mrf.mxu0
  %v3942 = vadd.f32 0.0, %v3941
  %3943 = vmatmul.f32.gmra.mxu0 %v3904
  %v3944 = vpop.f32.mrf.mxu0
  %v3945 = vadd.f32 0.0, %v3944
  %3946 = vmatmul.f32.gmra.mxu0 %v3907
  %v3947 = vpop.f32.mrf.mxu0
  %v3948 = vadd.f32 0.0, %v3947
  %3949 = vmatmul.f32.gmra.mxu0 %v3910
  %v3950 = vpop.f32.mrf.mxu0
  %v3951 = vadd.f32 0.0, %v3950
  %3952 = vmatmul.f32.gmra.mxu0 %v3913
  %v3953 = vpop.f32.mrf.mxu0
  %v3954 = vadd.f32 0.0, %v3953
  %3955 = vmatmul.f32.gmra.mxu0 %v3916
  %v3956 = vpop.f32.mrf.mxu0
  %v3957 = vadd.f32 0.0, %v3956
  %3958 = vdwg.mxu0
  %v3959 = vadd.f32 %v3650, %v3936
  %v3960 = vadd.f32 %v3651, %v3939
  %v3961 = vadd.f32 %v3652, %v3942
  %v3962 = vadd.f32 %v3653, %v3945
  %v3963 = vadd.f32 %v3654, %v3948
  %v3964 = vadd.f32 %v3655, %v3951
  %v3965 = vadd.f32 %v3656, %v3954
  %v3966 = vadd.f32 %v3657, %v3957
  %v3967 = vld [vmem:[%s8] sm:$0x1]
  %v3968 = vmul.f32 %v3959, %v3959
  %v3969 = vmul.f32 %v3960, %v3960
  %v3970 = vmul.f32 %v3961, %v3961
  %v3971 = vmul.f32 %v3962, %v3962
  %v3972 = vmul.f32 %v3963, %v3963
  %v3973 = vmul.f32 %v3964, %v3964
  %v3974 = vmul.f32 %v3965, %v3965
  %v3975 = vmul.f32 %v3966, %v3966
  %v3976 = vsel %vm63, %v3968, 0.0
  %3977 = vadd.xlane.f32.xlu0 %v3976
  %v3978 = vpop.xlane.xlu0 %3977
  %v3979 = vsel %vm63, %v3969, 0.0
  %3980 = vadd.xlane.f32.xlu0 %v3979
  %v3981 = vpop.xlane.xlu0 %3980
  %v3982 = vsel %vm63, %v3970, 0.0
  %3983 = vadd.xlane.f32.xlu0 %v3982
  %v3984 = vpop.xlane.xlu0 %3983
  %v3985 = vsel %vm63, %v3971, 0.0
  %3986 = vadd.xlane.f32.xlu0 %v3985
  %v3987 = vpop.xlane.xlu0 %3986
  %v3988 = vsel %vm63, %v3972, 0.0
  %3989 = vadd.xlane.f32.xlu0 %v3988
  %v3990 = vpop.xlane.xlu0 %3989
  %v3991 = vsel %vm63, %v3973, 0.0
  %3992 = vadd.xlane.f32.xlu0 %v3991
  %v3993 = vpop.xlane.xlu0 %3992
  %v3994 = vsel %vm63, %v3974, 0.0
  %3995 = vadd.xlane.f32.xlu0 %v3994
  %v3996 = vpop.xlane.xlu0 %3995
  %v3997 = vsel %vm63, %v3975, 0.0
  %3998 = vadd.xlane.f32.xlu0 %v3997
  %v3999 = vpop.xlane.xlu0 %3998
  %v4000 = vmul.f32 %v3978, %v94
  %v4001 = vmul.f32 %v3981, %v94
  %v4002 = vmul.f32 %v3984, %v94
  %v4003 = vmul.f32 %v3987, %v94
  %v4004 = vmul.f32 %v3990, %v94
  %v4005 = vmul.f32 %v3993, %v94
  %v4006 = vmul.f32 %v3996, %v94
  %v4007 = vmul.f32 %v3999, %v94
  %v4008 = vadd.f32 %v4000, 1e-06
  %v4009 = vadd.f32 %v4001, 1e-06
  %v4010 = vadd.f32 %v4002, 1e-06
  %v4011 = vadd.f32 %v4003, 1e-06
  %v4012 = vadd.f32 %v4004, 1e-06
  %v4013 = vadd.f32 %v4005, 1e-06
  %v4014 = vadd.f32 %v4006, 1e-06
  %v4015 = vadd.f32 %v4007, 1e-06
  %v4016 = vrsqrt.pop %v4008
  %v4017 = vmul.f32 %v4016, %v4008
  %v4018 = vmul.f32 %v4017, %v4016
  %v4019 = vmul.f32 0.5, %v4018
  %v4020 = vsub.f32 1.5, %v4019
  %v4021 = vmul.f32 %v4016, %v4020
  %vm4022 = vweird.f32 %v4008
  %vm4023 = vweird.f32 %v4016
  %vm4024 = vmor %vm4022, %vm4023
  %v4025 = vsel %vm4024, %v4016, %v4021
  %v4026 = vrsqrt.pop %v4009
  %v4027 = vmul.f32 %v4026, %v4009
  %v4028 = vmul.f32 %v4027, %v4026
  %v4029 = vmul.f32 0.5, %v4028
  %v4030 = vsub.f32 1.5, %v4029
  %v4031 = vmul.f32 %v4026, %v4030
  %vm4032 = vweird.f32 %v4009
  %vm4033 = vweird.f32 %v4026
  %vm4034 = vmor %vm4032, %vm4033
  %v4035 = vsel %vm4034, %v4026, %v4031
  %v4036 = vrsqrt.pop %v4010
  %v4037 = vmul.f32 %v4036, %v4010
  %v4038 = vmul.f32 %v4037, %v4036
  %v4039 = vmul.f32 0.5, %v4038
  %v4040 = vsub.f32 1.5, %v4039
  %v4041 = vmul.f32 %v4036, %v4040
  %vm4042 = vweird.f32 %v4010
  %vm4043 = vweird.f32 %v4036
  %vm4044 = vmor %vm4042, %vm4043
  %v4045 = vsel %vm4044, %v4036, %v4041
  %v4046 = vrsqrt.pop %v4011
  %v4047 = vmul.f32 %v4046, %v4011
  %v4048 = vmul.f32 %v4047, %v4046
  %v4049 = vmul.f32 0.5, %v4048
  %v4050 = vsub.f32 1.5, %v4049
  %v4051 = vmul.f32 %v4046, %v4050
  %vm4052 = vweird.f32 %v4011
  %vm4053 = vweird.f32 %v4046
  %vm4054 = vmor %vm4052, %vm4053
  %v4055 = vsel %vm4054, %v4046, %v4051
  %v4056 = vrsqrt.pop %v4012
  %v4057 = vmul.f32 %v4056, %v4012
  %v4058 = vmul.f32 %v4057, %v4056
  %v4059 = vmul.f32 0.5, %v4058
  %v4060 = vsub.f32 1.5, %v4059
  %v4061 = vmul.f32 %v4056, %v4060
  %vm4062 = vweird.f32 %v4012
  %vm4063 = vweird.f32 %v4056
  %vm4064 = vmor %vm4062, %vm4063
  %v4065 = vsel %vm4064, %v4056, %v4061
  %v4066 = vrsqrt.pop %v4013
  %v4067 = vmul.f32 %v4066, %v4013
  %v4068 = vmul.f32 %v4067, %v4066
  %v4069 = vmul.f32 0.5, %v4068
  %v4070 = vsub.f32 1.5, %v4069
  %v4071 = vmul.f32 %v4066, %v4070
  %vm4072 = vweird.f32 %v4013
  %vm4073 = vweird.f32 %v4066
  %vm4074 = vmor %vm4072, %vm4073
  %v4075 = vsel %vm4074, %v4066, %v4071
  %v4076 = vrsqrt.pop %v4014
  %v4077 = vmul.f32 %v4076, %v4014
  %v4078 = vmul.f32 %v4077, %v4076
  %v4079 = vmul.f32 0.5, %v4078
  %v4080 = vsub.f32 1.5, %v4079
  %v4081 = vmul.f32 %v4076, %v4080
  %vm4082 = vweird.f32 %v4014
  %vm4083 = vweird.f32 %v4076
  %vm4084 = vmor %vm4082, %vm4083
  %v4085 = vsel %vm4084, %v4076, %v4081
  %v4086 = vrsqrt.pop %v4015
  %v4087 = vmul.f32 %v4086, %v4015
  %v4088 = vmul.f32 %v4087, %v4086
  %v4089 = vmul.f32 0.5, %v4088
  %v4090 = vsub.f32 1.5, %v4089
  %v4091 = vmul.f32 %v4086, %v4090
  %vm4092 = vweird.f32 %v4015
  %vm4093 = vweird.f32 %v4086
  %vm4094 = vmor %vm4092, %vm4093
  %v4095 = vsel %vm4094, %v4086, %v4091
  %v4096 = vmul.f32 %v3959, %v4025
  %v4097 = vmul.f32 %v3960, %v4035
  %v4098 = vmul.f32 %v3961, %v4045
  %v4099 = vmul.f32 %v3962, %v4055
  %v4100 = vmul.f32 %v3963, %v4065
  %v4101 = vmul.f32 %v3964, %v4075
  %v4102 = vmul.f32 %v3965, %v4085
  %v4103 = vmul.f32 %v3966, %v4095
  %v4105 = vperm.slane %v3967, 0
  %v4107 = vmul.f32 %v4096, %v4105
  %v4108 = vmul.f32 %v4097, %v4105
  %v4109 = vmul.f32 %v4098, %v4105
  %v4110 = vmul.f32 %v4099, %v4105
  %v4111 = vmul.f32 %v4100, %v4105
  %v4112 = vmul.f32 %v4101, %v4105
  %v4113 = vmul.f32 %v4102, %v4105
  %v4114 = vmul.f32 %v4103, %v4105
  %v4115 = vld [vmem:[%s9] sm:$0x1]
  %v4117 = vperm.slane %v4115, 0
  %v4119 = vmul.f32 %v4107, %v4117
  %v4120 = vmul.f32 %v4108, %v4117
  %v4121 = vmul.f32 %v4109, %v4117
  %v4122 = vmul.f32 %v4110, %v4117
  %v4123 = vmul.f32 %v4111, %v4117
  %v4124 = vmul.f32 %v4112, %v4117
  %v4125 = vmul.f32 %v4113, %v4117
  %v4126 = vmul.f32 %v4114, %v4117
  %v4127 = vsel %vm63, %v4119, 0.0
  %4128 = vadd.xlane.f32.xlu0 %v4127
  %v4129 = vpop.xlane.xlu0 %4128
  %v4130 = vsel %vm63, %v4120, 0.0
  %4131 = vadd.xlane.f32.xlu0 %v4130
  %v4132 = vpop.xlane.xlu0 %4131
  %v4133 = vsel %vm63, %v4121, 0.0
  %4134 = vadd.xlane.f32.xlu0 %v4133
  %v4135 = vpop.xlane.xlu0 %4134
  %v4136 = vsel %vm63, %v4122, 0.0
  %4137 = vadd.xlane.f32.xlu0 %v4136
  %v4138 = vpop.xlane.xlu0 %4137
  %v4139 = vsel %vm63, %v4123, 0.0
  %4140 = vadd.xlane.f32.xlu0 %v4139
  %v4141 = vpop.xlane.xlu0 %4140
  %v4142 = vsel %vm63, %v4124, 0.0
  %4143 = vadd.xlane.f32.xlu0 %v4142
  %v4144 = vpop.xlane.xlu0 %4143
  %v4145 = vsel %vm63, %v4125, 0.0
  %4146 = vadd.xlane.f32.xlu0 %v4145
  %v4147 = vpop.xlane.xlu0 %4146
  %v4148 = vsel %vm63, %v4126, 0.0
  %4149 = vadd.xlane.f32.xlu0 %v4148
  %v4150 = vpop.xlane.xlu0 %4149
  %v4151 = vld [vmem:[#allocation2] sm:$0x1]
  %v4153 = vperm.slane %v4151, 0
  %v4155 = vadd.f32 %v4129, %v4153
  %v4156 = vadd.f32 %v4132, %v4153
  %v4157 = vadd.f32 %v4135, %v4153
  %v4158 = vadd.f32 %v4138, %v4153
  %v4159 = vadd.f32 %v4141, %v4153
  %v4160 = vadd.f32 %v4144, %v4153
  %v4161 = vadd.f32 %v4147, %v4153
  %v4162 = vadd.f32 %v4150, %v4153
  %v4163 = vld [vmem:[%s11] sm:$0xff]
  %v4164 = vld [vmem:[%s11 + $0x8] sm:$0xff]
  %v4165 = vld [vmem:[%s11 + $0x10] sm:$0xff]
  %v4166 = vld [vmem:[%s11 + $0x18] sm:$0xff]
  %4168 = vset.pattern.permute.xlu0 0
  %4169 = vperm.xlu0 %4168, %v4155
  %v4170 = vpop.permute.xlu0 %4169
  %4173 = vset.pattern.permute.xlu0 0
  %4174 = vperm.xlu0 %4173, %v4156
  %v4175 = vpop.permute.xlu0 %4174
  %4178 = vset.pattern.permute.xlu0 0
  %4179 = vperm.xlu0 %4178, %v4157
  %v4180 = vpop.permute.xlu0 %4179
  %4183 = vset.pattern.permute.xlu0 0
  %4184 = vperm.xlu0 %4183, %v4158
  %v4185 = vpop.permute.xlu0 %4184
  %v4187 = vmul.f32 %v4170, %v4163
  %v4188 = vmul.f32 %v4175, %v4164
  %v4189 = vmul.f32 %v4180, %v4165
  %v4190 = vmul.f32 %v4185, %v4166
  %vm4191 = vcmask 23552
  %v4192 = vsel %vm4191, %v4187, 0.0
  %v4193 = vsel %vm4191, %v4188, 0.0
  %v4194 = vadd.f32 %v4192, %v4193
  %v4195 = vsel %vm4191, %v4189, 0.0
  %v4196 = vadd.f32 %v4194, %v4195
  %v4197 = vsel %vm4191, %v4190, 0.0
  %v4198 = vadd.f32 %v4196, %v4197
  %v4199 = vrot.slane %v4198, 4
  %v4200 = vadd.f32 %v4198, %v4199
  %v4201 = vrot.slane %v4200, 2
  %v4202 = vadd.f32 %v4200, %v4201
  %v4203 = vrot.slane %v4202, 1
  %v4204 = vadd.f32 %v4202, %v4203
  %v4205 = vld [vmem:[%s12] sm:$0x1]
  %v4206 = vadd.f32 %v4204, %v4205
  %vm4207 = vcmask 16384
  %4208 = vst.msk [vmem:[%s13] sm:$0x1] %vm4207, %v4206
  %v4209 = vld [vmem:[%s11] sm:$0xff]
  %v4210 = vld [vmem:[%s11 + $0x8] sm:$0xff]
  %v4211 = vld [vmem:[%s11 + $0x10] sm:$0xff]
  %v4212 = vld [vmem:[%s11 + $0x18] sm:$0xff]
  %4214 = vset.pattern.permute.xlu0 0
  %4215 = vperm.xlu0 %4214, %v4159
  %v4216 = vpop.permute.xlu0 %4215
  %4219 = vset.pattern.permute.xlu0 0
  %4220 = vperm.xlu0 %4219, %v4160
  %v4221 = vpop.permute.xlu0 %4220
  %4224 = vset.pattern.permute.xlu0 0
  %4225 = vperm.xlu0 %4224, %v4161
  %v4226 = vpop.permute.xlu0 %4225
  %4229 = vset.pattern.permute.xlu0 0
  %4230 = vperm.xlu0 %4229, %v4162
  %v4231 = vpop.permute.xlu0 %4230
  %v4233 = vmul.f32 %v4216, %v4209
  %v4234 = vmul.f32 %v4221, %v4210
  %v4235 = vmul.f32 %v4226, %v4211
  %v4236 = vmul.f32 %v4231, %v4212
  %v4237 = vsel %vm4191, %v4233, 0.0
  %v4238 = vsel %vm4191, %v4234, 0.0
  %v4239 = vadd.f32 %v4237, %v4238
  %v4240 = vsel %vm4191, %v4235, 0.0
  %v4241 = vadd.f32 %v4239, %v4240
  %v4242 = vsel %vm4191, %v4236, 0.0
  %v4243 = vadd.f32 %v4241, %v4242
  %v4244 = vrot.slane %v4243, 4
  %v4245 = vadd.f32 %v4243, %v4244
  %v4246 = vrot.slane %v4245, 2
  %v4247 = vadd.f32 %v4245, %v4246
  %v4248 = vrot.slane %v4247, 1
  %v4249 = vadd.f32 %v4247, %v4248
  %v4250 = vld [vmem:[%s12] sm:$0x1]
  %v4251 = vadd.f32 %v4249, %v4250
  %4252 = vst.msk [vmem:[%s13 + $0x1] sm:$0x1] %vm4207, %v4251
  // Predicated region
  $region54: #{classifier_forward.1} parent=0 // pred_check
    _
  $region55: #{classifier_forward.1} parent=0 // pred_check_branch
    %4254 = sbr.rel (0) target = $region57
  $region56: #{classifier_forward.1} parent=0 // pred_region
    _
  $region57: #{classifier_forward.1} parent=0 // pred_fallthru
    _
  // Predicated region
  $region58: #{classifier_forward.1} parent=0 // pred_check
    _
  $region59: #{classifier_forward.1} parent=0 // pred_check_branch
    %4256 = sbr.rel (0) target = $region61
  $region60: #{classifier_forward.1} parent=0 // pred_region
    _
  $region61: #{classifier_forward.1} parent=0 // pred_fallthru
    _

</llo_original>
